<compile_context>
chip_gen: v6e
topology: v6e:2x2x1
jax: 0.10.0
libtpu: 0.0.40
codegen_flags: <defaults>
</compile_context>

<pallas_src>
import functools

import numpy as np
import jax
import jax.numpy as jnp
from jax import lax
from jax.experimental import pallas as pl
from jax.experimental.pallas import tpu as pltpu


# ---------------------------------------------------------------------------
# Kernel 1: one batch sample; 3x3x3 dilated conv as 9 banded MXU matmuls.
#   x_ref    : (1, Dp, Hp, Wp*C)  bf16  padded NDHWC volume, (w, c) merged on lanes
#   w_ref    : (9, Wp*C, C*W)     bf16  banded weights, one (kd, kh) tap per slab;
#                                       output columns are channel-major (c*W + w)
#   out_ref  : (1, D*H, C*W)      bf16  conv activations
#   stat_ref : (1, 2, C*W)        f32   per-lane sum / sum-of-squares (BN stats)
# ---------------------------------------------------------------------------
def _conv3d_band_kernel(x_ref, w_ref, out_ref, stat_ref, *, D, H, W, C, dil):
    WpC = (W + 2 * dil) * C
    acc = jnp.zeros((D * H, C * W), jnp.float32)
    for kd in range(3):
        for kh in range(3):
            # Static sublane-offset slab, read straight out of the resident
            # VMEM block (each padded plane hits HBM exactly once per sample).
            slab = x_ref[0, kd * dil:kd * dil + D, kh * dil:kh * dil + H, :]
            acc = acc + jnp.dot(slab.reshape(D * H, WpC),
                                w_ref[kd * 3 + kh],
                                preferred_element_type=jnp.float32)
    # Partial BatchNorm statistics from the f32 accumulator (folded to per-
    # channel sums in the wrapper).
    stat_ref[0, 0:1, :] = acc.sum(axis=0, keepdims=True)
    stat_ref[0, 1:2, :] = (acc * acc).sum(axis=0, keepdims=True)
    out_ref[0] = acc.astype(out_ref.dtype)


# ---------------------------------------------------------------------------
# Kernel 2: fused BN-affine + PReLU + NCDHW writeback for one batch sample.
#   x_ref : (1, D*H, C*W) bf16 ; scale/shift/alpha : (1, C*W) f32 (period-W rows)
#   o_ref : (1, C, D*H, W) f32  (reshaped to (N, C, D, H, W) for free outside)
# ---------------------------------------------------------------------------
def _bn_prelu_kernel(x_ref, scale_ref, shift_ref, alpha_ref, o_ref, *, W, C):
    y = x_ref[0].astype(jnp.float32) * scale_ref[...] + shift_ref[...]
    y = jnp.where(y > 0, y, alpha_ref[...] * y)
    # Channel-major lanes -> per-channel static lane slices; no in-kernel
    # transpose/reshape and no separate XLA transpose pass afterwards.
    for c in range(C):
        o_ref[0, c] = y[:, c * W:(c + 1) * W]


def _build_band_weights(conv_w, C, W, dilation):
    """(Cout, Cin, 3, 3, 3) -> (9, Wp*C, C*W) banded matrices, one per (kd, kh).

    band[kd*3+kh, (w + kw*dil)*C + ci, co*W + w] = conv_w[co, ci, kd, kh, kw]
    so slab(D*H, Wp*C) @ band performs the kw taps and ci->co mixing with
    channel-major output columns.
    """
    p = dilation
    WpC = (W + 2 * p) * C
    wt = jnp.transpose(conv_w, (2, 3, 4, 1, 0)).astype(jnp.float32)  # (3,3,3,ci,co)
    kd, kh, kw, ci, co, w = np.meshgrid(
        np.arange(3), np.arange(3), np.arange(3),
        np.arange(C), np.arange(C), np.arange(W), indexing="ij")
    blk = (kd * 3 + kh).reshape(-1)
    row = ((w + kw * p) * C + ci).reshape(-1)
    col = (co * W + w).reshape(-1)
    vals = jnp.broadcast_to(wt[..., None], (3, 3, 3, C, C, W)).reshape(-1)
    band = jnp.zeros((9, WpC, C * W), jnp.float32).at[blk, row, col].set(vals)
    return band.astype(jnp.bfloat16)


@functools.partial(jax.jit, static_argnames=("dilation", "eps", "drop_rate"))
def single_layer_forward(x_ncdhw, conv_w, gamma, beta, alpha, *,
                         dilation=1, eps=1e-5, drop_rate=0.0):
    """Forward pass of SingleLayer.

    x_ncdhw : (N, C, D, H, W) float32   (PyTorch NCDHW)
    conv_w  : (C, C, 3, 3, 3)           (PyTorch Conv3d weight, OIDHW)
    gamma, beta, alpha : (C,)           (BN weight/bias, PReLU slopes)
    Returns (N, C, D, H, W) float32.
    """
    if drop_rate:
        # TODO(synk): in-kernel dropout (pltpu.prng_seed + prng_random_bits) is
        # not wired up; fail loudly instead of silently dropping the op.
        raise NotImplementedError("drop_rate > 0 not supported in the Pallas path")

    N, C, D, H, W = x_ncdhw.shape
    p = dilation
    Dp, Hp, Wp = D + 2 * p, H + 2 * p, W + 2 * p
    DH, CW, WpC = D * H, C * W, Wp * C

    # ---- input glue (plain XLA, fused under jit): NCDHW -> NDHWC, zero pad,
    #      cast bf16, merge (W, C) into one lane axis (free reshape).
    x = jnp.transpose(x_ncdhw, (0, 2, 3, 4, 1))
    xp = jnp.pad(x, ((0, 0), (p, p), (p, p), (p, p), (0, 0)))
    xp = xp.astype(jnp.bfloat16).reshape(N, Dp, Hp, WpC)

    band = _build_band_weights(conv_w, C, W, dilation)        # (9, WpC, CW) bf16

    # ---- pass 1: conv + per-sample BN partial stats. grid=(N,), fat steps.
    conv_out, stats = pl.pallas_call(
        functools.partial(_conv3d_band_kernel, D=D, H=H, W=W, C=C, dil=dilation),
        grid=(N,),
        in_specs=[pl.BlockSpec((1, Dp, Hp, WpC), lambda n: (n, 0, 0, 0)),
                  pl.BlockSpec((9, WpC, CW), lambda n: (0, 0, 0))],
        out_specs=[pl.BlockSpec((1, DH, CW), lambda n: (n, 0, 0)),
                   pl.BlockSpec((1, 2, CW), lambda n: (n, 0, 0))],
        out_shape=[jax.ShapeDtypeStruct((N, DH, CW), jnp.bfloat16),
                   jax.ShapeDtypeStruct((N, 2, CW), jnp.float32)],
        compiler_params=pltpu.CompilerParams(
            dimension_semantics=("parallel",),
            vmem_limit_bytes=32 * 1024 * 1024),
    )(xp, band)

    # ---- finish BatchNorm training statistics (biased variance), tiny XLA ops.
    cnt = float(N * D * H * W)
    s = stats.reshape(N, 2, C, W).sum(axis=(0, 3))            # (2, C)
    mean = s[0] / cnt
    var = jnp.maximum(s[1] / cnt - mean * mean, 0.0)          # one-pass guard
    scale = gamma.astype(jnp.float32) * lax.rsqrt(var + eps)
    shift = beta.astype(jnp.float32) - mean * scale
    # NOTE: stats come from the f32 accumulator while normalization is applied
    # to the bf16-rounded activations; covered by the test tolerance.

    # Channel-major (c*W + w) broadcast rows for pass 2.
    scale_row = jnp.repeat(scale, W).reshape(1, CW)
    shift_row = jnp.repeat(shift, W).reshape(1, CW)
    alpha_row = jnp.repeat(alpha.astype(jnp.float32), W).reshape(1, CW)

    # ---- pass 2: fused BN affine + PReLU + NCDHW writeback. grid=(N,).
    row_spec = pl.BlockSpec((1, CW), lambda n: (0, 0))
    out_nc = pl.pallas_call(
        functools.partial(_bn_prelu_kernel, W=W, C=C),
        grid=(N,),
        in_specs=[pl.BlockSpec((1, DH, CW), lambda n: (n, 0, 0)),
                  row_spec, row_spec, row_spec],
        out_specs=pl.BlockSpec((1, C, DH, W), lambda n: (n, 0, 0, 0)),
        out_shape=jax.ShapeDtypeStruct((N, C, DH, W), jnp.float32),
        compiler_params=pltpu.CompilerParams(
            dimension_semantics=("parallel",),
            vmem_limit_bytes=32 * 1024 * 1024),
    )(conv_out, scale_row, shift_row, alpha_row)

    # Free metadata reshape (splits D*H); layout is already NCDHW.
    return out_nc.reshape(N, C, D, H, W)


# ---------------------------------------------------------------------------
# Pure-JAX f32 reference (correctness check only).
# ---------------------------------------------------------------------------
def _reference(x_ncdhw, conv_w, gamma, beta, alpha, dilation, eps):
    out = lax.conv_general_dilated(
        x_ncdhw.astype(jnp.float32), conv_w.astype(jnp.float32),
        window_strides=(1, 1, 1),
        padding=[(dilation, dilation)] * 3,
        rhs_dilation=(dilation,) * 3,
        dimension_numbers=("NCDHW", "OIDHW", "NCDHW"))
    mean = out.mean(axis=(0, 2, 3, 4), keepdims=True)
    var = ((out - mean) ** 2).mean(axis=(0, 2, 3, 4), keepdims=True)
    g = gamma.reshape(1, -1, 1, 1, 1)
    b = beta.reshape(1, -1, 1, 1, 1)
    a = alpha.reshape(1, -1, 1, 1, 1)
    y = g * (out - mean) / jnp.sqrt(var + eps) + b
    return jnp.where(y > 0, y, a * y)


if __name__ == "__main__":
    key = jax.random.PRNGKey(0)
    k_x, k_w, k_g, k_b = jax.random.split(key, 4)

    N, C, D, H, W = 2, 4, 16, 16, 16

    x = jax.random.normal(k_x, (N, C, D, H, W), dtype=jnp.float32)
    conv_w = 0.1 * jax.random.normal(k_w, (C, C, 3, 3, 3), dtype=jnp.float32)
    gamma = 1.0 + 0.1 * jax.random.normal(k_g, (C,), dtype=jnp.float32)
    beta = 0.1 * jax.random.normal(k_b, (C,), dtype=jnp.float32)
    alpha = jnp.full((C,), 0.25, dtype=jnp.float32)   # PReLU default init

    for dil in (1, 2):
        out = single_layer_forward(x, conv_w, gamma, beta, alpha, dilation=dil)
        out = jax.block_until_ready(out)
        ref = _reference(x, conv_w, gamma, beta, alpha, dil, 1e-5)
        assert out.shape == (N, C, D, H, W)
        # Tolerance covers bf16 MXU operands + bf16 activation storage.
        assert jnp.allclose(out, ref, atol=5e-2, rtol=5e-2), (
            f"mismatch vs reference (dilation={dil}), "
            f"max abs err={float(jnp.max(jnp.abs(out - ref)))}")

    print("KERNEL_OK")
</pallas_src>

<mosaic_0001>
module attributes {stable_mosaic.version = 11 : i64} {
  func.func @_conv3d_band_kernel(%arg0: i32, %arg1: memref<1x18x18x72xbf16, #tpu.memory_space<vmem>>, %arg2: memref<9x72x64xbf16, #tpu.memory_space<vmem>>, %arg3: memref<1x256x64xbf16, #tpu.memory_space<vmem>>, %arg4: memref<1x2x64xf32, #tpu.memory_space<vmem>>) attributes {dimension_semantics = [#tpu.dimension_semantics<parallel>], iteration_bounds = array<i64: 2>, scalar_prefetch = 0 : i64, scratch_operands = 0 : i64, tpu.core_type = #tpu.core_type<tc>, window_params = [{transform_indices = @transform_0, window_bounds = array<i64: 1, 18, 18, 72>}, {pipeline_mode = #tpu.pipeline_mode<synchronous>, transform_indices = @transform_1, window_bounds = array<i64: 9, 72, 64>}, {transform_indices = @transform_2, window_bounds = array<i64: 1, 256, 64>}, {transform_indices = @transform_3, window_bounds = array<i64: 1, 2, 64>}]} {
    %cst = arith.constant 0.000000e+00 : f32
    %0 = vector.broadcast %cst : f32 to vector<256x64xf32>
    %c0 = arith.constant 0 : index
    %c0_0 = arith.constant 0 : index
    %c0_1 = arith.constant 0 : index
    %c0_2 = arith.constant 0 : index
    %1 = vector.load %arg1[%c0, %c0_0, %c0_1, %c0_2] : memref<1x18x18x72xbf16, #tpu.memory_space<vmem>>, vector<1x16x16x72xbf16>
    %2 = vector.shape_cast %1 : vector<1x16x16x72xbf16> to vector<16x16x72xbf16>
    %3 = vector.shape_cast %2 : vector<16x16x72xbf16> to vector<256x72xbf16>
    %c0_3 = arith.constant 0 : index
    %c0_4 = arith.constant 0 : index
    %c0_5 = arith.constant 0 : index
    %4 = vector.load %arg2[%c0_3, %c0_4, %c0_5] : memref<9x72x64xbf16, #tpu.memory_space<vmem>>, vector<1x72x64xbf16>
    %5 = vector.shape_cast %4 : vector<1x72x64xbf16> to vector<72x64xbf16>
    %cst_6 = arith.constant dense<0.000000e+00> : vector<256x64xf32>
    %6 = tpu.matmul %3, %5, %cst_6 {dimension_numbers = #tpu.dot_dimension_numbers<[1], [0], [0], [1], [0, 0, 1, 1], [], []>} : vector<256x72xbf16>, vector<72x64xbf16>, vector<256x64xf32> -> vector<256x64xf32>
    %7 = arith.addf %0, %6 : vector<256x64xf32>
    %c0_7 = arith.constant 0 : index
    %c0_8 = arith.constant 0 : index
    %c1 = arith.constant 1 : index
    %c0_9 = arith.constant 0 : index
    %8 = vector.load %arg1[%c0_7, %c0_8, %c1, %c0_9] : memref<1x18x18x72xbf16, #tpu.memory_space<vmem>>, vector<1x16x16x72xbf16>
    %9 = vector.shape_cast %8 : vector<1x16x16x72xbf16> to vector<16x16x72xbf16>
    %10 = vector.shape_cast %9 : vector<16x16x72xbf16> to vector<256x72xbf16>
    %c1_10 = arith.constant 1 : index
    %c0_11 = arith.constant 0 : index
    %c0_12 = arith.constant 0 : index
    %11 = vector.load %arg2[%c1_10, %c0_11, %c0_12] : memref<9x72x64xbf16, #tpu.memory_space<vmem>>, vector<1x72x64xbf16>
    %12 = vector.shape_cast %11 : vector<1x72x64xbf16> to vector<72x64xbf16>
    %cst_13 = arith.constant dense<0.000000e+00> : vector<256x64xf32>
    %13 = tpu.matmul %10, %12, %cst_13 {dimension_numbers = #tpu.dot_dimension_numbers<[1], [0], [0], [1], [0, 0, 1, 1], [], []>} : vector<256x72xbf16>, vector<72x64xbf16>, vector<256x64xf32> -> vector<256x64xf32>
    %14 = arith.addf %7, %13 : vector<256x64xf32>
    %c0_14 = arith.constant 0 : index
    %c0_15 = arith.constant 0 : index
    %c2 = arith.constant 2 : index
    %c0_16 = arith.constant 0 : index
    %15 = vector.load %arg1[%c0_14, %c0_15, %c2, %c0_16] : memref<1x18x18x72xbf16, #tpu.memory_space<vmem>>, vector<1x16x16x72xbf16>
    %16 = vector.shape_cast %15 : vector<1x16x16x72xbf16> to vector<16x16x72xbf16>
    %17 = vector.shape_cast %16 : vector<16x16x72xbf16> to vector<256x72xbf16>
    %c2_17 = arith.constant 2 : index
    %c0_18 = arith.constant 0 : index
    %c0_19 = arith.constant 0 : index
    %18 = vector.load %arg2[%c2_17, %c0_18, %c0_19] : memref<9x72x64xbf16, #tpu.memory_space<vmem>>, vector<1x72x64xbf16>
    %19 = vector.shape_cast %18 : vector<1x72x64xbf16> to vector<72x64xbf16>
    %cst_20 = arith.constant dense<0.000000e+00> : vector<256x64xf32>
    %20 = tpu.matmul %17, %19, %cst_20 {dimension_numbers = #tpu.dot_dimension_numbers<[1], [0], [0], [1], [0, 0, 1, 1], [], []>} : vector<256x72xbf16>, vector<72x64xbf16>, vector<256x64xf32> -> vector<256x64xf32>
    %21 = arith.addf %14, %20 : vector<256x64xf32>
    %c0_21 = arith.constant 0 : index
    %c1_22 = arith.constant 1 : index
    %c0_23 = arith.constant 0 : index
    %c0_24 = arith.constant 0 : index
    %22 = vector.load %arg1[%c0_21, %c1_22, %c0_23, %c0_24] : memref<1x18x18x72xbf16, #tpu.memory_space<vmem>>, vector<1x16x16x72xbf16>
    %23 = vector.shape_cast %22 : vector<1x16x16x72xbf16> to vector<16x16x72xbf16>
    %24 = vector.shape_cast %23 : vector<16x16x72xbf16> to vector<256x72xbf16>
    %c3 = arith.constant 3 : index
    %c0_25 = arith.constant 0 : index
    %c0_26 = arith.constant 0 : index
    %25 = vector.load %arg2[%c3, %c0_25, %c0_26] : memref<9x72x64xbf16, #tpu.memory_space<vmem>>, vector<1x72x64xbf16>
    %26 = vector.shape_cast %25 : vector<1x72x64xbf16> to vector<72x64xbf16>
    %cst_27 = arith.constant dense<0.000000e+00> : vector<256x64xf32>
    %27 = tpu.matmul %24, %26, %cst_27 {dimension_numbers = #tpu.dot_dimension_numbers<[1], [0], [0], [1], [0, 0, 1, 1], [], []>} : vector<256x72xbf16>, vector<72x64xbf16>, vector<256x64xf32> -> vector<256x64xf32>
    %28 = arith.addf %21, %27 : vector<256x64xf32>
    %c0_28 = arith.constant 0 : index
    %c1_29 = arith.constant 1 : index
    %c1_30 = arith.constant 1 : index
    %c0_31 = arith.constant 0 : index
    %29 = vector.load %arg1[%c0_28, %c1_29, %c1_30, %c0_31] : memref<1x18x18x72xbf16, #tpu.memory_space<vmem>>, vector<1x16x16x72xbf16>
    %30 = vector.shape_cast %29 : vector<1x16x16x72xbf16> to vector<16x16x72xbf16>
    %31 = vector.shape_cast %30 : vector<16x16x72xbf16> to vector<256x72xbf16>
    %c4 = arith.constant 4 : index
    %c0_32 = arith.constant 0 : index
    %c0_33 = arith.constant 0 : index
    %32 = vector.load %arg2[%c4, %c0_32, %c0_33] : memref<9x72x64xbf16, #tpu.memory_space<vmem>>, vector<1x72x64xbf16>
    %33 = vector.shape_cast %32 : vector<1x72x64xbf16> to vector<72x64xbf16>
    %cst_34 = arith.constant dense<0.000000e+00> : vector<256x64xf32>
    %34 = tpu.matmul %31, %33, %cst_34 {dimension_numbers = #tpu.dot_dimension_numbers<[1], [0], [0], [1], [0, 0, 1, 1], [], []>} : vector<256x72xbf16>, vector<72x64xbf16>, vector<256x64xf32> -> vector<256x64xf32>
    %35 = arith.addf %28, %34 : vector<256x64xf32>
    %c0_35 = arith.constant 0 : index
    %c1_36 = arith.constant 1 : index
    %c2_37 = arith.constant 2 : index
    %c0_38 = arith.constant 0 : index
    %36 = vector.load %arg1[%c0_35, %c1_36, %c2_37, %c0_38] : memref<1x18x18x72xbf16, #tpu.memory_space<vmem>>, vector<1x16x16x72xbf16>
    %37 = vector.shape_cast %36 : vector<1x16x16x72xbf16> to vector<16x16x72xbf16>
    %38 = vector.shape_cast %37 : vector<16x16x72xbf16> to vector<256x72xbf16>
    %c5 = arith.constant 5 : index
    %c0_39 = arith.constant 0 : index
    %c0_40 = arith.constant 0 : index
    %39 = vector.load %arg2[%c5, %c0_39, %c0_40] : memref<9x72x64xbf16, #tpu.memory_space<vmem>>, vector<1x72x64xbf16>
    %40 = vector.shape_cast %39 : vector<1x72x64xbf16> to vector<72x64xbf16>
    %cst_41 = arith.constant dense<0.000000e+00> : vector<256x64xf32>
    %41 = tpu.matmul %38, %40, %cst_41 {dimension_numbers = #tpu.dot_dimension_numbers<[1], [0], [0], [1], [0, 0, 1, 1], [], []>} : vector<256x72xbf16>, vector<72x64xbf16>, vector<256x64xf32> -> vector<256x64xf32>
    %42 = arith.addf %35, %41 : vector<256x64xf32>
    %c0_42 = arith.constant 0 : index
    %c2_43 = arith.constant 2 : index
    %c0_44 = arith.constant 0 : index
    %c0_45 = arith.constant 0 : index
    %43 = vector.load %arg1[%c0_42, %c2_43, %c0_44, %c0_45] : memref<1x18x18x72xbf16, #tpu.memory_space<vmem>>, vector<1x16x16x72xbf16>
    %44 = vector.shape_cast %43 : vector<1x16x16x72xbf16> to vector<16x16x72xbf16>
    %45 = vector.shape_cast %44 : vector<16x16x72xbf16> to vector<256x72xbf16>
    %c6 = arith.constant 6 : index
    %c0_46 = arith.constant 0 : index
    %c0_47 = arith.constant 0 : index
    %46 = vector.load %arg2[%c6, %c0_46, %c0_47] : memref<9x72x64xbf16, #tpu.memory_space<vmem>>, vector<1x72x64xbf16>
    %47 = vector.shape_cast %46 : vector<1x72x64xbf16> to vector<72x64xbf16>
    %cst_48 = arith.constant dense<0.000000e+00> : vector<256x64xf32>
    %48 = tpu.matmul %45, %47, %cst_48 {dimension_numbers = #tpu.dot_dimension_numbers<[1], [0], [0], [1], [0, 0, 1, 1], [], []>} : vector<256x72xbf16>, vector<72x64xbf16>, vector<256x64xf32> -> vector<256x64xf32>
    %49 = arith.addf %42, %48 : vector<256x64xf32>
    %c0_49 = arith.constant 0 : index
    %c2_50 = arith.constant 2 : index
    %c1_51 = arith.constant 1 : index
    %c0_52 = arith.constant 0 : index
    %50 = vector.load %arg1[%c0_49, %c2_50, %c1_51, %c0_52] : memref<1x18x18x72xbf16, #tpu.memory_space<vmem>>, vector<1x16x16x72xbf16>
    %51 = vector.shape_cast %50 : vector<1x16x16x72xbf16> to vector<16x16x72xbf16>
    %52 = vector.shape_cast %51 : vector<16x16x72xbf16> to vector<256x72xbf16>
    %c7 = arith.constant 7 : index
    %c0_53 = arith.constant 0 : index
    %c0_54 = arith.constant 0 : index
    %53 = vector.load %arg2[%c7, %c0_53, %c0_54] : memref<9x72x64xbf16, #tpu.memory_space<vmem>>, vector<1x72x64xbf16>
    %54 = vector.shape_cast %53 : vector<1x72x64xbf16> to vector<72x64xbf16>
    %cst_55 = arith.constant dense<0.000000e+00> : vector<256x64xf32>
    %55 = tpu.matmul %52, %54, %cst_55 {dimension_numbers = #tpu.dot_dimension_numbers<[1], [0], [0], [1], [0, 0, 1, 1], [], []>} : vector<256x72xbf16>, vector<72x64xbf16>, vector<256x64xf32> -> vector<256x64xf32>
    %56 = arith.addf %49, %55 : vector<256x64xf32>
    %c0_56 = arith.constant 0 : index
    %c2_57 = arith.constant 2 : index
    %c2_58 = arith.constant 2 : index
    %c0_59 = arith.constant 0 : index
    %57 = vector.load %arg1[%c0_56, %c2_57, %c2_58, %c0_59] : memref<1x18x18x72xbf16, #tpu.memory_space<vmem>>, vector<1x16x16x72xbf16>
    %58 = vector.shape_cast %57 : vector<1x16x16x72xbf16> to vector<16x16x72xbf16>
    %59 = vector.shape_cast %58 : vector<16x16x72xbf16> to vector<256x72xbf16>
    %c8 = arith.constant 8 : index
    %c0_60 = arith.constant 0 : index
    %c0_61 = arith.constant 0 : index
    %60 = vector.load %arg2[%c8, %c0_60, %c0_61] : memref<9x72x64xbf16, #tpu.memory_space<vmem>>, vector<1x72x64xbf16>
    %61 = vector.shape_cast %60 : vector<1x72x64xbf16> to vector<72x64xbf16>
    %cst_62 = arith.constant dense<0.000000e+00> : vector<256x64xf32>
    %62 = tpu.matmul %59, %61, %cst_62 {dimension_numbers = #tpu.dot_dimension_numbers<[1], [0], [0], [1], [0, 0, 1, 1], [], []>} : vector<256x72xbf16>, vector<72x64xbf16>, vector<256x64xf32> -> vector<256x64xf32>
    %63 = arith.addf %56, %62 : vector<256x64xf32>
    %cst_63 = arith.constant dense<0.000000e+00> : vector<64xf32>
    %64 = vector.multi_reduction <add>, %63, %cst_63 [0] : vector<256x64xf32> to vector<64xf32>
    %65 = vector.shape_cast %64 : vector<64xf32> to vector<1x64xf32>
    %c0_64 = arith.constant 0 : index
    %c0_65 = arith.constant 0 : index
    %c0_66 = arith.constant 0 : index
    %66 = vector.load %arg4[%c0_64, %c0_65, %c0_66] : memref<1x2x64xf32, #tpu.memory_space<vmem>>, vector<1x1x64xf32>
    %67 = vector.shape_cast %66 : vector<1x1x64xf32> to vector<1x64xf32>
    %68 = vector.shape_cast %65 : vector<1x64xf32> to vector<1x1x64xf32>
    tpu.vector_store %arg4[%c0_64, %c0_65, %c0_66], %68 {strides = array<i32>} : memref<1x2x64xf32, #tpu.memory_space<vmem>>, vector<1x1x64xf32>,
    %69 = arith.mulf %63, %63 : vector<256x64xf32>
    %cst_67 = arith.constant dense<0.000000e+00> : vector<64xf32>
    %70 = vector.multi_reduction <add>, %69, %cst_67 [0] : vector<256x64xf32> to vector<64xf32>
    %71 = vector.shape_cast %70 : vector<64xf32> to vector<1x64xf32>
    %c0_68 = arith.constant 0 : index
    %c1_69 = arith.constant 1 : index
    %c0_70 = arith.constant 0 : index
    %72 = vector.load %arg4[%c0_68, %c1_69, %c0_70] : memref<1x2x64xf32, #tpu.memory_space<vmem>>, vector<1x1x64xf32>
    %73 = vector.shape_cast %72 : vector<1x1x64xf32> to vector<1x64xf32>
    %74 = vector.shape_cast %71 : vector<1x64xf32> to vector<1x1x64xf32>
    tpu.vector_store %arg4[%c0_68, %c1_69, %c0_70], %74 {strides = array<i32>} : memref<1x2x64xf32, #tpu.memory_space<vmem>>, vector<1x1x64xf32>,
    %75 = arith.truncf %63 : vector<256x64xf32> to vector<256x64xbf16>
    %c0_71 = arith.constant 0 : index
    %c0_72 = arith.constant 0 : index
    %c0_73 = arith.constant 0 : index
    %76 = vector.load %arg3[%c0_71, %c0_72, %c0_73] : memref<1x256x64xbf16, #tpu.memory_space<vmem>>, vector<1x256x64xbf16>
    %77 = vector.shape_cast %76 : vector<1x256x64xbf16> to vector<256x64xbf16>
    %78 = vector.shape_cast %75 : vector<256x64xbf16> to vector<1x256x64xbf16>
    tpu.vector_store %arg3[%c0_71, %c0_72, %c0_73], %78 {strides = array<i32>} : memref<1x256x64xbf16, #tpu.memory_space<vmem>>, vector<1x256x64xbf16>,
    return
  }
  func.func @transform_0(%arg0: i32) -> (i32, i32, i32, i32) {
    %c0_i32 = arith.constant 0 : i32
    %c0_i32_0 = arith.constant 0 : i32
    %c0_i32_1 = arith.constant 0 : i32
    %c0_i32_2 = arith.constant 0 : i32
    return %arg0, %c0_i32, %c0_i32_0, %c0_i32_1 : i32, i32, i32, i32
  }
  func.func @transform_1(%arg0: i32) -> (i32, i32, i32) {
    %c0_i32 = arith.constant 0 : i32
    %c0_i32_0 = arith.constant 0 : i32
    %c0_i32_1 = arith.constant 0 : i32
    %c0_i32_2 = arith.constant 0 : i32
    return %c0_i32, %c0_i32_0, %c0_i32_1 : i32, i32, i32
  }
  func.func @transform_2(%arg0: i32) -> (i32, i32, i32) {
    %c0_i32 = arith.constant 0 : i32
    %c0_i32_0 = arith.constant 0 : i32
    %c0_i32_1 = arith.constant 0 : i32
    return %arg0, %c0_i32, %c0_i32_0 : i32, i32, i32
  }
  func.func @transform_3(%arg0: i32) -> (i32, i32, i32) {
    %c0_i32 = arith.constant 0 : i32
    %c0_i32_0 = arith.constant 0 : i32
    %c0_i32_1 = arith.constant 0 : i32
    return %arg0, %c0_i32, %c0_i32_0 : i32, i32, i32
  }
}

module attributes {stable_mosaic.version = 11 : i64} {
  func.func @_bn_prelu_kernel(%arg0: i32, %arg1: memref<1x256x64xbf16, #tpu.memory_space<vmem>>, %arg2: memref<1x64xf32, #tpu.memory_space<vmem>>, %arg3: memref<1x64xf32, #tpu.memory_space<vmem>>, %arg4: memref<1x64xf32, #tpu.memory_space<vmem>>, %arg5: memref<1x4x256x16xf32, #tpu.memory_space<vmem>>) attributes {dimension_semantics = [#tpu.dimension_semantics<parallel>], iteration_bounds = array<i64: 2>, scalar_prefetch = 0 : i64, scratch_operands = 0 : i64, tpu.core_type = #tpu.core_type<tc>, window_params = [{transform_indices = @transform_0, window_bounds = array<i64: 1, 256, 64>}, {pipeline_mode = #tpu.pipeline_mode<synchronous>, transform_indices = @transform_1, window_bounds = array<i64: 1, 64>}, {pipeline_mode = #tpu.pipeline_mode<synchronous>, transform_indices = @transform_2, window_bounds = array<i64: 1, 64>}, {pipeline_mode = #tpu.pipeline_mode<synchronous>, transform_indices = @transform_3, window_bounds = array<i64: 1, 64>}, {transform_indices = @transform_4, window_bounds = array<i64: 1, 4, 256, 16>}]} {
    %c0 = arith.constant 0 : index
    %c0_0 = arith.constant 0 : index
    %c0_1 = arith.constant 0 : index
    %0 = vector.load %arg1[%c0, %c0_0, %c0_1] : memref<1x256x64xbf16, #tpu.memory_space<vmem>>, vector<1x256x64xbf16>
    %1 = vector.shape_cast %0 : vector<1x256x64xbf16> to vector<256x64xbf16>
    %2 = arith.extf %1 : vector<256x64xbf16> to vector<256x64xf32>
    %c0_2 = arith.constant 0 : index
    %c0_3 = arith.constant 0 : index
    %3 = vector.load %arg2[%c0_2, %c0_3] : memref<1x64xf32, #tpu.memory_space<vmem>>, vector<1x64xf32>
    %4 = vector.broadcast %3 : vector<1x64xf32> to vector<256x64xf32>
    %5 = arith.mulf %2, %4 : vector<256x64xf32>
    %c0_4 = arith.constant 0 : index
    %c0_5 = arith.constant 0 : index
    %6 = vector.load %arg3[%c0_4, %c0_5] : memref<1x64xf32, #tpu.memory_space<vmem>>, vector<1x64xf32>
    %7 = vector.broadcast %6 : vector<1x64xf32> to vector<256x64xf32>
    %8 = arith.addf %5, %7 : vector<256x64xf32>
    %cst = arith.constant 0.000000e+00 : f32
    %9 = vector.broadcast %cst : f32 to vector<256x64xf32>
    %10 = arith.cmpf ogt, %8, %9 : vector<256x64xf32>
    %c0_6 = arith.constant 0 : index
    %c0_7 = arith.constant 0 : index
    %11 = vector.load %arg4[%c0_6, %c0_7] : memref<1x64xf32, #tpu.memory_space<vmem>>, vector<1x64xf32>
    %12 = vector.broadcast %11 : vector<1x64xf32> to vector<256x64xf32>
    %13 = arith.mulf %12, %8 : vector<256x64xf32>
    %14 = arith.select %10, %8, %13 : vector<256x64xi1>, vector<256x64xf32>
    %15 = vector.extract_strided_slice %14 {offsets = [0, 0], sizes = [256, 16], strides = [1, 1]} : vector<256x64xf32> to vector<256x16xf32>
    %c0_8 = arith.constant 0 : index
    %c0_9 = arith.constant 0 : index
    %c0_10 = arith.constant 0 : index
    %c0_11 = arith.constant 0 : index
    %16 = vector.load %arg5[%c0_8, %c0_9, %c0_10, %c0_11] : memref<1x4x256x16xf32, #tpu.memory_space<vmem>>, vector<1x1x256x16xf32>
    %17 = vector.shape_cast %16 : vector<1x1x256x16xf32> to vector<256x16xf32>
    %18 = vector.shape_cast %15 : vector<256x16xf32> to vector<1x1x256x16xf32>
    tpu.vector_store %arg5[%c0_8, %c0_9, %c0_10, %c0_11], %18 {strides = array<i32>} : memref<1x4x256x16xf32, #tpu.memory_space<vmem>>, vector<1x1x256x16xf32>,
    %19 = vector.extract_strided_slice %14 {offsets = [0, 16], sizes = [256, 16], strides = [1, 1]} : vector<256x64xf32> to vector<256x16xf32>
    %c0_12 = arith.constant 0 : index
    %c1 = arith.constant 1 : index
    %c0_13 = arith.constant 0 : index
    %c0_14 = arith.constant 0 : index
    %20 = vector.load %arg5[%c0_12, %c1, %c0_13, %c0_14] : memref<1x4x256x16xf32, #tpu.memory_space<vmem>>, vector<1x1x256x16xf32>
    %21 = vector.shape_cast %20 : vector<1x1x256x16xf32> to vector<256x16xf32>
    %22 = vector.shape_cast %19 : vector<256x16xf32> to vector<1x1x256x16xf32>
    tpu.vector_store %arg5[%c0_12, %c1, %c0_13, %c0_14], %22 {strides = array<i32>} : memref<1x4x256x16xf32, #tpu.memory_space<vmem>>, vector<1x1x256x16xf32>,
    %23 = vector.extract_strided_slice %14 {offsets = [0, 32], sizes = [256, 16], strides = [1, 1]} : vector<256x64xf32> to vector<256x16xf32>
    %c0_15 = arith.constant 0 : index
    %c2 = arith.constant 2 : index
    %c0_16 = arith.constant 0 : index
    %c0_17 = arith.constant 0 : index
    %24 = vector.load %arg5[%c0_15, %c2, %c0_16, %c0_17] : memref<1x4x256x16xf32, #tpu.memory_space<vmem>>, vector<1x1x256x16xf32>
    %25 = vector.shape_cast %24 : vector<1x1x256x16xf32> to vector<256x16xf32>
    %26 = vector.shape_cast %23 : vector<256x16xf32> to vector<1x1x256x16xf32>
    tpu.vector_store %arg5[%c0_15, %c2, %c0_16, %c0_17], %26 {strides = array<i32>} : memref<1x4x256x16xf32, #tpu.memory_space<vmem>>, vector<1x1x256x16xf32>,
    %27 = vector.extract_strided_slice %14 {offsets = [0, 48], sizes = [256, 16], strides = [1, 1]} : vector<256x64xf32> to vector<256x16xf32>
    %c0_18 = arith.constant 0 : index
    %c3 = arith.constant 3 : index
    %c0_19 = arith.constant 0 : index
    %c0_20 = arith.constant 0 : index
    %28 = vector.load %arg5[%c0_18, %c3, %c0_19, %c0_20] : memref<1x4x256x16xf32, #tpu.memory_space<vmem>>, vector<1x1x256x16xf32>
    %29 = vector.shape_cast %28 : vector<1x1x256x16xf32> to vector<256x16xf32>
    %30 = vector.shape_cast %27 : vector<256x16xf32> to vector<1x1x256x16xf32>
    tpu.vector_store %arg5[%c0_18, %c3, %c0_19, %c0_20], %30 {strides = array<i32>} : memref<1x4x256x16xf32, #tpu.memory_space<vmem>>, vector<1x1x256x16xf32>,
    return
  }
  func.func @transform_0(%arg0: i32) -> (i32, i32, i32) {
    %c0_i32 = arith.constant 0 : i32
    %c0_i32_0 = arith.constant 0 : i32
    %c0_i32_1 = arith.constant 0 : i32
    return %arg0, %c0_i32, %c0_i32_0 : i32, i32, i32
  }
  func.func @transform_1(%arg0: i32) -> (i32, i32) {
    %c0_i32 = arith.constant 0 : i32
    %c0_i32_0 = arith.constant 0 : i32
    %c0_i32_1 = arith.constant 0 : i32
    return %c0_i32, %c0_i32_0 : i32, i32
  }
  func.func @transform_2(%arg0: i32) -> (i32, i32) {
    %c0_i32 = arith.constant 0 : i32
    %c0_i32_0 = arith.constant 0 : i32
    %c0_i32_1 = arith.constant 0 : i32
    return %c0_i32, %c0_i32_0 : i32, i32
  }
  func.func @transform_3(%arg0: i32) -> (i32, i32) {
    %c0_i32 = arith.constant 0 : i32
    %c0_i32_0 = arith.constant 0 : i32
    %c0_i32_1 = arith.constant 0 : i32
    return %c0_i32, %c0_i32_0 : i32, i32
  }
  func.func @transform_4(%arg0: i32) -> (i32, i32, i32, i32) {
    %c0_i32 = arith.constant 0 : i32
    %c0_i32_0 = arith.constant 0 : i32
    %c0_i32_1 = arith.constant 0 : i32
    %c0_i32_2 = arith.constant 0 : i32
    return %arg0, %c0_i32, %c0_i32_0, %c0_i32_1 : i32, i32, i32, i32
  }
}

</mosaic_0001>

<llo_original>
// kernel: single_layer_forward.3
$region0: #{single_layer_forward.3}
  #allocation0 [shape = 'u32[]', space=smem, size = 0x4, offset = 0x4, fixed_abs, tag = 'smem constant byte address 0x4 - core index']
  #allocation1 [shape = 'u32[144,128]{1,0:T(1,128)}', space=vmem, size = 0x12000, scoped, tag = 'internal scratch']
  %s0 = inlined_call_operand.vmem [shape: bf16[2,256,64], index: 0, kind: input, shape index: {}]
  %s1 = inlined_call_operand.vmem [shape: f32[1,64], index: 1, kind: input, shape index: {}]
  %s2 = inlined_call_operand.vmem [shape: f32[1,64], index: 2, kind: input, shape index: {}]
  %s3 = inlined_call_operand.vmem [shape: f32[1,64], index: 3, kind: input, shape index: {}]
  %s4 = inlined_call_operand.hbm [shape: f32[2,4,256,16], index: 4, kind: output, shape index: {}]
  %s5 = sld [smem:[#allocation0]]
  $region49: #{single_layer_forward.3} parent=0
    _
  %s7 = ssub.s32 1, %s5
  %s8 = scalar_select 0, %s7, %s5
  $region1: #{single_layer_forward.3} parent=0
    #allocation2 [shape = 'u8[1048576]{0}', space=vmem, size = 0x100000, scoped, tag = 'output window, operand 0']
    #allocation3 [shape = 's32[2]{0}', space=sflag, size = 0x8, scoped, tag = 'scoped memory for single_layer_forward.3']
    %9 = vsyncpa [#allocation3], 0
    %s10 = scalar_lea.sflag [#allocation3], 1
    %11 = vsyncpa %s10, 0
    loop: start=0, step=1, limit=4
    $region2: #{single_layer_forward.3} parent=1 // loop_pre_header
      _
    $region3: #{single_layer_forward.3} parent=1 // loop_header
      %s13 = sphi 0, %s17
      %p14 = scmp.ge.s32.totalorder %s13, 4
      %s23 = sphi 0, %s25
      %s26 = sphi 0, %s23
      %s27 = sphi 0, %s26
      %s43 = sphi 0, %s27
      %s47 = sphi 0, %s47
      %s49 = sphi 0, %s47
      %s50 = sphi 0, %s49
      %s64 = sphi 0, %s50
      %s68 = sphi 0, %s68
      %s70 = sphi 0, %s68
      %s71 = sphi 0, %s70
      %s85 = sphi 0, %s71
      %s89 = sphi 0, %s89
      %s91 = sphi 0, %s89
      %s92 = sphi 0, %s91
      %s106 = sphi 0, %s92
      %s112 = sphi 0, %s114
      %s115 = sphi 0, %s112
      %s116 = sphi 0, %s115
      %s132 = sphi 0, %s116
    $region4: #{single_layer_forward.3} parent=1 // loop_header_branch
      %16 = sbr.rel (%p14) target = $region8
    $region5: #{single_layer_forward.3} parent=1 // loop_body
      %s18 = ssub.s32 %s13, 1
      %s19 = ssub.s32 %s13, 2
      %s20 = sadd.s32 %s13, 1
      %s21 = ssub.s32 %s13, %s20
      %p22 = scmp.eq.s32.totalorder %s21, 0
      %s24 = sadd.s32 %s23, 1
      %s25 = scalar_select %p22, %s23, %s24
      %p28 = pneg %p22
      %p29 = scmp.eq.s32.totalorder %s13, 1
      %p30 = por %p28, %p29
      %p31 = scmp.ne.s32.totalorder %s23, %s26
      %p32 = scmp.eq.s32.totalorder %s13, 0
      %p33 = por %p31, %p32
      %p34 = scmp.ne.s32.totalorder %s23, %s26
      %p35 = scmp.eq.s32.totalorder %s18, 1
      %p36 = por %p34, %p35
      %p37 = scmp.ne.s32.totalorder %s26, %s27
      %p38 = scmp.eq.s32.totalorder %s18, 0
      %p39 = por %p37, %p38
      %p40 = scmp.ne.s32.totalorder %s26, %s27
      %p41 = scmp.eq.s32.totalorder %s19, 1
      %p42 = por %p40, %p41
      %p44 = scmp.ne.s32.totalorder %s27, %s43
      %p45 = scmp.eq.s32.totalorder %s19, 0
      %p46 = por %p44, %p45
      %s48 = sadd.s32 %s47, 1
      %p51 = scmp.eq.s32.totalorder %s13, 1
      %p52 = scmp.ne.s32.totalorder %s47, %s49
      %p53 = scmp.eq.s32.totalorder %s13, 0
      %p54 = por %p52, %p53
      %p55 = scmp.ne.s32.totalorder %s47, %s49
      %p56 = scmp.eq.s32.totalorder %s18, 1
      %p57 = por %p55, %p56
      %p58 = scmp.ne.s32.totalorder %s49, %s50
      %p59 = scmp.eq.s32.totalorder %s18, 0
      %p60 = por %p58, %p59
      %p61 = scmp.ne.s32.totalorder %s49, %s50
      %p62 = scmp.eq.s32.totalorder %s19, 1
      %p63 = por %p61, %p62
      %p65 = scmp.ne.s32.totalorder %s50, %s64
      %p66 = scmp.eq.s32.totalorder %s19, 0
      %p67 = por %p65, %p66
      %s69 = sadd.s32 %s68, 1
      %p72 = scmp.eq.s32.totalorder %s13, 1
      %p73 = scmp.ne.s32.totalorder %s68, %s70
      %p74 = scmp.eq.s32.totalorder %s13, 0
      %p75 = por %p73, %p74
      %p76 = scmp.ne.s32.totalorder %s68, %s70
      %p77 = scmp.eq.s32.totalorder %s18, 1
      %p78 = por %p76, %p77
      %p79 = scmp.ne.s32.totalorder %s70, %s71
      %p80 = scmp.eq.s32.totalorder %s18, 0
      %p81 = por %p79, %p80
      %p82 = scmp.ne.s32.totalorder %s70, %s71
      %p83 = scmp.eq.s32.totalorder %s19, 1
      %p84 = por %p82, %p83
      %p86 = scmp.ne.s32.totalorder %s71, %s85
      %p87 = scmp.eq.s32.totalorder %s19, 0
      %p88 = por %p86, %p87
      %s90 = sadd.s32 %s89, 1
      %p93 = scmp.eq.s32.totalorder %s13, 1
      %p94 = scmp.ne.s32.totalorder %s89, %s91
      %p95 = scmp.eq.s32.totalorder %s13, 0
      %p96 = por %p94, %p95
      %p97 = scmp.ne.s32.totalorder %s89, %s91
      %p98 = scmp.eq.s32.totalorder %s18, 1
      %p99 = por %p97, %p98
      %p100 = scmp.ne.s32.totalorder %s91, %s92
      %p101 = scmp.eq.s32.totalorder %s18, 0
      %p102 = por %p100, %p101
      %p103 = scmp.ne.s32.totalorder %s91, %s92
      %p104 = scmp.eq.s32.totalorder %s19, 1
      %p105 = por %p103, %p104
      %p107 = scmp.ne.s32.totalorder %s92, %s106
      %p108 = scmp.eq.s32.totalorder %s19, 0
      %p109 = por %p107, %p108
      %s110 = ssub.s32 %s13, %s20
      %p111 = scmp.eq.s32.totalorder %s110, 0
      %s113 = sadd.s32 %s112, 1
      %s114 = scalar_select %p111, %s112, %s113
      %p117 = pneg %p111
      %p118 = scmp.eq.s32.totalorder %s13, 1
      %p119 = por %p117, %p118
      %p120 = scmp.ne.s32.totalorder %s112, %s115
      %p121 = scmp.eq.s32.totalorder %s13, 0
      %p122 = por %p120, %p121
      %p123 = scmp.ne.s32.totalorder %s112, %s115
      %p124 = scmp.eq.s32.totalorder %s18, 1
      %p125 = por %p123, %p124
      %p126 = scmp.ne.s32.totalorder %s115, %s116
      %p127 = scmp.eq.s32.totalorder %s18, 0
      %p128 = por %p126, %p127
      %p129 = scmp.ne.s32.totalorder %s115, %s116
      %p130 = scmp.eq.s32.totalorder %s19, 1
      %p131 = por %p129, %p130
      %p133 = scmp.ne.s32.totalorder %s116, %s132
      %p134 = scmp.eq.s32.totalorder %s19, 0
      %p135 = por %p133, %p134
      %p136 = scmp.le.s32.totalorder 1, %s13
      %p137 = scmp.lt.s32.totalorder %s13, 3
      %p138 = pnand %p136, %p137
      %p139 = pneg %p138
      // Predicated region
      $region9: #{single_layer_forward.3} parent=5 // pred_check
        _
      $region10: #{single_layer_forward.3} parent=5 // pred_check_branch
        %141 = sbr.rel (%p138) target = $region12
      $region11: #{single_layer_forward.3} parent=5 // pred_region
        %s142 = ssub.s32 %s13, 1
        // Predicated region
        $region13: #{single_layer_forward.3} parent=11 // pred_check
          %p143 = pneg %p60
        $region14: #{single_layer_forward.3} parent=11 // pred_check_branch
          %145 = sbr.rel (%p143) target = $region16
        $region15: #{single_layer_forward.3} parent=11 // pred_region
          _
        $region16: #{single_layer_forward.3} parent=11 // pred_fallthru
          _
        // Predicated region
        $region17: #{single_layer_forward.3} parent=11 // pred_check
          %p146 = pneg %p81
        $region18: #{single_layer_forward.3} parent=11 // pred_check_branch
          %148 = sbr.rel (%p146) target = $region20
        $region19: #{single_layer_forward.3} parent=11 // pred_region
          _
        $region20: #{single_layer_forward.3} parent=11 // pred_fallthru
          _
        // Predicated region
        $region21: #{single_layer_forward.3} parent=11 // pred_check
          %p149 = pneg %p102
        $region22: #{single_layer_forward.3} parent=11 // pred_check_branch
          %151 = sbr.rel (%p149) target = $region24
        $region23: #{single_layer_forward.3} parent=11 // pred_region
          _
        $region24: #{single_layer_forward.3} parent=11 // pred_fallthru
          _
      $region12: #{single_layer_forward.3} parent=5 // pred_fallthru
        _
      %p152 = scmp.lt.s32.totalorder %s13, 2
      // Predicated region
      $region25: #{single_layer_forward.3} parent=5 // pred_check
        %p153 = pneg %p152
      $region26: #{single_layer_forward.3} parent=5 // pred_check_branch
        %155 = sbr.rel (%p153) target = $region28
      $region27: #{single_layer_forward.3} parent=5 // pred_region
        // Predicated region
        $region29: #{single_layer_forward.3} parent=27 // pred_check
          %p156 = pneg %p33
        $region30: #{single_layer_forward.3} parent=27 // pred_check_branch
          %158 = sbr.rel (%p156) target = $region32
        $region31: #{single_layer_forward.3} parent=27 // pred_region
          %p159 = scmp.lt.s32.totalorder %s13, 1
          %s160 = scalar_select %p159, %s13, 1
          %s161 = smul.addr %s160, 32
          %s162 = smul.addr %s161, 4
          %s163 = scalar_lea.vmem %s0, %s162
        $region32: #{single_layer_forward.3} parent=27 // pred_fallthru
          _
      $region28: #{single_layer_forward.3} parent=5 // pred_fallthru
        _
      %p164 = scmp.le.s32.totalorder 1, %s13
      %p165 = scmp.lt.s32.totalorder %s13, 3
      %p166 = pnand %p164, %p165
      %p167 = pneg %p166
      // Predicated region
      $region33: #{single_layer_forward.3} parent=5 // pred_check
        _
      $region34: #{single_layer_forward.3} parent=5 // pred_check_branch
        %169 = sbr.rel (%p166) target = $region36
      $region35: #{single_layer_forward.3} parent=5 // pred_region
        %s170 = ssub.s32 %s13, 1
        %p171 = scmp.lt.s32.totalorder %s18, 1
        %s172 = scalar_select %p171, %s18, 1
        %s173 = smul.addr %s172, 32
        %s174 = smul.addr %s173, 4
        %s175 = scalar_lea.vmem %s0, %s174
        %p176 = pneg %p39
        %p177 = pneg %p36
        %p178 = pneg %p60
        %p179 = pneg %p57
        %p180 = pneg %p81
        %p181 = pneg %p78
        %p182 = pneg %p102
        %p183 = pneg %p99
        %p184 = pneg %p128
        %p185 = pneg %p125
        %s186 = sand.u32 %s115, 1
        %s187 = scalar_lea.sflag [#allocation3], %s186
        %s188 = sand.u32 %s115, 1
        %s189 = smul.addr %s188, 1024
        %s190 = scalar_lea.vmem [#allocation2], %s189
        %p191 = scmp.lt.s32.totalorder %s18, 1
        %s192 = scalar_select %p191, %s18, 1
        %s193 = smul.addr %s192, 32
        %s194 = smul.addr %s193, 4
        %s195 = scalar_lea.vmem %s0, %s194
        %v196 = vld [vmem:[%s195] sm:$0xf]
        %v197 = vld [vmem:[%s195 + $0x4] sm:$0xf]
        %v198 = vld [vmem:[%s195 + $0x8] sm:$0xf]
        %v199 = vld [vmem:[%s195 + $0xc] sm:$0xf]
        %v200 = vld [vmem:[%s195 + $0x10] sm:$0xf]
        %v201 = vld [vmem:[%s195 + $0x14] sm:$0xf]
        %v202 = vld [vmem:[%s195 + $0x18] sm:$0xf]
        %v203 = vld [vmem:[%s195 + $0x1c] sm:$0xf]
        %v204 = vld [vmem:[%s195 + $0x20] sm:$0xf]
        %v205 = vld [vmem:[%s195 + $0x24] sm:$0xf]
        %v206 = vld [vmem:[%s195 + $0x28] sm:$0xf]
        %v207 = vld [vmem:[%s195 + $0x2c] sm:$0xf]
        %v208 = vld [vmem:[%s195 + $0x30] sm:$0xf]
        %v209 = vld [vmem:[%s195 + $0x34] sm:$0xf]
        %v210 = vld [vmem:[%s195 + $0x38] sm:$0xf]
        %v211 = vld [vmem:[%s195 + $0x3c] sm:$0xf]
        %v212 = vld [vmem:[%s195 + $0x40] sm:$0xf]
        %v213 = vld [vmem:[%s195 + $0x44] sm:$0xf]
        %v214 = vld [vmem:[%s195 + $0x48] sm:$0xf]
        %v215 = vld [vmem:[%s195 + $0x4c] sm:$0xf]
        %v216 = vld [vmem:[%s195 + $0x50] sm:$0xf]
        %v217 = vld [vmem:[%s195 + $0x54] sm:$0xf]
        %v218 = vld [vmem:[%s195 + $0x58] sm:$0xf]
        %v219 = vld [vmem:[%s195 + $0x5c] sm:$0xf]
        %v220 = vld [vmem:[%s195 + $0x60] sm:$0xf]
        %v221 = vld [vmem:[%s195 + $0x64] sm:$0xf]
        %v222 = vld [vmem:[%s195 + $0x68] sm:$0xf]
        %v223 = vld [vmem:[%s195 + $0x6c] sm:$0xf]
        %v224 = vld [vmem:[%s195 + $0x70] sm:$0xf]
        %v225 = vld [vmem:[%s195 + $0x74] sm:$0xf]
        %v226 = vld [vmem:[%s195 + $0x78] sm:$0xf]
        %v227 = vld [vmem:[%s195 + $0x7c] sm:$0xf]
        %v228 = vunpack.c.l.bf16 %v196
        %v229 = vunpack.c.l.bf16 %v197
        %v230 = vunpack.c.l.bf16 %v198
        %v231 = vunpack.c.l.bf16 %v199
        %v232 = vunpack.c.l.bf16 %v200
        %v233 = vunpack.c.l.bf16 %v201
        %v234 = vunpack.c.l.bf16 %v202
        %v235 = vunpack.c.l.bf16 %v203
        %v236 = vunpack.c.l.bf16 %v204
        %v237 = vunpack.c.l.bf16 %v205
        %v238 = vunpack.c.l.bf16 %v206
        %v239 = vunpack.c.l.bf16 %v207
        %v240 = vunpack.c.l.bf16 %v208
        %v241 = vunpack.c.l.bf16 %v209
        %v242 = vunpack.c.l.bf16 %v210
        %v243 = vunpack.c.l.bf16 %v211
        %v244 = vunpack.c.l.bf16 %v212
        %v245 = vunpack.c.l.bf16 %v213
        %v246 = vunpack.c.l.bf16 %v214
        %v247 = vunpack.c.l.bf16 %v215
        %v248 = vunpack.c.l.bf16 %v216
        %v249 = vunpack.c.l.bf16 %v217
        %v250 = vunpack.c.l.bf16 %v218
        %v251 = vunpack.c.l.bf16 %v219
        %v252 = vunpack.c.l.bf16 %v220
        %v253 = vunpack.c.l.bf16 %v221
        %v254 = vunpack.c.l.bf16 %v222
        %v255 = vunpack.c.l.bf16 %v223
        %v256 = vunpack.c.l.bf16 %v224
        %v257 = vunpack.c.l.bf16 %v225
        %v258 = vunpack.c.l.bf16 %v226
        %v259 = vunpack.c.l.bf16 %v227
        %v260 = vld [vmem:[%s1] sm:$0x1]
        %v262 = vlaneseq
        %v263 = vshrl.u32 %v262, 7
        %v264 = vsub.s32 0, %v263
        %v265 = vrot.slane %v260, %v264
        %v267 = vmul.f32 %v228, %v265
        %v268 = vmul.f32 %v229, %v265
        %v269 = vmul.f32 %v230, %v265
        %v270 = vmul.f32 %v231, %v265
        %v271 = vmul.f32 %v232, %v265
        %v272 = vmul.f32 %v233, %v265
        %v273 = vmul.f32 %v234, %v265
        %v274 = vmul.f32 %v235, %v265
        %v275 = vmul.f32 %v236, %v265
        %v276 = vmul.f32 %v237, %v265
        %v277 = vmul.f32 %v238, %v265
        %v278 = vmul.f32 %v239, %v265
        %v279 = vmul.f32 %v240, %v265
        %v280 = vmul.f32 %v241, %v265
        %v281 = vmul.f32 %v242, %v265
        %v282 = vmul.f32 %v243, %v265
        %v283 = vmul.f32 %v244, %v265
        %v284 = vmul.f32 %v245, %v265
        %v285 = vmul.f32 %v246, %v265
        %v286 = vmul.f32 %v247, %v265
        %v287 = vmul.f32 %v248, %v265
        %v288 = vmul.f32 %v249, %v265
        %v289 = vmul.f32 %v250, %v265
        %v290 = vmul.f32 %v251, %v265
        %v291 = vmul.f32 %v252, %v265
        %v292 = vmul.f32 %v253, %v265
        %v293 = vmul.f32 %v254, %v265
        %v294 = vmul.f32 %v255, %v265
        %v295 = vmul.f32 %v256, %v265
        %v296 = vmul.f32 %v257, %v265
        %v297 = vmul.f32 %v258, %v265
        %v298 = vmul.f32 %v259, %v265
        %v299 = vld [vmem:[%s2] sm:$0x1]
        %v301 = vlaneseq
        %v302 = vshrl.u32 %v301, 7
        %v303 = vsub.s32 0, %v302
        %v304 = vrot.slane %v299, %v303
        %v306 = vadd.f32 %v267, %v304
        %v307 = vadd.f32 %v268, %v304
        %v308 = vadd.f32 %v269, %v304
        %v309 = vadd.f32 %v270, %v304
        %v310 = vadd.f32 %v271, %v304
        %v311 = vadd.f32 %v272, %v304
        %v312 = vadd.f32 %v273, %v304
        %v313 = vadd.f32 %v274, %v304
        %v314 = vadd.f32 %v275, %v304
        %v315 = vadd.f32 %v276, %v304
        %v316 = vadd.f32 %v277, %v304
        %v317 = vadd.f32 %v278, %v304
        %v318 = vadd.f32 %v279, %v304
        %v319 = vadd.f32 %v280, %v304
        %v320 = vadd.f32 %v281, %v304
        %v321 = vadd.f32 %v282, %v304
        %v322 = vadd.f32 %v283, %v304
        %v323 = vadd.f32 %v284, %v304
        %v324 = vadd.f32 %v285, %v304
        %v325 = vadd.f32 %v286, %v304
        %v326 = vadd.f32 %v287, %v304
        %v327 = vadd.f32 %v288, %v304
        %v328 = vadd.f32 %v289, %v304
        %v329 = vadd.f32 %v290, %v304
        %v330 = vadd.f32 %v291, %v304
        %v331 = vadd.f32 %v292, %v304
        %v332 = vadd.f32 %v293, %v304
        %v333 = vadd.f32 %v294, %v304
        %v334 = vadd.f32 %v295, %v304
        %v335 = vadd.f32 %v296, %v304
        %v336 = vadd.f32 %v297, %v304
        %v337 = vadd.f32 %v298, %v304
        %vm338 = vcmp.gt.f32.partialorder %v306, 0.0
        %vm339 = vcmp.gt.f32.partialorder %v307, 0.0
        %vm340 = vcmp.gt.f32.partialorder %v308, 0.0
        %vm341 = vcmp.gt.f32.partialorder %v309, 0.0
        %vm342 = vcmp.gt.f32.partialorder %v310, 0.0
        %vm343 = vcmp.gt.f32.partialorder %v311, 0.0
        %vm344 = vcmp.gt.f32.partialorder %v312, 0.0
        %vm345 = vcmp.gt.f32.partialorder %v313, 0.0
        %vm346 = vcmp.gt.f32.partialorder %v314, 0.0
        %vm347 = vcmp.gt.f32.partialorder %v315, 0.0
        %vm348 = vcmp.gt.f32.partialorder %v316, 0.0
        %vm349 = vcmp.gt.f32.partialorder %v317, 0.0
        %vm350 = vcmp.gt.f32.partialorder %v318, 0.0
        %vm351 = vcmp.gt.f32.partialorder %v319, 0.0
        %vm352 = vcmp.gt.f32.partialorder %v320, 0.0
        %vm353 = vcmp.gt.f32.partialorder %v321, 0.0
        %vm354 = vcmp.gt.f32.partialorder %v322, 0.0
        %vm355 = vcmp.gt.f32.partialorder %v323, 0.0
        %vm356 = vcmp.gt.f32.partialorder %v324, 0.0
        %vm357 = vcmp.gt.f32.partialorder %v325, 0.0
        %vm358 = vcmp.gt.f32.partialorder %v326, 0.0
        %vm359 = vcmp.gt.f32.partialorder %v327, 0.0
        %vm360 = vcmp.gt.f32.partialorder %v328, 0.0
        %vm361 = vcmp.gt.f32.partialorder %v329, 0.0
        %vm362 = vcmp.gt.f32.partialorder %v330, 0.0
        %vm363 = vcmp.gt.f32.partialorder %v331, 0.0
        %vm364 = vcmp.gt.f32.partialorder %v332, 0.0
        %vm365 = vcmp.gt.f32.partialorder %v333, 0.0
        %vm366 = vcmp.gt.f32.partialorder %v334, 0.0
        %vm367 = vcmp.gt.f32.partialorder %v335, 0.0
        %vm368 = vcmp.gt.f32.partialorder %v336, 0.0
        %vm369 = vcmp.gt.f32.partialorder %v337, 0.0
        %v370 = vld [vmem:[%s3] sm:$0x1]
        %v372 = vlaneseq
        %v373 = vshrl.u32 %v372, 7
        %v374 = vsub.s32 0, %v373
        %v375 = vrot.slane %v370, %v374
        %v377 = vmul.f32 %v375, %v306
        %v378 = vmul.f32 %v375, %v307
        %v379 = vmul.f32 %v375, %v308
        %v380 = vmul.f32 %v375, %v309
        %v381 = vmul.f32 %v375, %v310
        %v382 = vmul.f32 %v375, %v311
        %v383 = vmul.f32 %v375, %v312
        %v384 = vmul.f32 %v375, %v313
        %v385 = vmul.f32 %v375, %v314
        %v386 = vmul.f32 %v375, %v315
        %v387 = vmul.f32 %v375, %v316
        %v388 = vmul.f32 %v375, %v317
        %v389 = vmul.f32 %v375, %v318
        %v390 = vmul.f32 %v375, %v319
        %v391 = vmul.f32 %v375, %v320
        %v392 = vmul.f32 %v375, %v321
        %v393 = vmul.f32 %v375, %v322
        %v394 = vmul.f32 %v375, %v323
        %v395 = vmul.f32 %v375, %v324
        %v396 = vmul.f32 %v375, %v325
        %v397 = vmul.f32 %v375, %v326
        %v398 = vmul.f32 %v375, %v327
        %v399 = vmul.f32 %v375, %v328
        %v400 = vmul.f32 %v375, %v329
        %v401 = vmul.f32 %v375, %v330
        %v402 = vmul.f32 %v375, %v331
        %v403 = vmul.f32 %v375, %v332
        %v404 = vmul.f32 %v375, %v333
        %v405 = vmul.f32 %v375, %v334
        %v406 = vmul.f32 %v375, %v335
        %v407 = vmul.f32 %v375, %v336
        %v408 = vmul.f32 %v375, %v337
        %v409 = vsel %vm338, %v306, %v377
        %v410 = vsel %vm339, %v307, %v378
        %v411 = vsel %vm340, %v308, %v379
        %v412 = vsel %vm341, %v309, %v380
        %v413 = vsel %vm342, %v310, %v381
        %v414 = vsel %vm343, %v311, %v382
        %v415 = vsel %vm344, %v312, %v383
        %v416 = vsel %vm345, %v313, %v384
        %v417 = vsel %vm346, %v314, %v385
        %v418 = vsel %vm347, %v315, %v386
        %v419 = vsel %vm348, %v316, %v387
        %v420 = vsel %vm349, %v317, %v388
        %v421 = vsel %vm350, %v318, %v389
        %v422 = vsel %vm351, %v319, %v390
        %v423 = vsel %vm352, %v320, %v391
        %v424 = vsel %vm353, %v321, %v392
        %v425 = vsel %vm354, %v322, %v393
        %v426 = vsel %vm355, %v323, %v394
        %v427 = vsel %vm356, %v324, %v395
        %v428 = vsel %vm357, %v325, %v396
        %v429 = vsel %vm358, %v326, %v397
        %v430 = vsel %vm359, %v327, %v398
        %v431 = vsel %vm360, %v328, %v399
        %v432 = vsel %vm361, %v329, %v400
        %v433 = vsel %vm362, %v330, %v401
        %v434 = vsel %vm363, %v331, %v402
        %v435 = vsel %vm364, %v332, %v403
        %v436 = vsel %vm365, %v333, %v404
        %v437 = vsel %vm366, %v334, %v405
        %v438 = vsel %vm367, %v335, %v406
        %v439 = vsel %vm368, %v336, %v407
        %v440 = vsel %vm369, %v337, %v408
        %vm441 = vcmask 130048
        %442 = vst.msk [vmem:[%s190] sm:$0xff] %vm441, %v409
        %443 = vst.msk [vmem:[%s190 + $0x8] sm:$0xff] %vm441, %v410
        %444 = vst.msk [vmem:[%s190 + $0x10] sm:$0xff] %vm441, %v411
        %445 = vst.msk [vmem:[%s190 + $0x18] sm:$0xff] %vm441, %v412
        %446 = vst.msk [vmem:[%s190 + $0x20] sm:$0xff] %vm441, %v413
        %447 = vst.msk [vmem:[%s190 + $0x28] sm:$0xff] %vm441, %v414
        %448 = vst.msk [vmem:[%s190 + $0x30] sm:$0xff] %vm441, %v415
        %449 = vst.msk [vmem:[%s190 + $0x38] sm:$0xff] %vm441, %v416
        %450 = vst.msk [vmem:[%s190 + $0x40] sm:$0xff] %vm441, %v417
        %451 = vst.msk [vmem:[%s190 + $0x48] sm:$0xff] %vm441, %v418
        %452 = vst.msk [vmem:[%s190 + $0x50] sm:$0xff] %vm441, %v419
        %453 = vst.msk [vmem:[%s190 + $0x58] sm:$0xff] %vm441, %v420
        %454 = vst.msk [vmem:[%s190 + $0x60] sm:$0xff] %vm441, %v421
        %455 = vst.msk [vmem:[%s190 + $0x68] sm:$0xff] %vm441, %v422
        %456 = vst.msk [vmem:[%s190 + $0x70] sm:$0xff] %vm441, %v423
        %457 = vst.msk [vmem:[%s190 + $0x78] sm:$0xff] %vm441, %v424
        %458 = vst.msk [vmem:[%s190 + $0x80] sm:$0xff] %vm441, %v425
        %459 = vst.msk [vmem:[%s190 + $0x88] sm:$0xff] %vm441, %v426
        %460 = vst.msk [vmem:[%s190 + $0x90] sm:$0xff] %vm441, %v427
        %461 = vst.msk [vmem:[%s190 + $0x98] sm:$0xff] %vm441, %v428
        %462 = vst.msk [vmem:[%s190 + $0xa0] sm:$0xff] %vm441, %v429
        %463 = vst.msk [vmem:[%s190 + $0xa8] sm:$0xff] %vm441, %v430
        %464 = vst.msk [vmem:[%s190 + $0xb0] sm:$0xff] %vm441, %v431
        %465 = vst.msk [vmem:[%s190 + $0xb8] sm:$0xff] %vm441, %v432
        %466 = vst.msk [vmem:[%s190 + $0xc0] sm:$0xff] %vm441, %v433
        %467 = vst.msk [vmem:[%s190 + $0xc8] sm:$0xff] %vm441, %v434
        %468 = vst.msk [vmem:[%s190 + $0xd0] sm:$0xff] %vm441, %v435
        %469 = vst.msk [vmem:[%s190 + $0xd8] sm:$0xff] %vm441, %v436
        %470 = vst.msk [vmem:[%s190 + $0xe0] sm:$0xff] %vm441, %v437
        %471 = vst.msk [vmem:[%s190 + $0xe8] sm:$0xff] %vm441, %v438
        %472 = vst.msk [vmem:[%s190 + $0xf0] sm:$0xff] %vm441, %v439
        %473 = vst.msk [vmem:[%s190 + $0xf8] sm:$0xff] %vm441, %v440
        %506 = vrot.lane.b32.xlu0 %v409, 112
        %v507 = vpop.permute.xlu0 %506
        %508 = vrot.lane.b32.xlu0 %v410, 112
        %v509 = vpop.permute.xlu0 %508
        %510 = vrot.lane.b32.xlu0 %v411, 112
        %v511 = vpop.permute.xlu0 %510
        %512 = vrot.lane.b32.xlu0 %v412, 112
        %v513 = vpop.permute.xlu0 %512
        %514 = vrot.lane.b32.xlu0 %v413, 112
        %v515 = vpop.permute.xlu0 %514
        %516 = vrot.lane.b32.xlu0 %v414, 112
        %v517 = vpop.permute.xlu0 %516
        %518 = vrot.lane.b32.xlu0 %v415, 112
        %v519 = vpop.permute.xlu0 %518
        %520 = vrot.lane.b32.xlu0 %v416, 112
        %v521 = vpop.permute.xlu0 %520
        %522 = vrot.lane.b32.xlu0 %v417, 112
        %v523 = vpop.permute.xlu0 %522
        %524 = vrot.lane.b32.xlu0 %v418, 112
        %v525 = vpop.permute.xlu0 %524
        %526 = vrot.lane.b32.xlu0 %v419, 112
        %v527 = vpop.permute.xlu0 %526
        %528 = vrot.lane.b32.xlu0 %v420, 112
        %v529 = vpop.permute.xlu0 %528
        %530 = vrot.lane.b32.xlu0 %v421, 112
        %v531 = vpop.permute.xlu0 %530
        %532 = vrot.lane.b32.xlu0 %v422, 112
        %v533 = vpop.permute.xlu0 %532
        %534 = vrot.lane.b32.xlu0 %v423, 112
        %v535 = vpop.permute.xlu0 %534
        %536 = vrot.lane.b32.xlu0 %v424, 112
        %v537 = vpop.permute.xlu0 %536
        %538 = vrot.lane.b32.xlu0 %v425, 112
        %v539 = vpop.permute.xlu0 %538
        %540 = vrot.lane.b32.xlu0 %v426, 112
        %v541 = vpop.permute.xlu0 %540
        %542 = vrot.lane.b32.xlu0 %v427, 112
        %v543 = vpop.permute.xlu0 %542
        %544 = vrot.lane.b32.xlu0 %v428, 112
        %v545 = vpop.permute.xlu0 %544
        %546 = vrot.lane.b32.xlu0 %v429, 112
        %v547 = vpop.permute.xlu0 %546
        %548 = vrot.lane.b32.xlu0 %v430, 112
        %v549 = vpop.permute.xlu0 %548
        %550 = vrot.lane.b32.xlu0 %v431, 112
        %v551 = vpop.permute.xlu0 %550
        %552 = vrot.lane.b32.xlu0 %v432, 112
        %v553 = vpop.permute.xlu0 %552
        %554 = vrot.lane.b32.xlu0 %v433, 112
        %v555 = vpop.permute.xlu0 %554
        %556 = vrot.lane.b32.xlu0 %v434, 112
        %v557 = vpop.permute.xlu0 %556
        %558 = vrot.lane.b32.xlu0 %v435, 112
        %v559 = vpop.permute.xlu0 %558
        %560 = vrot.lane.b32.xlu0 %v436, 112
        %v561 = vpop.permute.xlu0 %560
        %562 = vrot.lane.b32.xlu0 %v437, 112
        %v563 = vpop.permute.xlu0 %562
        %564 = vrot.lane.b32.xlu0 %v438, 112
        %v565 = vpop.permute.xlu0 %564
        %566 = vrot.lane.b32.xlu0 %v439, 112
        %v567 = vpop.permute.xlu0 %566
        %568 = vrot.lane.b32.xlu0 %v440, 112
        %v569 = vpop.permute.xlu0 %568
        %s602 = scalar_lea.vmem %s190, 256 [#allocation2]
        %603 = vst.msk [vmem:[%s602] sm:$0xff] %vm441, %v507
        %604 = vst.msk [vmem:[%s602 + $0x8] sm:$0xff] %vm441, %v509
        %605 = vst.msk [vmem:[%s602 + $0x10] sm:$0xff] %vm441, %v511
        %606 = vst.msk [vmem:[%s602 + $0x18] sm:$0xff] %vm441, %v513
        %607 = vst.msk [vmem:[%s602 + $0x20] sm:$0xff] %vm441, %v515
        %608 = vst.msk [vmem:[%s602 + $0x28] sm:$0xff] %vm441, %v517
        %609 = vst.msk [vmem:[%s602 + $0x30] sm:$0xff] %vm441, %v519
        %610 = vst.msk [vmem:[%s602 + $0x38] sm:$0xff] %vm441, %v521
        %611 = vst.msk [vmem:[%s602 + $0x40] sm:$0xff] %vm441, %v523
        %612 = vst.msk [vmem:[%s602 + $0x48] sm:$0xff] %vm441, %v525
        %613 = vst.msk [vmem:[%s602 + $0x50] sm:$0xff] %vm441, %v527
        %614 = vst.msk [vmem:[%s602 + $0x58] sm:$0xff] %vm441, %v529
        %615 = vst.msk [vmem:[%s602 + $0x60] sm:$0xff] %vm441, %v531
        %616 = vst.msk [vmem:[%s602 + $0x68] sm:$0xff] %vm441, %v533
        %617 = vst.msk [vmem:[%s602 + $0x70] sm:$0xff] %vm441, %v535
        %618 = vst.msk [vmem:[%s602 + $0x78] sm:$0xff] %vm441, %v537
        %619 = vst.msk [vmem:[%s602 + $0x80] sm:$0xff] %vm441, %v539
        %620 = vst.msk [vmem:[%s602 + $0x88] sm:$0xff] %vm441, %v541
        %621 = vst.msk [vmem:[%s602 + $0x90] sm:$0xff] %vm441, %v543
        %622 = vst.msk [vmem:[%s602 + $0x98] sm:$0xff] %vm441, %v545
        %623 = vst.msk [vmem:[%s602 + $0xa0] sm:$0xff] %vm441, %v547
        %624 = vst.msk [vmem:[%s602 + $0xa8] sm:$0xff] %vm441, %v549
        %625 = vst.msk [vmem:[%s602 + $0xb0] sm:$0xff] %vm441, %v551
        %626 = vst.msk [vmem:[%s602 + $0xb8] sm:$0xff] %vm441, %v553
        %627 = vst.msk [vmem:[%s602 + $0xc0] sm:$0xff] %vm441, %v555
        %628 = vst.msk [vmem:[%s602 + $0xc8] sm:$0xff] %vm441, %v557
        %629 = vst.msk [vmem:[%s602 + $0xd0] sm:$0xff] %vm441, %v559
        %630 = vst.msk [vmem:[%s602 + $0xd8] sm:$0xff] %vm441, %v561
        %631 = vst.msk [vmem:[%s602 + $0xe0] sm:$0xff] %vm441, %v563
        %632 = vst.msk [vmem:[%s602 + $0xe8] sm:$0xff] %vm441, %v565
        %633 = vst.msk [vmem:[%s602 + $0xf0] sm:$0xff] %vm441, %v567
        %634 = vst.msk [vmem:[%s602 + $0xf8] sm:$0xff] %vm441, %v569
        %635 = vrot.lane.b32.xlu0 %v409, 96
        %v636 = vpop.permute.xlu0 %635
        %637 = vrot.lane.b32.xlu0 %v410, 96
        %v638 = vpop.permute.xlu0 %637
        %639 = vrot.lane.b32.xlu0 %v411, 96
        %v640 = vpop.permute.xlu0 %639
        %641 = vrot.lane.b32.xlu0 %v412, 96
        %v642 = vpop.permute.xlu0 %641
        %643 = vrot.lane.b32.xlu0 %v413, 96
        %v644 = vpop.permute.xlu0 %643
        %645 = vrot.lane.b32.xlu0 %v414, 96
        %v646 = vpop.permute.xlu0 %645
        %647 = vrot.lane.b32.xlu0 %v415, 96
        %v648 = vpop.permute.xlu0 %647
        %649 = vrot.lane.b32.xlu0 %v416, 96
        %v650 = vpop.permute.xlu0 %649
        %651 = vrot.lane.b32.xlu0 %v417, 96
        %v652 = vpop.permute.xlu0 %651
        %653 = vrot.lane.b32.xlu0 %v418, 96
        %v654 = vpop.permute.xlu0 %653
        %655 = vrot.lane.b32.xlu0 %v419, 96
        %v656 = vpop.permute.xlu0 %655
        %657 = vrot.lane.b32.xlu0 %v420, 96
        %v658 = vpop.permute.xlu0 %657
        %659 = vrot.lane.b32.xlu0 %v421, 96
        %v660 = vpop.permute.xlu0 %659
        %661 = vrot.lane.b32.xlu0 %v422, 96
        %v662 = vpop.permute.xlu0 %661
        %663 = vrot.lane.b32.xlu0 %v423, 96
        %v664 = vpop.permute.xlu0 %663
        %665 = vrot.lane.b32.xlu0 %v424, 96
        %v666 = vpop.permute.xlu0 %665
        %667 = vrot.lane.b32.xlu0 %v425, 96
        %v668 = vpop.permute.xlu0 %667
        %669 = vrot.lane.b32.xlu0 %v426, 96
        %v670 = vpop.permute.xlu0 %669
        %671 = vrot.lane.b32.xlu0 %v427, 96
        %v672 = vpop.permute.xlu0 %671
        %673 = vrot.lane.b32.xlu0 %v428, 96
        %v674 = vpop.permute.xlu0 %673
        %675 = vrot.lane.b32.xlu0 %v429, 96
        %v676 = vpop.permute.xlu0 %675
        %677 = vrot.lane.b32.xlu0 %v430, 96
        %v678 = vpop.permute.xlu0 %677
        %679 = vrot.lane.b32.xlu0 %v431, 96
        %v680 = vpop.permute.xlu0 %679
        %681 = vrot.lane.b32.xlu0 %v432, 96
        %v682 = vpop.permute.xlu0 %681
        %683 = vrot.lane.b32.xlu0 %v433, 96
        %v684 = vpop.permute.xlu0 %683
        %685 = vrot.lane.b32.xlu0 %v434, 96
        %v686 = vpop.permute.xlu0 %685
        %687 = vrot.lane.b32.xlu0 %v435, 96
        %v688 = vpop.permute.xlu0 %687
        %689 = vrot.lane.b32.xlu0 %v436, 96
        %v690 = vpop.permute.xlu0 %689
        %691 = vrot.lane.b32.xlu0 %v437, 96
        %v692 = vpop.permute.xlu0 %691
        %693 = vrot.lane.b32.xlu0 %v438, 96
        %v694 = vpop.permute.xlu0 %693
        %695 = vrot.lane.b32.xlu0 %v439, 96
        %v696 = vpop.permute.xlu0 %695
        %697 = vrot.lane.b32.xlu0 %v440, 96
        %v698 = vpop.permute.xlu0 %697
        %s731 = scalar_lea.vmem %s190, 512 [#allocation2]
        %732 = vst.msk [vmem:[%s731] sm:$0xff] %vm441, %v636
        %733 = vst.msk [vmem:[%s731 + $0x8] sm:$0xff] %vm441, %v638
        %734 = vst.msk [vmem:[%s731 + $0x10] sm:$0xff] %vm441, %v640
        %735 = vst.msk [vmem:[%s731 + $0x18] sm:$0xff] %vm441, %v642
        %736 = vst.msk [vmem:[%s731 + $0x20] sm:$0xff] %vm441, %v644
        %737 = vst.msk [vmem:[%s731 + $0x28] sm:$0xff] %vm441, %v646
        %738 = vst.msk [vmem:[%s731 + $0x30] sm:$0xff] %vm441, %v648
        %739 = vst.msk [vmem:[%s731 + $0x38] sm:$0xff] %vm441, %v650
        %740 = vst.msk [vmem:[%s731 + $0x40] sm:$0xff] %vm441, %v652
        %741 = vst.msk [vmem:[%s731 + $0x48] sm:$0xff] %vm441, %v654
        %742 = vst.msk [vmem:[%s731 + $0x50] sm:$0xff] %vm441, %v656
        %743 = vst.msk [vmem:[%s731 + $0x58] sm:$0xff] %vm441, %v658
        %744 = vst.msk [vmem:[%s731 + $0x60] sm:$0xff] %vm441, %v660
        %745 = vst.msk [vmem:[%s731 + $0x68] sm:$0xff] %vm441, %v662
        %746 = vst.msk [vmem:[%s731 + $0x70] sm:$0xff] %vm441, %v664
        %747 = vst.msk [vmem:[%s731 + $0x78] sm:$0xff] %vm441, %v666
        %748 = vst.msk [vmem:[%s731 + $0x80] sm:$0xff] %vm441, %v668
        %749 = vst.msk [vmem:[%s731 + $0x88] sm:$0xff] %vm441, %v670
        %750 = vst.msk [vmem:[%s731 + $0x90] sm:$0xff] %vm441, %v672
        %751 = vst.msk [vmem:[%s731 + $0x98] sm:$0xff] %vm441, %v674
        %752 = vst.msk [vmem:[%s731 + $0xa0] sm:$0xff] %vm441, %v676
        %753 = vst.msk [vmem:[%s731 + $0xa8] sm:$0xff] %vm441, %v678
        %754 = vst.msk [vmem:[%s731 + $0xb0] sm:$0xff] %vm441, %v680
        %755 = vst.msk [vmem:[%s731 + $0xb8] sm:$0xff] %vm441, %v682
        %756 = vst.msk [vmem:[%s731 + $0xc0] sm:$0xff] %vm441, %v684
        %757 = vst.msk [vmem:[%s731 + $0xc8] sm:$0xff] %vm441, %v686
        %758 = vst.msk [vmem:[%s731 + $0xd0] sm:$0xff] %vm441, %v688
        %759 = vst.msk [vmem:[%s731 + $0xd8] sm:$0xff] %vm441, %v690
        %760 = vst.msk [vmem:[%s731 + $0xe0] sm:$0xff] %vm441, %v692
        %761 = vst.msk [vmem:[%s731 + $0xe8] sm:$0xff] %vm441, %v694
        %762 = vst.msk [vmem:[%s731 + $0xf0] sm:$0xff] %vm441, %v696
        %763 = vst.msk [vmem:[%s731 + $0xf8] sm:$0xff] %vm441, %v698
        %764 = vrot.lane.b32.xlu0 %v409, 80
        %v765 = vpop.permute.xlu0 %764
        %766 = vrot.lane.b32.xlu0 %v410, 80
        %v767 = vpop.permute.xlu0 %766
        %768 = vrot.lane.b32.xlu0 %v411, 80
        %v769 = vpop.permute.xlu0 %768
        %770 = vrot.lane.b32.xlu0 %v412, 80
        %v771 = vpop.permute.xlu0 %770
        %772 = vrot.lane.b32.xlu0 %v413, 80
        %v773 = vpop.permute.xlu0 %772
        %774 = vrot.lane.b32.xlu0 %v414, 80
        %v775 = vpop.permute.xlu0 %774
        %776 = vrot.lane.b32.xlu0 %v415, 80
        %v777 = vpop.permute.xlu0 %776
        %778 = vrot.lane.b32.xlu0 %v416, 80
        %v779 = vpop.permute.xlu0 %778
        %780 = vrot.lane.b32.xlu0 %v417, 80
        %v781 = vpop.permute.xlu0 %780
        %782 = vrot.lane.b32.xlu0 %v418, 80
        %v783 = vpop.permute.xlu0 %782
        %784 = vrot.lane.b32.xlu0 %v419, 80
        %v785 = vpop.permute.xlu0 %784
        %786 = vrot.lane.b32.xlu0 %v420, 80
        %v787 = vpop.permute.xlu0 %786
        %788 = vrot.lane.b32.xlu0 %v421, 80
        %v789 = vpop.permute.xlu0 %788
        %790 = vrot.lane.b32.xlu0 %v422, 80
        %v791 = vpop.permute.xlu0 %790
        %792 = vrot.lane.b32.xlu0 %v423, 80
        %v793 = vpop.permute.xlu0 %792
        %794 = vrot.lane.b32.xlu0 %v424, 80
        %v795 = vpop.permute.xlu0 %794
        %796 = vrot.lane.b32.xlu0 %v425, 80
        %v797 = vpop.permute.xlu0 %796
        %798 = vrot.lane.b32.xlu0 %v426, 80
        %v799 = vpop.permute.xlu0 %798
        %800 = vrot.lane.b32.xlu0 %v427, 80
        %v801 = vpop.permute.xlu0 %800
        %802 = vrot.lane.b32.xlu0 %v428, 80
        %v803 = vpop.permute.xlu0 %802
        %804 = vrot.lane.b32.xlu0 %v429, 80
        %v805 = vpop.permute.xlu0 %804
        %806 = vrot.lane.b32.xlu0 %v430, 80
        %v807 = vpop.permute.xlu0 %806
        %808 = vrot.lane.b32.xlu0 %v431, 80
        %v809 = vpop.permute.xlu0 %808
        %810 = vrot.lane.b32.xlu0 %v432, 80
        %v811 = vpop.permute.xlu0 %810
        %812 = vrot.lane.b32.xlu0 %v433, 80
        %v813 = vpop.permute.xlu0 %812
        %814 = vrot.lane.b32.xlu0 %v434, 80
        %v815 = vpop.permute.xlu0 %814
        %816 = vrot.lane.b32.xlu0 %v435, 80
        %v817 = vpop.permute.xlu0 %816
        %818 = vrot.lane.b32.xlu0 %v436, 80
        %v819 = vpop.permute.xlu0 %818
        %820 = vrot.lane.b32.xlu0 %v437, 80
        %v821 = vpop.permute.xlu0 %820
        %822 = vrot.lane.b32.xlu0 %v438, 80
        %v823 = vpop.permute.xlu0 %822
        %824 = vrot.lane.b32.xlu0 %v439, 80
        %v825 = vpop.permute.xlu0 %824
        %826 = vrot.lane.b32.xlu0 %v440, 80
        %v827 = vpop.permute.xlu0 %826
        %s860 = scalar_lea.vmem %s190, 768 [#allocation2]
        %861 = vst.msk [vmem:[%s860] sm:$0xff] %vm441, %v765
        %862 = vst.msk [vmem:[%s860 + $0x8] sm:$0xff] %vm441, %v767
        %863 = vst.msk [vmem:[%s860 + $0x10] sm:$0xff] %vm441, %v769
        %864 = vst.msk [vmem:[%s860 + $0x18] sm:$0xff] %vm441, %v771
        %865 = vst.msk [vmem:[%s860 + $0x20] sm:$0xff] %vm441, %v773
        %866 = vst.msk [vmem:[%s860 + $0x28] sm:$0xff] %vm441, %v775
        %867 = vst.msk [vmem:[%s860 + $0x30] sm:$0xff] %vm441, %v777
        %868 = vst.msk [vmem:[%s860 + $0x38] sm:$0xff] %vm441, %v779
        %869 = vst.msk [vmem:[%s860 + $0x40] sm:$0xff] %vm441, %v781
        %870 = vst.msk [vmem:[%s860 + $0x48] sm:$0xff] %vm441, %v783
        %871 = vst.msk [vmem:[%s860 + $0x50] sm:$0xff] %vm441, %v785
        %872 = vst.msk [vmem:[%s860 + $0x58] sm:$0xff] %vm441, %v787
        %873 = vst.msk [vmem:[%s860 + $0x60] sm:$0xff] %vm441, %v789
        %874 = vst.msk [vmem:[%s860 + $0x68] sm:$0xff] %vm441, %v791
        %875 = vst.msk [vmem:[%s860 + $0x70] sm:$0xff] %vm441, %v793
        %876 = vst.msk [vmem:[%s860 + $0x78] sm:$0xff] %vm441, %v795
        %877 = vst.msk [vmem:[%s860 + $0x80] sm:$0xff] %vm441, %v797
        %878 = vst.msk [vmem:[%s860 + $0x88] sm:$0xff] %vm441, %v799
        %879 = vst.msk [vmem:[%s860 + $0x90] sm:$0xff] %vm441, %v801
        %880 = vst.msk [vmem:[%s860 + $0x98] sm:$0xff] %vm441, %v803
        %881 = vst.msk [vmem:[%s860 + $0xa0] sm:$0xff] %vm441, %v805
        %882 = vst.msk [vmem:[%s860 + $0xa8] sm:$0xff] %vm441, %v807
        %883 = vst.msk [vmem:[%s860 + $0xb0] sm:$0xff] %vm441, %v809
        %884 = vst.msk [vmem:[%s860 + $0xb8] sm:$0xff] %vm441, %v811
        %885 = vst.msk [vmem:[%s860 + $0xc0] sm:$0xff] %vm441, %v813
        %886 = vst.msk [vmem:[%s860 + $0xc8] sm:$0xff] %vm441, %v815
        %887 = vst.msk [vmem:[%s860 + $0xd0] sm:$0xff] %vm441, %v817
        %888 = vst.msk [vmem:[%s860 + $0xd8] sm:$0xff] %vm441, %v819
        %889 = vst.msk [vmem:[%s860 + $0xe0] sm:$0xff] %vm441, %v821
        %890 = vst.msk [vmem:[%s860 + $0xe8] sm:$0xff] %vm441, %v823
        %891 = vst.msk [vmem:[%s860 + $0xf0] sm:$0xff] %vm441, %v825
        %892 = vst.msk [vmem:[%s860 + $0xf8] sm:$0xff] %vm441, %v827
        %s893 = sand.u32 %s115, 1
        %s894 = scalar_lea.sflag [#allocation3], %s893
        %s895 = sand.u32 %s115, 1
        %s896 = smul.addr %s895, 1024
        %s897 = scalar_lea.vmem [#allocation2], %s896
        // Predicated region
        $region37: #{single_layer_forward.3} parent=35 // pred_check
          %p898 = pneg %p125
        $region38: #{single_layer_forward.3} parent=35 // pred_check_branch
          %900 = sbr.rel (%p898) target = $region40
        $region39: #{single_layer_forward.3} parent=35 // pred_region
          %s902 = ssub.s32 16384, 16384
          %903 = vsyncadd %s894, %s902
          %s904 = smul.addr %s18, 128
          %s905 = smul.addr %s904, 128
          %s906 = scalar_lea.hbm %s4, %s905
          %s907 = sshll.u32 %s897, 4
          %s908 = int_to_ptr.vmem [resolvable:$true] %s907
          %913 = dma.vmem_to_hbm [thread:$0]  %s908, 16384, %s906, %s894, 128, 128, 8
        $region40: #{single_layer_forward.3} parent=35 // pred_fallthru
          _
      $region36: #{single_layer_forward.3} parent=5 // pred_fallthru
        _
      %p914 = scmp.le.s32.totalorder 2, %s13
      // Predicated region
      $region41: #{single_layer_forward.3} parent=5 // pred_check
        %p915 = pneg %p914
      $region42: #{single_layer_forward.3} parent=5 // pred_check_branch
        %917 = sbr.rel (%p915) target = $region44
      $region43: #{single_layer_forward.3} parent=5 // pred_region
        %s918 = ssub.s32 %s13, 2
        // Predicated region
        $region45: #{single_layer_forward.3} parent=43 // pred_check
          %p919 = pneg %p131
        $region46: #{single_layer_forward.3} parent=43 // pred_check_branch
          %921 = sbr.rel (%p919) target = $region48
        $region47: #{single_layer_forward.3} parent=43 // pred_region
          %s922 = sand.u32 %s116, 1
          %s923 = scalar_lea.sflag [#allocation3], %s922
          %s924 = sand.u32 %s116, 1
          %s925 = smul.addr %s924, 1024
          %s926 = scalar_lea.vmem [#allocation2], %s925
          %927 = dma.done %s923, 16384
        $region48: #{single_layer_forward.3} parent=43 // pred_fallthru
          _
      $region44: #{single_layer_forward.3} parent=5 // pred_fallthru
        _
    $region6: #{single_layer_forward.3} parent=1 // loop_footer
      %s17 = sadd.s32 1, %s13
    $region7: #{single_layer_forward.3} parent=1 // loop_footer_branch
      %12 = sbr.rel target = $region3
    $region8: #{single_layer_forward.3} parent=1 // loop_exit
      _
    %928 = vsyncpa [#allocation3], 1
    %s929 = scalar_lea.sflag [#allocation3], 1
    %930 = vsyncpa %s929, 1

// kernel: single_layer_forward.2
$region0: #{single_layer_forward.2}
  #allocation0 [shape = 'u32[]', space=smem, size = 0x4, offset = 0x4, fixed_abs, tag = 'smem constant byte address 0x4 - core index']
  #allocation1 [shape = 'u32[144,128]{1,0:T(1,128)}', space=vmem, size = 0x12000, scoped, tag = 'internal scratch']
  %s0 = inlined_call_operand.vmem [shape: bf16[2,18,18,72], index: 0, kind: input, shape index: {}]
  %s1 = inlined_call_operand.vmem [shape: bf16[9,72,64], index: 1, kind: input, shape index: {}]
  %s2 = inlined_call_operand.vmem [shape: bf16[2,256,64], index: 2, kind: output, shape index: {0}]
  %s3 = inlined_call_operand.vmem [shape: f32[2,2,64], index: 3, kind: output, shape index: {1}]
  %4 = xla_tuple %s2, %s3
  %s5 = sld [smem:[#allocation0]]
  $region49: #{single_layer_forward.2} parent=0
    _
  %s7 = ssub.s32 1, %s5
  %s8 = scalar_select 0, %s7, %s5
  loop: start=0, step=1, limit=4
  $region2: #{single_layer_forward.2} parent=0 // loop_pre_header
    _
  $region3: #{single_layer_forward.2} parent=0 // loop_header
    %s10 = sphi 0, %s14
    %p11 = scmp.ge.s32.totalorder %s10, 4
    %s20 = sphi 0, %s22
    %s23 = sphi 0, %s20
    %s24 = sphi 0, %s23
    %s40 = sphi 0, %s24
    %s44 = sphi 0, %s44
    %s46 = sphi 0, %s44
    %s47 = sphi 0, %s46
    %s61 = sphi 0, %s47
    %s67 = sphi 0, %s69
    %s70 = sphi 0, %s67
    %s71 = sphi 0, %s70
    %s87 = sphi 0, %s71
    %s93 = sphi 0, %s95
    %s96 = sphi 0, %s93
    %s97 = sphi 0, %s96
    %s113 = sphi 0, %s97
  $region4: #{single_layer_forward.2} parent=0 // loop_header_branch
    %13 = sbr.rel (%p11) target = $region8
  $region5: #{single_layer_forward.2} parent=0 // loop_body
    %s15 = ssub.s32 %s10, 1
    %s16 = ssub.s32 %s10, 2
    %s17 = sadd.s32 %s10, 1
    %s18 = ssub.s32 %s10, %s17
    %p19 = scmp.eq.s32.totalorder %s18, 0
    %s21 = sadd.s32 %s20, 1
    %s22 = scalar_select %p19, %s20, %s21
    %p25 = pneg %p19
    %p26 = scmp.eq.s32.totalorder %s10, 1
    %p27 = por %p25, %p26
    %p28 = scmp.ne.s32.totalorder %s20, %s23
    %p29 = scmp.eq.s32.totalorder %s10, 0
    %p30 = por %p28, %p29
    %p31 = scmp.ne.s32.totalorder %s20, %s23
    %p32 = scmp.eq.s32.totalorder %s15, 1
    %p33 = por %p31, %p32
    %p34 = scmp.ne.s32.totalorder %s23, %s24
    %p35 = scmp.eq.s32.totalorder %s15, 0
    %p36 = por %p34, %p35
    %p37 = scmp.ne.s32.totalorder %s23, %s24
    %p38 = scmp.eq.s32.totalorder %s16, 1
    %p39 = por %p37, %p38
    %p41 = scmp.ne.s32.totalorder %s24, %s40
    %p42 = scmp.eq.s32.totalorder %s16, 0
    %p43 = por %p41, %p42
    %s45 = sadd.s32 %s44, 1
    %p48 = scmp.eq.s32.totalorder %s10, 1
    %p49 = scmp.ne.s32.totalorder %s44, %s46
    %p50 = scmp.eq.s32.totalorder %s10, 0
    %p51 = por %p49, %p50
    %p52 = scmp.ne.s32.totalorder %s44, %s46
    %p53 = scmp.eq.s32.totalorder %s15, 1
    %p54 = por %p52, %p53
    %p55 = scmp.ne.s32.totalorder %s46, %s47
    %p56 = scmp.eq.s32.totalorder %s15, 0
    %p57 = por %p55, %p56
    %p58 = scmp.ne.s32.totalorder %s46, %s47
    %p59 = scmp.eq.s32.totalorder %s16, 1
    %p60 = por %p58, %p59
    %p62 = scmp.ne.s32.totalorder %s47, %s61
    %p63 = scmp.eq.s32.totalorder %s16, 0
    %p64 = por %p62, %p63
    %s65 = ssub.s32 %s10, %s17
    %p66 = scmp.eq.s32.totalorder %s65, 0
    %s68 = sadd.s32 %s67, 1
    %s69 = scalar_select %p66, %s67, %s68
    %p72 = pneg %p66
    %p73 = scmp.eq.s32.totalorder %s10, 1
    %p74 = por %p72, %p73
    %p75 = scmp.ne.s32.totalorder %s67, %s70
    %p76 = scmp.eq.s32.totalorder %s10, 0
    %p77 = por %p75, %p76
    %p78 = scmp.ne.s32.totalorder %s67, %s70
    %p79 = scmp.eq.s32.totalorder %s15, 1
    %p80 = por %p78, %p79
    %p81 = scmp.ne.s32.totalorder %s70, %s71
    %p82 = scmp.eq.s32.totalorder %s15, 0
    %p83 = por %p81, %p82
    %p84 = scmp.ne.s32.totalorder %s70, %s71
    %p85 = scmp.eq.s32.totalorder %s16, 1
    %p86 = por %p84, %p85
    %p88 = scmp.ne.s32.totalorder %s71, %s87
    %p89 = scmp.eq.s32.totalorder %s16, 0
    %p90 = por %p88, %p89
    %s91 = ssub.s32 %s10, %s17
    %p92 = scmp.eq.s32.totalorder %s91, 0
    %s94 = sadd.s32 %s93, 1
    %s95 = scalar_select %p92, %s93, %s94
    %p98 = pneg %p92
    %p99 = scmp.eq.s32.totalorder %s10, 1
    %p100 = por %p98, %p99
    %p101 = scmp.ne.s32.totalorder %s93, %s96
    %p102 = scmp.eq.s32.totalorder %s10, 0
    %p103 = por %p101, %p102
    %p104 = scmp.ne.s32.totalorder %s93, %s96
    %p105 = scmp.eq.s32.totalorder %s15, 1
    %p106 = por %p104, %p105
    %p107 = scmp.ne.s32.totalorder %s96, %s97
    %p108 = scmp.eq.s32.totalorder %s15, 0
    %p109 = por %p107, %p108
    %p110 = scmp.ne.s32.totalorder %s96, %s97
    %p111 = scmp.eq.s32.totalorder %s16, 1
    %p112 = por %p110, %p111
    %p114 = scmp.ne.s32.totalorder %s97, %s113
    %p115 = scmp.eq.s32.totalorder %s16, 0
    %p116 = por %p114, %p115
    %p117 = scmp.le.s32.totalorder 1, %s10
    %p118 = scmp.lt.s32.totalorder %s10, 3
    %p119 = pnand %p117, %p118
    %p120 = pneg %p119
    // Predicated region
    $region9: #{single_layer_forward.2} parent=5 // pred_check
      _
    $region10: #{single_layer_forward.2} parent=5 // pred_check_branch
      %122 = sbr.rel (%p119) target = $region12
    $region11: #{single_layer_forward.2} parent=5 // pred_region
      %s123 = ssub.s32 %s10, 1
      // Predicated region
      $region13: #{single_layer_forward.2} parent=11 // pred_check
        %p124 = pneg %p57
      $region14: #{single_layer_forward.2} parent=11 // pred_check_branch
        %126 = sbr.rel (%p124) target = $region16
      $region15: #{single_layer_forward.2} parent=11 // pred_region
        _
      $region16: #{single_layer_forward.2} parent=11 // pred_fallthru
        _
    $region12: #{single_layer_forward.2} parent=5 // pred_fallthru
      _
    %p127 = scmp.lt.s32.totalorder %s10, 2
    // Predicated region
    $region17: #{single_layer_forward.2} parent=5 // pred_check
      %p128 = pneg %p127
    $region18: #{single_layer_forward.2} parent=5 // pred_check_branch
      %130 = sbr.rel (%p128) target = $region20
    $region19: #{single_layer_forward.2} parent=5 // pred_region
      // Predicated region
      $region21: #{single_layer_forward.2} parent=19 // pred_check
        %p131 = pneg %p30
      $region22: #{single_layer_forward.2} parent=19 // pred_check_branch
        %133 = sbr.rel (%p131) target = $region24
      $region23: #{single_layer_forward.2} parent=19 // pred_region
        %p134 = scmp.lt.s32.totalorder %s10, 1
        %s135 = scalar_select %p134, %s10, 1
        %s136 = smul.addr %s135, 54
        %s137 = smul.addr %s136, 4
        %s138 = scalar_lea.vmem %s0, %s137
      $region24: #{single_layer_forward.2} parent=19 // pred_fallthru
        _
    $region20: #{single_layer_forward.2} parent=5 // pred_fallthru
      _
    %p139 = scmp.le.s32.totalorder 1, %s10
    %p140 = scmp.lt.s32.totalorder %s10, 3
    %p141 = pnand %p139, %p140
    %p142 = pneg %p141
    // Predicated region
    $region25: #{single_layer_forward.2} parent=5 // pred_check
      _
    $region26: #{single_layer_forward.2} parent=5 // pred_check_branch
      %144 = sbr.rel (%p141) target = $region28
    $region27: #{single_layer_forward.2} parent=5 // pred_region
      %s145 = ssub.s32 %s10, 1
      %p146 = scmp.lt.s32.totalorder %s15, 1
      %s147 = scalar_select %p146, %s15, 1
      %s148 = smul.addr %s147, 54
      %s149 = smul.addr %s148, 4
      %s150 = scalar_lea.vmem %s0, %s149
      %p151 = pneg %p36
      %p152 = pneg %p33
      %p153 = pneg %p57
      %p154 = pneg %p54
      %p155 = pneg %p83
      %p156 = pneg %p80
      %p157 = scmp.lt.s32.totalorder %s15, 1
      %s158 = scalar_select %p157, %s15, 1
      %s159 = smul.addr %s158, 32
      %s160 = smul.addr %s159, 4
      %s161 = scalar_lea.vmem %s2, %s160
      %p162 = pneg %p109
      %p163 = pneg %p106
      %p164 = scmp.lt.s32.totalorder %s15, 1
      %s165 = scalar_select %p164, %s15, 1
      %s166 = smul.addr %s165, 2
      %s167 = scalar_lea.vmem %s3, %s166
      %p168 = scmp.lt.s32.totalorder %s15, 1
      %s169 = scalar_select %p168, %s15, 1
      %s170 = smul.addr %s169, 54
      %s171 = smul.addr %s170, 4
      %s172 = scalar_lea.vmem %s0, %s171
      %p173 = scmp.lt.s32.totalorder %s15, 1
      %s174 = scalar_select %p173, %s15, 1
      %s175 = smul.addr %s174, 32
      %s176 = smul.addr %s175, 4
      %s177 = scalar_lea.vmem %s2, %s176
      %p178 = scmp.lt.s32.totalorder %s15, 1
      %s179 = scalar_select %p178, %s15, 1
      %s180 = smul.addr %s179, 2
      %s181 = scalar_lea.vmem %s3, %s180
      %v183 = vld [vmem:[%s172] sm:$0xf]
      %v184 = vld [vmem:[%s172 + $0x4] sm:$0xf]
      %v185 = vld [vmem:[%s172 + $0xc] sm:$0xf]
      %v186 = vld [vmem:[%s172 + $0x10] sm:$0xf]
      %v187 = vld [vmem:[%s172 + $0x18] sm:$0xf]
      %v188 = vld [vmem:[%s172 + $0x1c] sm:$0xf]
      %v189 = vld [vmem:[%s172 + $0x24] sm:$0xf]
      %v190 = vld [vmem:[%s172 + $0x28] sm:$0xf]
      %v191 = vld [vmem:[%s172 + $0x30] sm:$0xf]
      %v192 = vld [vmem:[%s172 + $0x34] sm:$0xf]
      %v193 = vld [vmem:[%s172 + $0x3c] sm:$0xf]
      %v194 = vld [vmem:[%s172 + $0x40] sm:$0xf]
      %v195 = vld [vmem:[%s172 + $0x48] sm:$0xf]
      %v196 = vld [vmem:[%s172 + $0x4c] sm:$0xf]
      %v197 = vld [vmem:[%s172 + $0x54] sm:$0xf]
      %v198 = vld [vmem:[%s172 + $0x58] sm:$0xf]
      %v199 = vld [vmem:[%s172 + $0x60] sm:$0xf]
      %v200 = vld [vmem:[%s172 + $0x64] sm:$0xf]
      %v201 = vld [vmem:[%s172 + $0x6c] sm:$0xf]
      %v202 = vld [vmem:[%s172 + $0x70] sm:$0xf]
      %v203 = vld [vmem:[%s172 + $0x78] sm:$0xf]
      %v204 = vld [vmem:[%s172 + $0x7c] sm:$0xf]
      %v205 = vld [vmem:[%s172 + $0x84] sm:$0xf]
      %v206 = vld [vmem:[%s172 + $0x88] sm:$0xf]
      %v207 = vld [vmem:[%s172 + $0x90] sm:$0xf]
      %v208 = vld [vmem:[%s172 + $0x94] sm:$0xf]
      %v209 = vld [vmem:[%s172 + $0x9c] sm:$0xf]
      %v210 = vld [vmem:[%s172 + $0xa0] sm:$0xf]
      %v211 = vld [vmem:[%s172 + $0xa8] sm:$0xf]
      %v212 = vld [vmem:[%s172 + $0xac] sm:$0xf]
      %v213 = vld [vmem:[%s172 + $0xb4] sm:$0xf]
      %v214 = vld [vmem:[%s172 + $0xb8] sm:$0xf]
      %v215 = vld [vmem:[%s1] sm:$0xf]
      %v216 = vld [vmem:[%s1 + $0x4] sm:$0xf]
      %v217 = vld [vmem:[%s1 + $0x8] sm:$0xf]
      %v218 = vld [vmem:[%s1 + $0xc] sm:$0xf]
      %v219 = vld [vmem:[%s1 + $0x10] sm:$0xf]
      %v220 = vld [vmem:[%s1 + $0x14] sm:$0xf]
      %v221 = vld [vmem:[%s1 + $0x18] sm:$0xf]
      %v222 = vld [vmem:[%s1 + $0x1c] sm:$0xf]
      %v223 = vld [vmem:[%s1 + $0x20] sm:$0xf]
      %v224 = vld [vmem:[%s172 + $0x8] sm:$0x1]
      %v225 = vld [vmem:[%s172 + $0x14] sm:$0x1]
      %v226 = vld [vmem:[%s172 + $0x20] sm:$0x1]
      %v227 = vld [vmem:[%s172 + $0x2c] sm:$0x1]
      %v228 = vld [vmem:[%s172 + $0x38] sm:$0x1]
      %v229 = vld [vmem:[%s172 + $0x44] sm:$0x1]
      %v230 = vld [vmem:[%s172 + $0x50] sm:$0x1]
      %v231 = vld [vmem:[%s172 + $0x5c] sm:$0x1]
      %v232 = vld [vmem:[%s172 + $0x68] sm:$0x1]
      %v233 = vld [vmem:[%s172 + $0x74] sm:$0x1]
      %v234 = vld [vmem:[%s172 + $0x80] sm:$0x1]
      %v235 = vld [vmem:[%s172 + $0x8c] sm:$0x1]
      %v236 = vld [vmem:[%s172 + $0x98] sm:$0x1]
      %v237 = vld [vmem:[%s172 + $0xa4] sm:$0x1]
      %v238 = vld [vmem:[%s172 + $0xb0] sm:$0x1]
      %v239 = vld [vmem:[%s172 + $0xbc] sm:$0x1]
      %vm240 = vsmask.f32 3328
      %vm241 = vsmask.f32 7440
      %vm242 = vmor %vm240, %vm241
      %v244 = vshrl.u32 %v183, 16
      %v246 = vrot.slane %v244, 4
      %v247 = vshll.u32 %v183, 16
      %v249 = vrot.slane %v247, 5
      %v250 = vor.u32 %v246, %v249
      %v251 = vrot.slane %v250, 4
      %v253 = vshll.u32 %v184, 16
      %v255 = vrot.slane %v253, 5
      %v256 = vsel %vm242, %v251, %v255
      %v257 = vshrl.u32 %v184, 16
      %v259 = vrot.slane %v257, 4
      %v260 = vor.u32 %v259, %v255
      %v261 = vrot.slane %v260, 4
      %v263 = vshll.u32 %v224, 16
      %v265 = vrot.slane %v263, 5
      %v266 = vsel %vm242, %v261, %v265
      %v268 = vshrl.u32 %v185, 16
      %v270 = vrot.slane %v268, 4
      %v271 = vshll.u32 %v185, 16
      %v273 = vrot.slane %v271, 5
      %v274 = vor.u32 %v270, %v273
      %v275 = vrot.slane %v274, 4
      %v277 = vshll.u32 %v186, 16
      %v279 = vrot.slane %v277, 5
      %v280 = vsel %vm242, %v275, %v279
      %v281 = vshrl.u32 %v186, 16
      %v283 = vrot.slane %v281, 4
      %v284 = vor.u32 %v283, %v279
      %v285 = vrot.slane %v284, 4
      %v287 = vshll.u32 %v225, 16
      %v289 = vrot.slane %v287, 5
      %v290 = vsel %vm242, %v285, %v289
      %v292 = vshrl.u32 %v187, 16
      %v294 = vrot.slane %v292, 4
      %v295 = vshll.u32 %v187, 16
      %v297 = vrot.slane %v295, 5
      %v298 = vor.u32 %v294, %v297
      %v299 = vrot.slane %v298, 4
      %v301 = vshll.u32 %v188, 16
      %v303 = vrot.slane %v301, 5
      %v304 = vsel %vm242, %v299, %v303
      %v305 = vshrl.u32 %v188, 16
      %v307 = vrot.slane %v305, 4
      %v308 = vor.u32 %v307, %v303
      %v309 = vrot.slane %v308, 4
      %v311 = vshll.u32 %v226, 16
      %v313 = vrot.slane %v311, 5
      %v314 = vsel %vm242, %v309, %v313
      %v316 = vshrl.u32 %v189, 16
      %v318 = vrot.slane %v316, 4
      %v319 = vshll.u32 %v189, 16
      %v321 = vrot.slane %v319, 5
      %v322 = vor.u32 %v318, %v321
      %v323 = vrot.slane %v322, 4
      %v325 = vshll.u32 %v190, 16
      %v327 = vrot.slane %v325, 5
      %v328 = vsel %vm242, %v323, %v327
      %v329 = vshrl.u32 %v190, 16
      %v331 = vrot.slane %v329, 4
      %v332 = vor.u32 %v331, %v327
      %v333 = vrot.slane %v332, 4
      %v335 = vshll.u32 %v227, 16
      %v337 = vrot.slane %v335, 5
      %v338 = vsel %vm242, %v333, %v337
      %v340 = vshrl.u32 %v191, 16
      %v342 = vrot.slane %v340, 4
      %v343 = vshll.u32 %v191, 16
      %v345 = vrot.slane %v343, 5
      %v346 = vor.u32 %v342, %v345
      %v347 = vrot.slane %v346, 4
      %v349 = vshll.u32 %v192, 16
      %v351 = vrot.slane %v349, 5
      %v352 = vsel %vm242, %v347, %v351
      %v353 = vshrl.u32 %v192, 16
      %v355 = vrot.slane %v353, 4
      %v356 = vor.u32 %v355, %v351
      %v357 = vrot.slane %v356, 4
      %v359 = vshll.u32 %v228, 16
      %v361 = vrot.slane %v359, 5
      %v362 = vsel %vm242, %v357, %v361
      %v364 = vshrl.u32 %v193, 16
      %v366 = vrot.slane %v364, 4
      %v367 = vshll.u32 %v193, 16
      %v369 = vrot.slane %v367, 5
      %v370 = vor.u32 %v366, %v369
      %v371 = vrot.slane %v370, 4
      %v373 = vshll.u32 %v194, 16
      %v375 = vrot.slane %v373, 5
      %v376 = vsel %vm242, %v371, %v375
      %v377 = vshrl.u32 %v194, 16
      %v379 = vrot.slane %v377, 4
      %v380 = vor.u32 %v379, %v375
      %v381 = vrot.slane %v380, 4
      %v383 = vshll.u32 %v229, 16
      %v385 = vrot.slane %v383, 5
      %v386 = vsel %vm242, %v381, %v385
      %v388 = vshrl.u32 %v195, 16
      %v390 = vrot.slane %v388, 4
      %v391 = vshll.u32 %v195, 16
      %v393 = vrot.slane %v391, 5
      %v394 = vor.u32 %v390, %v393
      %v395 = vrot.slane %v394, 4
      %v397 = vshll.u32 %v196, 16
      %v399 = vrot.slane %v397, 5
      %v400 = vsel %vm242, %v395, %v399
      %v401 = vshrl.u32 %v196, 16
      %v403 = vrot.slane %v401, 4
      %v404 = vor.u32 %v403, %v399
      %v405 = vrot.slane %v404, 4
      %v407 = vshll.u32 %v230, 16
      %v409 = vrot.slane %v407, 5
      %v410 = vsel %vm242, %v405, %v409
      %v412 = vshrl.u32 %v197, 16
      %v414 = vrot.slane %v412, 4
      %v415 = vshll.u32 %v197, 16
      %v417 = vrot.slane %v415, 5
      %v418 = vor.u32 %v414, %v417
      %v419 = vrot.slane %v418, 4
      %v421 = vshll.u32 %v198, 16
      %v423 = vrot.slane %v421, 5
      %v424 = vsel %vm242, %v419, %v423
      %v425 = vshrl.u32 %v198, 16
      %v427 = vrot.slane %v425, 4
      %v428 = vor.u32 %v427, %v423
      %v429 = vrot.slane %v428, 4
      %v431 = vshll.u32 %v231, 16
      %v433 = vrot.slane %v431, 5
      %v434 = vsel %vm242, %v429, %v433
      %v436 = vshrl.u32 %v199, 16
      %v438 = vrot.slane %v436, 4
      %v439 = vshll.u32 %v199, 16
      %v441 = vrot.slane %v439, 5
      %v442 = vor.u32 %v438, %v441
      %v443 = vrot.slane %v442, 4
      %v445 = vshll.u32 %v200, 16
      %v447 = vrot.slane %v445, 5
      %v448 = vsel %vm242, %v443, %v447
      %v449 = vshrl.u32 %v200, 16
      %v451 = vrot.slane %v449, 4
      %v452 = vor.u32 %v451, %v447
      %v453 = vrot.slane %v452, 4
      %v455 = vshll.u32 %v232, 16
      %v457 = vrot.slane %v455, 5
      %v458 = vsel %vm242, %v453, %v457
      %v460 = vshrl.u32 %v201, 16
      %v462 = vrot.slane %v460, 4
      %v463 = vshll.u32 %v201, 16
      %v465 = vrot.slane %v463, 5
      %v466 = vor.u32 %v462, %v465
      %v467 = vrot.slane %v466, 4
      %v469 = vshll.u32 %v202, 16
      %v471 = vrot.slane %v469, 5
      %v472 = vsel %vm242, %v467, %v471
      %v473 = vshrl.u32 %v202, 16
      %v475 = vrot.slane %v473, 4
      %v476 = vor.u32 %v475, %v471
      %v477 = vrot.slane %v476, 4
      %v479 = vshll.u32 %v233, 16
      %v481 = vrot.slane %v479, 5
      %v482 = vsel %vm242, %v477, %v481
      %v484 = vshrl.u32 %v203, 16
      %v486 = vrot.slane %v484, 4
      %v487 = vshll.u32 %v203, 16
      %v489 = vrot.slane %v487, 5
      %v490 = vor.u32 %v486, %v489
      %v491 = vrot.slane %v490, 4
      %v493 = vshll.u32 %v204, 16
      %v495 = vrot.slane %v493, 5
      %v496 = vsel %vm242, %v491, %v495
      %v497 = vshrl.u32 %v204, 16
      %v499 = vrot.slane %v497, 4
      %v500 = vor.u32 %v499, %v495
      %v501 = vrot.slane %v500, 4
      %v503 = vshll.u32 %v234, 16
      %v505 = vrot.slane %v503, 5
      %v506 = vsel %vm242, %v501, %v505
      %v508 = vshrl.u32 %v205, 16
      %v510 = vrot.slane %v508, 4
      %v511 = vshll.u32 %v205, 16
      %v513 = vrot.slane %v511, 5
      %v514 = vor.u32 %v510, %v513
      %v515 = vrot.slane %v514, 4
      %v517 = vshll.u32 %v206, 16
      %v519 = vrot.slane %v517, 5
      %v520 = vsel %vm242, %v515, %v519
      %v521 = vshrl.u32 %v206, 16
      %v523 = vrot.slane %v521, 4
      %v524 = vor.u32 %v523, %v519
      %v525 = vrot.slane %v524, 4
      %v527 = vshll.u32 %v235, 16
      %v529 = vrot.slane %v527, 5
      %v530 = vsel %vm242, %v525, %v529
      %v532 = vshrl.u32 %v207, 16
      %v534 = vrot.slane %v532, 4
      %v535 = vshll.u32 %v207, 16
      %v537 = vrot.slane %v535, 5
      %v538 = vor.u32 %v534, %v537
      %v539 = vrot.slane %v538, 4
      %v541 = vshll.u32 %v208, 16
      %v543 = vrot.slane %v541, 5
      %v544 = vsel %vm242, %v539, %v543
      %v545 = vshrl.u32 %v208, 16
      %v547 = vrot.slane %v545, 4
      %v548 = vor.u32 %v547, %v543
      %v549 = vrot.slane %v548, 4
      %v551 = vshll.u32 %v236, 16
      %v553 = vrot.slane %v551, 5
      %v554 = vsel %vm242, %v549, %v553
      %v556 = vshrl.u32 %v209, 16
      %v558 = vrot.slane %v556, 4
      %v559 = vshll.u32 %v209, 16
      %v561 = vrot.slane %v559, 5
      %v562 = vor.u32 %v558, %v561
      %v563 = vrot.slane %v562, 4
      %v565 = vshll.u32 %v210, 16
      %v567 = vrot.slane %v565, 5
      %v568 = vsel %vm242, %v563, %v567
      %v569 = vshrl.u32 %v210, 16
      %v571 = vrot.slane %v569, 4
      %v572 = vor.u32 %v571, %v567
      %v573 = vrot.slane %v572, 4
      %v575 = vshll.u32 %v237, 16
      %v577 = vrot.slane %v575, 5
      %v578 = vsel %vm242, %v573, %v577
      %v580 = vshrl.u32 %v211, 16
      %v582 = vrot.slane %v580, 4
      %v583 = vshll.u32 %v211, 16
      %v585 = vrot.slane %v583, 5
      %v586 = vor.u32 %v582, %v585
      %v587 = vrot.slane %v586, 4
      %v589 = vshll.u32 %v212, 16
      %v591 = vrot.slane %v589, 5
      %v592 = vsel %vm242, %v587, %v591
      %v593 = vshrl.u32 %v212, 16
      %v595 = vrot.slane %v593, 4
      %v596 = vor.u32 %v595, %v591
      %v597 = vrot.slane %v596, 4
      %v599 = vshll.u32 %v238, 16
      %v601 = vrot.slane %v599, 5
      %v602 = vsel %vm242, %v597, %v601
      %v604 = vshrl.u32 %v213, 16
      %v606 = vrot.slane %v604, 4
      %v607 = vshll.u32 %v213, 16
      %v609 = vrot.slane %v607, 5
      %v610 = vor.u32 %v606, %v609
      %v611 = vrot.slane %v610, 4
      %v613 = vshll.u32 %v214, 16
      %v615 = vrot.slane %v613, 5
      %v616 = vsel %vm242, %v611, %v615
      %v617 = vshrl.u32 %v214, 16
      %v619 = vrot.slane %v617, 4
      %v620 = vor.u32 %v619, %v615
      %v621 = vrot.slane %v620, 4
      %v623 = vshll.u32 %v239, 16
      %v625 = vrot.slane %v623, 5
      %v626 = vsel %vm242, %v621, %v625
      %s627 = scalar_lea.vmem %s1, 36
      %v628 = vld [vmem:[%s627] sm:$0xf]
      %v629 = vld [vmem:[%s627 + $0x4] sm:$0xf]
      %v630 = vld [vmem:[%s627 + $0x8] sm:$0xf]
      %v631 = vld [vmem:[%s627 + $0xc] sm:$0xf]
      %v632 = vld [vmem:[%s627 + $0x10] sm:$0xf]
      %v633 = vld [vmem:[%s627 + $0x14] sm:$0xf]
      %v634 = vld [vmem:[%s627 + $0x18] sm:$0xf]
      %v635 = vld [vmem:[%s627 + $0x1c] sm:$0xf]
      %v636 = vld [vmem:[%s627 + $0x20] sm:$0xf]
      %v637 = vunpack.c.l.b16 %v256
      %v638 = vunpack.c.l.b16 %v266
      %v639 = vunpack.c.l.b16 %v280
      %v640 = vunpack.c.l.b16 %v290
      %v641 = vunpack.c.l.b16 %v304
      %v642 = vunpack.c.l.b16 %v314
      %v643 = vunpack.c.l.b16 %v328
      %v644 = vunpack.c.l.b16 %v338
      %v645 = vunpack.c.l.b16 %v352
      %v646 = vunpack.c.l.b16 %v362
      %v647 = vunpack.c.l.b16 %v376
      %v648 = vunpack.c.l.b16 %v386
      %v649 = vunpack.c.l.b16 %v400
      %v650 = vunpack.c.l.b16 %v410
      %v651 = vunpack.c.l.b16 %v424
      %v652 = vunpack.c.l.b16 %v434
      %v653 = vunpack.c.l.b16 %v448
      %v654 = vunpack.c.l.b16 %v458
      %v655 = vunpack.c.l.b16 %v472
      %v656 = vunpack.c.l.b16 %v482
      %v657 = vunpack.c.l.b16 %v496
      %v658 = vunpack.c.l.b16 %v506
      %v659 = vunpack.c.l.b16 %v520
      %v660 = vunpack.c.l.b16 %v530
      %v661 = vunpack.c.l.b16 %v544
      %v662 = vunpack.c.l.b16 %v554
      %v663 = vunpack.c.l.b16 %v568
      %v664 = vunpack.c.l.b16 %v578
      %v665 = vunpack.c.l.b16 %v592
      %v666 = vunpack.c.l.b16 %v602
      %v667 = vunpack.c.l.b16 %v616
      %v668 = vunpack.c.l.b16 %v626
      %v669 = vpack.c.b16 %v638, %v637
      %v670 = vpack.c.b16 %v640, %v639
      %v671 = vpack.c.b16 %v642, %v641
      %v672 = vpack.c.b16 %v644, %v643
      %v673 = vpack.c.b16 %v646, %v645
      %v674 = vpack.c.b16 %v648, %v647
      %v675 = vpack.c.b16 %v650, %v649
      %v676 = vpack.c.b16 %v652, %v651
      %v677 = vpack.c.b16 %v654, %v653
      %v678 = vpack.c.b16 %v656, %v655
      %v679 = vpack.c.b16 %v658, %v657
      %v680 = vpack.c.b16 %v660, %v659
      %v681 = vpack.c.b16 %v662, %v661
      %v682 = vpack.c.b16 %v664, %v663
      %v683 = vpack.c.b16 %v666, %v665
      %v684 = vpack.c.b16 %v668, %v667
      %v694 = vunpack.c.l.b16 %v628
      %v695 = vunpack.c.l.b16 %v629
      %v696 = vunpack.c.l.b16 %v630
      %v697 = vunpack.c.l.b16 %v631
      %v698 = vunpack.c.l.b16 %v632
      %v699 = vunpack.c.l.b16 %v633
      %v700 = vunpack.c.l.b16 %v634
      %v701 = vunpack.c.l.b16 %v635
      %v702 = vunpack.c.l.b16 %v636
      %v703 = vpack.c.b16 %v695, %v694
      %v704 = vpack.c.b16 %v697, %v696
      %v705 = vpack.c.b16 %v699, %v698
      %v706 = vpack.c.b16 %v701, %v700
      %v707 = vpack.c.b16 %v702, %v702
      %vm712 = vcmask 588800
      %v714 = vsel %vm712, %v669, 0
      %v717 = vsel %vm712, %v670, 0
      %v720 = vsel %vm712, %v671, 0
      %v723 = vsel %vm712, %v672, 0
      %v726 = vsel %vm712, %v673, 0
      %v729 = vsel %vm712, %v674, 0
      %v732 = vsel %vm712, %v675, 0
      %v735 = vsel %vm712, %v676, 0
      %v738 = vsel %vm712, %v677, 0
      %v741 = vsel %vm712, %v678, 0
      %v744 = vsel %vm712, %v679, 0
      %v747 = vsel %vm712, %v680, 0
      %v750 = vsel %vm712, %v681, 0
      %v753 = vsel %vm712, %v682, 0
      %v756 = vsel %vm712, %v683, 0
      %v759 = vsel %vm712, %v684, 0
      %vm761 = vcmask 1043456
      %v763 = vsel %vm761, %v707, 0
      %765 = vmatprep.subr.bf16.mxu0 0
      %766 = vmatpush1.bf16.msra.mxu0 0
      %767 = vmatprep.subr.bf16.mxu0 0
      %768 = vmatpush1.bf16.msra.mxu0 0
      %769 = vmatprep.subr.bf16.mxu0 0
      %770 = vmatpush1.bf16.msra.mxu0 0
      %771 = vmatprep.subr.bf16.mxu0 0
      %772 = vmatpush1.bf16.msra.mxu0 %v763
      %773 = vmatprep.subr.bf16.mxu0 0
      %774 = vmatpush1.bf16.msra.mxu0 %v706
      %775 = vmatprep.subr.bf16.mxu0 0
      %776 = vmatpush1.bf16.msra.mxu0 %v705
      %777 = vmatprep.subr.bf16.mxu0 0
      %778 = vmatpush1.bf16.msra.mxu0 %v704
      %779 = vmatprep.subr.bf16.mxu0 0
      %780 = vmatpush1.bf16.msra.mxu0 %v703
      %781 = vmatprep.subr.bf16.mxu0 0
      %782 = vmatpush2.bf16.msra.mxu0 0
      %783 = vmatprep.subr.bf16.mxu0 0
      %784 = vmatpush2.bf16.msra.mxu0 0
      %785 = vmatprep.subr.bf16.mxu0 0
      %786 = vmatpush2.bf16.msra.mxu0 0
      %787 = vmatprep.subr.bf16.mxu0 0
      %788 = vmatpush2.bf16.msra.mxu0 0
      %789 = vmatprep.subr.bf16.mxu0 0
      %790 = vmatpush2.bf16.msra.mxu0 0
      %791 = vmatprep.subr.bf16.mxu0 0
      %792 = vmatpush2.bf16.msra.mxu0 0
      %793 = vmatprep.subr.bf16.mxu0 0
      %794 = vmatpush2.bf16.msra.mxu0 0
      %795 = vmatprep.subr.bf16.mxu0 0
      %796 = vmatpush2.bf16.msra.mxu0 0
      %797 = vmatprep.mubr.bf16.mxu0 0
      %798 = vmatmul.mubr.bf16.gmra.mxu0 %v714
      %v799 = vpop.f32.mrf.mxu0
      %v800 = vadd.f32 0.0, %v799
      %v801 = vpop.f32.mrf.mxu0
      %v802 = vpop.f32.mrf.mxu0
      %v803 = vadd.f32 0.0, %v802
      %v804 = vpop.f32.mrf.mxu0
      %805 = vmatprep.mubr.bf16.mxu0 0
      %806 = vmatmul.mubr.bf16.gmra.mxu0 %v717
      %v807 = vpop.f32.mrf.mxu0
      %v808 = vadd.f32 0.0, %v807
      %v809 = vpop.f32.mrf.mxu0
      %v810 = vpop.f32.mrf.mxu0
      %v811 = vadd.f32 0.0, %v810
      %v812 = vpop.f32.mrf.mxu0
      %813 = vmatprep.mubr.bf16.mxu0 0
      %814 = vmatmul.mubr.bf16.gmra.mxu0 %v720
      %v815 = vpop.f32.mrf.mxu0
      %v816 = vadd.f32 0.0, %v815
      %v817 = vpop.f32.mrf.mxu0
      %v818 = vpop.f32.mrf.mxu0
      %v819 = vadd.f32 0.0, %v818
      %v820 = vpop.f32.mrf.mxu0
      %821 = vmatprep.mubr.bf16.mxu0 0
      %822 = vmatmul.mubr.bf16.gmra.mxu0 %v723
      %v823 = vpop.f32.mrf.mxu0
      %v824 = vadd.f32 0.0, %v823
      %v825 = vpop.f32.mrf.mxu0
      %v826 = vpop.f32.mrf.mxu0
      %v827 = vadd.f32 0.0, %v826
      %v828 = vpop.f32.mrf.mxu0
      %829 = vmatprep.mubr.bf16.mxu0 0
      %830 = vmatmul.mubr.bf16.gmra.mxu0 %v726
      %v831 = vpop.f32.mrf.mxu0
      %v832 = vadd.f32 0.0, %v831
      %v833 = vpop.f32.mrf.mxu0
      %v834 = vpop.f32.mrf.mxu0
      %v835 = vadd.f32 0.0, %v834
      %v836 = vpop.f32.mrf.mxu0
      %837 = vmatprep.mubr.bf16.mxu0 0
      %838 = vmatmul.mubr.bf16.gmra.mxu0 %v729
      %v839 = vpop.f32.mrf.mxu0
      %v840 = vadd.f32 0.0, %v839
      %v841 = vpop.f32.mrf.mxu0
      %v842 = vpop.f32.mrf.mxu0
      %v843 = vadd.f32 0.0, %v842
      %v844 = vpop.f32.mrf.mxu0
      %845 = vmatprep.mubr.bf16.mxu0 0
      %846 = vmatmul.mubr.bf16.gmra.mxu0 %v732
      %v847 = vpop.f32.mrf.mxu0
      %v848 = vadd.f32 0.0, %v847
      %v849 = vpop.f32.mrf.mxu0
      %v850 = vpop.f32.mrf.mxu0
      %v851 = vadd.f32 0.0, %v850
      %v852 = vpop.f32.mrf.mxu0
      %853 = vmatprep.mubr.bf16.mxu0 0
      %854 = vmatmul.mubr.bf16.gmra.mxu0 %v735
      %v855 = vpop.f32.mrf.mxu0
      %v856 = vadd.f32 0.0, %v855
      %v857 = vpop.f32.mrf.mxu0
      %v858 = vpop.f32.mrf.mxu0
      %v859 = vadd.f32 0.0, %v858
      %v860 = vpop.f32.mrf.mxu0
      %861 = vmatprep.mubr.bf16.mxu0 0
      %862 = vmatmul.mubr.bf16.gmra.mxu0 %v738
      %v863 = vpop.f32.mrf.mxu0
      %v864 = vadd.f32 0.0, %v863
      %v865 = vpop.f32.mrf.mxu0
      %v866 = vpop.f32.mrf.mxu0
      %v867 = vadd.f32 0.0, %v866
      %v868 = vpop.f32.mrf.mxu0
      %869 = vmatprep.mubr.bf16.mxu0 0
      %870 = vmatmul.mubr.bf16.gmra.mxu0 %v741
      %v871 = vpop.f32.mrf.mxu0
      %v872 = vadd.f32 0.0, %v871
      %v873 = vpop.f32.mrf.mxu0
      %v874 = vpop.f32.mrf.mxu0
      %v875 = vadd.f32 0.0, %v874
      %v876 = vpop.f32.mrf.mxu0
      %877 = vmatprep.mubr.bf16.mxu0 0
      %878 = vmatmul.mubr.bf16.gmra.mxu0 %v744
      %v879 = vpop.f32.mrf.mxu0
      %v880 = vadd.f32 0.0, %v879
      %v881 = vpop.f32.mrf.mxu0
      %v882 = vpop.f32.mrf.mxu0
      %v883 = vadd.f32 0.0, %v882
      %v884 = vpop.f32.mrf.mxu0
      %885 = vmatprep.mubr.bf16.mxu0 0
      %886 = vmatmul.mubr.bf16.gmra.mxu0 %v747
      %v887 = vpop.f32.mrf.mxu0
      %v888 = vadd.f32 0.0, %v887
      %v889 = vpop.f32.mrf.mxu0
      %v890 = vpop.f32.mrf.mxu0
      %v891 = vadd.f32 0.0, %v890
      %v892 = vpop.f32.mrf.mxu0
      %893 = vmatprep.mubr.bf16.mxu0 0
      %894 = vmatmul.mubr.bf16.gmra.mxu0 %v750
      %v895 = vpop.f32.mrf.mxu0
      %v896 = vadd.f32 0.0, %v895
      %v897 = vpop.f32.mrf.mxu0
      %v898 = vpop.f32.mrf.mxu0
      %v899 = vadd.f32 0.0, %v898
      %v900 = vpop.f32.mrf.mxu0
      %901 = vmatprep.mubr.bf16.mxu0 0
      %902 = vmatmul.mubr.bf16.gmra.mxu0 %v753
      %v903 = vpop.f32.mrf.mxu0
      %v904 = vadd.f32 0.0, %v903
      %v905 = vpop.f32.mrf.mxu0
      %v906 = vpop.f32.mrf.mxu0
      %v907 = vadd.f32 0.0, %v906
      %v908 = vpop.f32.mrf.mxu0
      %909 = vmatprep.mubr.bf16.mxu0 0
      %910 = vmatmul.mubr.bf16.gmra.mxu0 %v756
      %v911 = vpop.f32.mrf.mxu0
      %v912 = vadd.f32 0.0, %v911
      %v913 = vpop.f32.mrf.mxu0
      %v914 = vpop.f32.mrf.mxu0
      %v915 = vadd.f32 0.0, %v914
      %v916 = vpop.f32.mrf.mxu0
      %917 = vmatprep.mubr.bf16.mxu0 0
      %918 = vmatmul.mubr.bf16.gmra.mxu0 %v759
      %v919 = vpop.f32.mrf.mxu0
      %v920 = vadd.f32 0.0, %v919
      %v921 = vpop.f32.mrf.mxu0
      %v922 = vpop.f32.mrf.mxu0
      %v923 = vadd.f32 0.0, %v922
      %v924 = vpop.f32.mrf.mxu0
      %925 = vdwg.mxu0
      %v958 = vunpack.c.l.b16 %v183
      %v959 = vunpack.c.l.b16 %v184
      %v960 = vunpack.c.l.b16 %v185
      %v961 = vunpack.c.l.b16 %v186
      %v962 = vunpack.c.l.b16 %v187
      %v963 = vunpack.c.l.b16 %v188
      %v964 = vunpack.c.l.b16 %v189
      %v965 = vunpack.c.l.b16 %v190
      %v966 = vunpack.c.l.b16 %v191
      %v967 = vunpack.c.l.b16 %v192
      %v968 = vunpack.c.l.b16 %v193
      %v969 = vunpack.c.l.b16 %v194
      %v970 = vunpack.c.l.b16 %v195
      %v971 = vunpack.c.l.b16 %v196
      %v972 = vunpack.c.l.b16 %v197
      %v973 = vunpack.c.l.b16 %v198
      %v974 = vunpack.c.l.b16 %v199
      %v975 = vunpack.c.l.b16 %v200
      %v976 = vunpack.c.l.b16 %v201
      %v977 = vunpack.c.l.b16 %v202
      %v978 = vunpack.c.l.b16 %v203
      %v979 = vunpack.c.l.b16 %v204
      %v980 = vunpack.c.l.b16 %v205
      %v981 = vunpack.c.l.b16 %v206
      %v982 = vunpack.c.l.b16 %v207
      %v983 = vunpack.c.l.b16 %v208
      %v984 = vunpack.c.l.b16 %v209
      %v985 = vunpack.c.l.b16 %v210
      %v986 = vunpack.c.l.b16 %v211
      %v987 = vunpack.c.l.b16 %v212
      %v988 = vunpack.c.l.b16 %v213
      %v989 = vunpack.c.l.b16 %v214
      %v990 = vpack.c.b16 %v959, %v958
      %v991 = vpack.c.b16 %v961, %v960
      %v992 = vpack.c.b16 %v963, %v962
      %v993 = vpack.c.b16 %v965, %v964
      %v994 = vpack.c.b16 %v967, %v966
      %v995 = vpack.c.b16 %v969, %v968
      %v996 = vpack.c.b16 %v971, %v970
      %v997 = vpack.c.b16 %v973, %v972
      %v998 = vpack.c.b16 %v975, %v974
      %v999 = vpack.c.b16 %v977, %v976
      %v1000 = vpack.c.b16 %v979, %v978
      %v1001 = vpack.c.b16 %v981, %v980
      %v1002 = vpack.c.b16 %v983, %v982
      %v1003 = vpack.c.b16 %v985, %v984
      %v1004 = vpack.c.b16 %v987, %v986
      %v1005 = vpack.c.b16 %v989, %v988
      %v1015 = vunpack.c.l.b16 %v215
      %v1016 = vunpack.c.l.b16 %v216
      %v1017 = vunpack.c.l.b16 %v217
      %v1018 = vunpack.c.l.b16 %v218
      %v1019 = vunpack.c.l.b16 %v219
      %v1020 = vunpack.c.l.b16 %v220
      %v1021 = vunpack.c.l.b16 %v221
      %v1022 = vunpack.c.l.b16 %v222
      %v1023 = vunpack.c.l.b16 %v223
      %v1024 = vpack.c.b16 %v1016, %v1015
      %v1025 = vpack.c.b16 %v1018, %v1017
      %v1026 = vpack.c.b16 %v1020, %v1019
      %v1027 = vpack.c.b16 %v1022, %v1021
      %v1028 = vpack.c.b16 %v1023, %v1023
      %v1034 = vsel %vm712, %v990, 0
      %v1037 = vsel %vm712, %v991, 0
      %v1040 = vsel %vm712, %v992, 0
      %v1043 = vsel %vm712, %v993, 0
      %v1046 = vsel %vm712, %v994, 0
      %v1049 = vsel %vm712, %v995, 0
      %v1052 = vsel %vm712, %v996, 0
      %v1055 = vsel %vm712, %v997, 0
      %v1058 = vsel %vm712, %v998, 0
      %v1061 = vsel %vm712, %v999, 0
      %v1064 = vsel %vm712, %v1000, 0
      %v1067 = vsel %vm712, %v1001, 0
      %v1070 = vsel %vm712, %v1002, 0
      %v1073 = vsel %vm712, %v1003, 0
      %v1076 = vsel %vm712, %v1004, 0
      %v1079 = vsel %vm712, %v1005, 0
      %v1082 = vsel %vm761, %v1028, 0
      %1084 = vmatprep.subr.bf16.mxu0 0
      %1085 = vmatpush1.bf16.msra.mxu0 0
      %1086 = vmatprep.subr.bf16.mxu0 0
      %1087 = vmatpush1.bf16.msra.mxu0 0
      %1088 = vmatprep.subr.bf16.mxu0 0
      %1089 = vmatpush1.bf16.msra.mxu0 0
      %1090 = vmatprep.subr.bf16.mxu0 0
      %1091 = vmatpush1.bf16.msra.mxu0 %v1082
      %1092 = vmatprep.subr.bf16.mxu0 0
      %1093 = vmatpush1.bf16.msra.mxu0 %v1027
      %1094 = vmatprep.subr.bf16.mxu0 0
      %1095 = vmatpush1.bf16.msra.mxu0 %v1026
      %1096 = vmatprep.subr.bf16.mxu0 0
      %1097 = vmatpush1.bf16.msra.mxu0 %v1025
      %1098 = vmatprep.subr.bf16.mxu0 0
      %1099 = vmatpush1.bf16.msra.mxu0 %v1024
      %1100 = vmatprep.subr.bf16.mxu0 0
      %1101 = vmatpush2.bf16.msra.mxu0 0
      %1102 = vmatprep.subr.bf16.mxu0 0
      %1103 = vmatpush2.bf16.msra.mxu0 0
      %1104 = vmatprep.subr.bf16.mxu0 0
      %1105 = vmatpush2.bf16.msra.mxu0 0
      %1106 = vmatprep.subr.bf16.mxu0 0
      %1107 = vmatpush2.bf16.msra.mxu0 0
      %1108 = vmatprep.subr.bf16.mxu0 0
      %1109 = vmatpush2.bf16.msra.mxu0 0
      %1110 = vmatprep.subr.bf16.mxu0 0
      %1111 = vmatpush2.bf16.msra.mxu0 0
      %1112 = vmatprep.subr.bf16.mxu0 0
      %1113 = vmatpush2.bf16.msra.mxu0 0
      %1114 = vmatprep.subr.bf16.mxu0 0
      %1115 = vmatpush2.bf16.msra.mxu0 0
      %1116 = vmatprep.mubr.bf16.mxu0 0
      %1117 = vmatmul.mubr.bf16.gmra.mxu0 %v1034
      %v1118 = vpop.f32.mrf.mxu0
      %v1119 = vadd.f32 %v800, %v1118
      %v1120 = vpop.f32.mrf.mxu0
      %v1121 = vpop.f32.mrf.mxu0
      %v1122 = vadd.f32 %v803, %v1121
      %v1123 = vpop.f32.mrf.mxu0
      %1124 = vmatprep.mubr.bf16.mxu0 0
      %1125 = vmatmul.mubr.bf16.gmra.mxu0 %v1037
      %v1126 = vpop.f32.mrf.mxu0
      %v1127 = vadd.f32 %v808, %v1126
      %v1128 = vpop.f32.mrf.mxu0
      %v1129 = vpop.f32.mrf.mxu0
      %v1130 = vadd.f32 %v811, %v1129
      %v1131 = vpop.f32.mrf.mxu0
      %1132 = vmatprep.mubr.bf16.mxu0 0
      %1133 = vmatmul.mubr.bf16.gmra.mxu0 %v1040
      %v1134 = vpop.f32.mrf.mxu0
      %v1135 = vadd.f32 %v816, %v1134
      %v1136 = vpop.f32.mrf.mxu0
      %v1137 = vpop.f32.mrf.mxu0
      %v1138 = vadd.f32 %v819, %v1137
      %v1139 = vpop.f32.mrf.mxu0
      %1140 = vmatprep.mubr.bf16.mxu0 0
      %1141 = vmatmul.mubr.bf16.gmra.mxu0 %v1043
      %v1142 = vpop.f32.mrf.mxu0
      %v1143 = vadd.f32 %v824, %v1142
      %v1144 = vpop.f32.mrf.mxu0
      %v1145 = vpop.f32.mrf.mxu0
      %v1146 = vadd.f32 %v827, %v1145
      %v1147 = vpop.f32.mrf.mxu0
      %1148 = vmatprep.mubr.bf16.mxu0 0
      %1149 = vmatmul.mubr.bf16.gmra.mxu0 %v1046
      %v1150 = vpop.f32.mrf.mxu0
      %v1151 = vadd.f32 %v832, %v1150
      %v1152 = vpop.f32.mrf.mxu0
      %v1153 = vpop.f32.mrf.mxu0
      %v1154 = vadd.f32 %v835, %v1153
      %v1155 = vpop.f32.mrf.mxu0
      %1156 = vmatprep.mubr.bf16.mxu0 0
      %1157 = vmatmul.mubr.bf16.gmra.mxu0 %v1049
      %v1158 = vpop.f32.mrf.mxu0
      %v1159 = vadd.f32 %v840, %v1158
      %v1160 = vpop.f32.mrf.mxu0
      %v1161 = vpop.f32.mrf.mxu0
      %v1162 = vadd.f32 %v843, %v1161
      %v1163 = vpop.f32.mrf.mxu0
      %1164 = vmatprep.mubr.bf16.mxu0 0
      %1165 = vmatmul.mubr.bf16.gmra.mxu0 %v1052
      %v1166 = vpop.f32.mrf.mxu0
      %v1167 = vadd.f32 %v848, %v1166
      %v1168 = vpop.f32.mrf.mxu0
      %v1169 = vpop.f32.mrf.mxu0
      %v1170 = vadd.f32 %v851, %v1169
      %v1171 = vpop.f32.mrf.mxu0
      %1172 = vmatprep.mubr.bf16.mxu0 0
      %1173 = vmatmul.mubr.bf16.gmra.mxu0 %v1055
      %v1174 = vpop.f32.mrf.mxu0
      %v1175 = vadd.f32 %v856, %v1174
      %v1176 = vpop.f32.mrf.mxu0
      %v1177 = vpop.f32.mrf.mxu0
      %v1178 = vadd.f32 %v859, %v1177
      %v1179 = vpop.f32.mrf.mxu0
      %1180 = vmatprep.mubr.bf16.mxu0 0
      %1181 = vmatmul.mubr.bf16.gmra.mxu0 %v1058
      %v1182 = vpop.f32.mrf.mxu0
      %v1183 = vadd.f32 %v864, %v1182
      %v1184 = vpop.f32.mrf.mxu0
      %v1185 = vpop.f32.mrf.mxu0
      %v1186 = vadd.f32 %v867, %v1185
      %v1187 = vpop.f32.mrf.mxu0
      %1188 = vmatprep.mubr.bf16.mxu0 0
      %1189 = vmatmul.mubr.bf16.gmra.mxu0 %v1061
      %v1190 = vpop.f32.mrf.mxu0
      %v1191 = vadd.f32 %v872, %v1190
      %v1192 = vpop.f32.mrf.mxu0
      %v1193 = vpop.f32.mrf.mxu0
      %v1194 = vadd.f32 %v875, %v1193
      %v1195 = vpop.f32.mrf.mxu0
      %1196 = vmatprep.mubr.bf16.mxu0 0
      %1197 = vmatmul.mubr.bf16.gmra.mxu0 %v1064
      %v1198 = vpop.f32.mrf.mxu0
      %v1199 = vadd.f32 %v880, %v1198
      %v1200 = vpop.f32.mrf.mxu0
      %v1201 = vpop.f32.mrf.mxu0
      %v1202 = vadd.f32 %v883, %v1201
      %v1203 = vpop.f32.mrf.mxu0
      %1204 = vmatprep.mubr.bf16.mxu0 0
      %1205 = vmatmul.mubr.bf16.gmra.mxu0 %v1067
      %v1206 = vpop.f32.mrf.mxu0
      %v1207 = vadd.f32 %v888, %v1206
      %v1208 = vpop.f32.mrf.mxu0
      %v1209 = vpop.f32.mrf.mxu0
      %v1210 = vadd.f32 %v891, %v1209
      %v1211 = vpop.f32.mrf.mxu0
      %1212 = vmatprep.mubr.bf16.mxu0 0
      %1213 = vmatmul.mubr.bf16.gmra.mxu0 %v1070
      %v1214 = vpop.f32.mrf.mxu0
      %v1215 = vadd.f32 %v896, %v1214
      %v1216 = vpop.f32.mrf.mxu0
      %v1217 = vpop.f32.mrf.mxu0
      %v1218 = vadd.f32 %v899, %v1217
      %v1219 = vpop.f32.mrf.mxu0
      %1220 = vmatprep.mubr.bf16.mxu0 0
      %1221 = vmatmul.mubr.bf16.gmra.mxu0 %v1073
      %v1222 = vpop.f32.mrf.mxu0
      %v1223 = vadd.f32 %v904, %v1222
      %v1224 = vpop.f32.mrf.mxu0
      %v1225 = vpop.f32.mrf.mxu0
      %v1226 = vadd.f32 %v907, %v1225
      %v1227 = vpop.f32.mrf.mxu0
      %1228 = vmatprep.mubr.bf16.mxu0 0
      %1229 = vmatmul.mubr.bf16.gmra.mxu0 %v1076
      %v1230 = vpop.f32.mrf.mxu0
      %v1231 = vadd.f32 %v912, %v1230
      %v1232 = vpop.f32.mrf.mxu0
      %v1233 = vpop.f32.mrf.mxu0
      %v1234 = vadd.f32 %v915, %v1233
      %v1235 = vpop.f32.mrf.mxu0
      %1236 = vmatprep.mubr.bf16.mxu0 0
      %1237 = vmatmul.mubr.bf16.gmra.mxu0 %v1079
      %v1238 = vpop.f32.mrf.mxu0
      %v1239 = vadd.f32 %v920, %v1238
      %v1240 = vpop.f32.mrf.mxu0
      %v1241 = vpop.f32.mrf.mxu0
      %v1242 = vadd.f32 %v923, %v1241
      %v1243 = vpop.f32.mrf.mxu0
      %1244 = vdwg.mxu0
      %v1245 = vld [vmem:[%s172] sm:$0xe]
      %v1246 = vld [vmem:[%s172 + $0xc] sm:$0xe]
      %v1247 = vld [vmem:[%s172 + $0x18] sm:$0xe]
      %v1248 = vld [vmem:[%s172 + $0x24] sm:$0xe]
      %v1249 = vld [vmem:[%s172 + $0x30] sm:$0xe]
      %v1250 = vld [vmem:[%s172 + $0x3c] sm:$0xe]
      %v1251 = vld [vmem:[%s172 + $0x48] sm:$0xe]
      %v1252 = vld [vmem:[%s172 + $0x54] sm:$0xe]
      %v1253 = vld [vmem:[%s172 + $0x60] sm:$0xe]
      %v1254 = vld [vmem:[%s172 + $0x6c] sm:$0xe]
      %v1255 = vld [vmem:[%s172 + $0x78] sm:$0xe]
      %v1256 = vld [vmem:[%s172 + $0x84] sm:$0xe]
      %v1257 = vld [vmem:[%s172 + $0x90] sm:$0xe]
      %v1258 = vld [vmem:[%s172 + $0x9c] sm:$0xe]
      %v1259 = vld [vmem:[%s172 + $0xa8] sm:$0xe]
      %v1260 = vld [vmem:[%s172 + $0xb4] sm:$0xe]
      %vm1293 = vcmask 1042432
      %vm1294 = vcmask 1046532
      %vm1295 = vmor %vm1293, %vm1294
      %v1296 = vrot.slane %v1245, 5
      %v1297 = vrot.slane %v1296, 4
      %v1298 = vrot.slane %v184, 5
      %v1299 = vsel %vm1295, %v1297, %v1298
      %v1300 = vrot.slane %v1298, 4
      %v1301 = vrot.slane %v224, 5
      %v1302 = vsel %vm1295, %v1300, %v1301
      %v1303 = vrot.slane %v1246, 5
      %v1304 = vrot.slane %v1303, 4
      %v1305 = vrot.slane %v186, 5
      %v1306 = vsel %vm1295, %v1304, %v1305
      %v1307 = vrot.slane %v1305, 4
      %v1308 = vrot.slane %v225, 5
      %v1309 = vsel %vm1295, %v1307, %v1308
      %v1310 = vrot.slane %v1247, 5
      %v1311 = vrot.slane %v1310, 4
      %v1312 = vrot.slane %v188, 5
      %v1313 = vsel %vm1295, %v1311, %v1312
      %v1314 = vrot.slane %v1312, 4
      %v1315 = vrot.slane %v226, 5
      %v1316 = vsel %vm1295, %v1314, %v1315
      %v1317 = vrot.slane %v1248, 5
      %v1318 = vrot.slane %v1317, 4
      %v1319 = vrot.slane %v190, 5
      %v1320 = vsel %vm1295, %v1318, %v1319
      %v1321 = vrot.slane %v1319, 4
      %v1322 = vrot.slane %v227, 5
      %v1323 = vsel %vm1295, %v1321, %v1322
      %v1324 = vrot.slane %v1249, 5
      %v1325 = vrot.slane %v1324, 4
      %v1326 = vrot.slane %v192, 5
      %v1327 = vsel %vm1295, %v1325, %v1326
      %v1328 = vrot.slane %v1326, 4
      %v1329 = vrot.slane %v228, 5
      %v1330 = vsel %vm1295, %v1328, %v1329
      %v1331 = vrot.slane %v1250, 5
      %v1332 = vrot.slane %v1331, 4
      %v1333 = vrot.slane %v194, 5
      %v1334 = vsel %vm1295, %v1332, %v1333
      %v1335 = vrot.slane %v1333, 4
      %v1336 = vrot.slane %v229, 5
      %v1337 = vsel %vm1295, %v1335, %v1336
      %v1338 = vrot.slane %v1251, 5
      %v1339 = vrot.slane %v1338, 4
      %v1340 = vrot.slane %v196, 5
      %v1341 = vsel %vm1295, %v1339, %v1340
      %v1342 = vrot.slane %v1340, 4
      %v1343 = vrot.slane %v230, 5
      %v1344 = vsel %vm1295, %v1342, %v1343
      %v1345 = vrot.slane %v1252, 5
      %v1346 = vrot.slane %v1345, 4
      %v1347 = vrot.slane %v198, 5
      %v1348 = vsel %vm1295, %v1346, %v1347
      %v1349 = vrot.slane %v1347, 4
      %v1350 = vrot.slane %v231, 5
      %v1351 = vsel %vm1295, %v1349, %v1350
      %v1352 = vrot.slane %v1253, 5
      %v1353 = vrot.slane %v1352, 4
      %v1354 = vrot.slane %v200, 5
      %v1355 = vsel %vm1295, %v1353, %v1354
      %v1356 = vrot.slane %v1354, 4
      %v1357 = vrot.slane %v232, 5
      %v1358 = vsel %vm1295, %v1356, %v1357
      %v1359 = vrot.slane %v1254, 5
      %v1360 = vrot.slane %v1359, 4
      %v1361 = vrot.slane %v202, 5
      %v1362 = vsel %vm1295, %v1360, %v1361
      %v1363 = vrot.slane %v1361, 4
      %v1364 = vrot.slane %v233, 5
      %v1365 = vsel %vm1295, %v1363, %v1364
      %v1366 = vrot.slane %v1255, 5
      %v1367 = vrot.slane %v1366, 4
      %v1368 = vrot.slane %v204, 5
      %v1369 = vsel %vm1295, %v1367, %v1368
      %v1370 = vrot.slane %v1368, 4
      %v1371 = vrot.slane %v234, 5
      %v1372 = vsel %vm1295, %v1370, %v1371
      %v1373 = vrot.slane %v1256, 5
      %v1374 = vrot.slane %v1373, 4
      %v1375 = vrot.slane %v206, 5
      %v1376 = vsel %vm1295, %v1374, %v1375
      %v1377 = vrot.slane %v1375, 4
      %v1378 = vrot.slane %v235, 5
      %v1379 = vsel %vm1295, %v1377, %v1378
      %v1380 = vrot.slane %v1257, 5
      %v1381 = vrot.slane %v1380, 4
      %v1382 = vrot.slane %v208, 5
      %v1383 = vsel %vm1295, %v1381, %v1382
      %v1384 = vrot.slane %v1382, 4
      %v1385 = vrot.slane %v236, 5
      %v1386 = vsel %vm1295, %v1384, %v1385
      %v1387 = vrot.slane %v1258, 5
      %v1388 = vrot.slane %v1387, 4
      %v1389 = vrot.slane %v210, 5
      %v1390 = vsel %vm1295, %v1388, %v1389
      %v1391 = vrot.slane %v1389, 4
      %v1392 = vrot.slane %v237, 5
      %v1393 = vsel %vm1295, %v1391, %v1392
      %v1394 = vrot.slane %v1259, 5
      %v1395 = vrot.slane %v1394, 4
      %v1396 = vrot.slane %v212, 5
      %v1397 = vsel %vm1295, %v1395, %v1396
      %v1398 = vrot.slane %v1396, 4
      %v1399 = vrot.slane %v238, 5
      %v1400 = vsel %vm1295, %v1398, %v1399
      %v1401 = vrot.slane %v1260, 5
      %v1402 = vrot.slane %v1401, 4
      %v1403 = vrot.slane %v214, 5
      %v1404 = vsel %vm1295, %v1402, %v1403
      %v1405 = vrot.slane %v1403, 4
      %v1406 = vrot.slane %v239, 5
      %v1407 = vsel %vm1295, %v1405, %v1406
      %s1408 = scalar_lea.vmem %s1, 72
      %v1409 = vld [vmem:[%s1408] sm:$0xf]
      %v1410 = vld [vmem:[%s1408 + $0x4] sm:$0xf]
      %v1411 = vld [vmem:[%s1408 + $0x8] sm:$0xf]
      %v1412 = vld [vmem:[%s1408 + $0xc] sm:$0xf]
      %v1413 = vld [vmem:[%s1408 + $0x10] sm:$0xf]
      %v1414 = vld [vmem:[%s1408 + $0x14] sm:$0xf]
      %v1415 = vld [vmem:[%s1408 + $0x18] sm:$0xf]
      %v1416 = vld [vmem:[%s1408 + $0x1c] sm:$0xf]
      %v1417 = vld [vmem:[%s1408 + $0x20] sm:$0xf]
      %v1418 = vunpack.c.l.b16 %v1299
      %v1419 = vunpack.c.l.b16 %v1302
      %v1420 = vunpack.c.l.b16 %v1306
      %v1421 = vunpack.c.l.b16 %v1309
      %v1422 = vunpack.c.l.b16 %v1313
      %v1423 = vunpack.c.l.b16 %v1316
      %v1424 = vunpack.c.l.b16 %v1320
      %v1425 = vunpack.c.l.b16 %v1323
      %v1426 = vunpack.c.l.b16 %v1327
      %v1427 = vunpack.c.l.b16 %v1330
      %v1428 = vunpack.c.l.b16 %v1334
      %v1429 = vunpack.c.l.b16 %v1337
      %v1430 = vunpack.c.l.b16 %v1341
      %v1431 = vunpack.c.l.b16 %v1344
      %v1432 = vunpack.c.l.b16 %v1348
      %v1433 = vunpack.c.l.b16 %v1351
      %v1434 = vunpack.c.l.b16 %v1355
      %v1435 = vunpack.c.l.b16 %v1358
      %v1436 = vunpack.c.l.b16 %v1362
      %v1437 = vunpack.c.l.b16 %v1365
      %v1438 = vunpack.c.l.b16 %v1369
      %v1439 = vunpack.c.l.b16 %v1372
      %v1440 = vunpack.c.l.b16 %v1376
      %v1441 = vunpack.c.l.b16 %v1379
      %v1442 = vunpack.c.l.b16 %v1383
      %v1443 = vunpack.c.l.b16 %v1386
      %v1444 = vunpack.c.l.b16 %v1390
      %v1445 = vunpack.c.l.b16 %v1393
      %v1446 = vunpack.c.l.b16 %v1397
      %v1447 = vunpack.c.l.b16 %v1400
      %v1448 = vunpack.c.l.b16 %v1404
      %v1449 = vunpack.c.l.b16 %v1407
      %v1450 = vpack.c.b16 %v1419, %v1418
      %v1451 = vpack.c.b16 %v1421, %v1420
      %v1452 = vpack.c.b16 %v1423, %v1422
      %v1453 = vpack.c.b16 %v1425, %v1424
      %v1454 = vpack.c.b16 %v1427, %v1426
      %v1455 = vpack.c.b16 %v1429, %v1428
      %v1456 = vpack.c.b16 %v1431, %v1430
      %v1457 = vpack.c.b16 %v1433, %v1432
      %v1458 = vpack.c.b16 %v1435, %v1434
      %v1459 = vpack.c.b16 %v1437, %v1436
      %v1460 = vpack.c.b16 %v1439, %v1438
      %v1461 = vpack.c.b16 %v1441, %v1440
      %v1462 = vpack.c.b16 %v1443, %v1442
      %v1463 = vpack.c.b16 %v1445, %v1444
      %v1464 = vpack.c.b16 %v1447, %v1446
      %v1465 = vpack.c.b16 %v1449, %v1448
      %v1475 = vunpack.c.l.b16 %v1409
      %v1476 = vunpack.c.l.b16 %v1410
      %v1477 = vunpack.c.l.b16 %v1411
      %v1478 = vunpack.c.l.b16 %v1412
      %v1479 = vunpack.c.l.b16 %v1413
      %v1480 = vunpack.c.l.b16 %v1414
      %v1481 = vunpack.c.l.b16 %v1415
      %v1482 = vunpack.c.l.b16 %v1416
      %v1483 = vunpack.c.l.b16 %v1417
      %v1484 = vpack.c.b16 %v1476, %v1475
      %v1485 = vpack.c.b16 %v1478, %v1477
      %v1486 = vpack.c.b16 %v1480, %v1479
      %v1487 = vpack.c.b16 %v1482, %v1481
      %v1488 = vpack.c.b16 %v1483, %v1483
      %v1494 = vsel %vm712, %v1450, 0
      %v1497 = vsel %vm712, %v1451, 0
      %v1500 = vsel %vm712, %v1452, 0
      %v1503 = vsel %vm712, %v1453, 0
      %v1506 = vsel %vm712, %v1454, 0
      %v1509 = vsel %vm712, %v1455, 0
      %v1512 = vsel %vm712, %v1456, 0
      %v1515 = vsel %vm712, %v1457, 0
      %v1518 = vsel %vm712, %v1458, 0
      %v1521 = vsel %vm712, %v1459, 0
      %v1524 = vsel %vm712, %v1460, 0
      %v1527 = vsel %vm712, %v1461, 0
      %v1530 = vsel %vm712, %v1462, 0
      %v1533 = vsel %vm712, %v1463, 0
      %v1536 = vsel %vm712, %v1464, 0
      %v1539 = vsel %vm712, %v1465, 0
      %v1542 = vsel %vm761, %v1488, 0
      %1544 = vmatprep.subr.bf16.mxu0 0
      %1545 = vmatpush1.bf16.msra.mxu0 0
      %1546 = vmatprep.subr.bf16.mxu0 0
      %1547 = vmatpush1.bf16.msra.mxu0 0
      %1548 = vmatprep.subr.bf16.mxu0 0
      %1549 = vmatpush1.bf16.msra.mxu0 0
      %1550 = vmatprep.subr.bf16.mxu0 0
      %1551 = vmatpush1.bf16.msra.mxu0 %v1542
      %1552 = vmatprep.subr.bf16.mxu0 0
      %1553 = vmatpush1.bf16.msra.mxu0 %v1487
      %1554 = vmatprep.subr.bf16.mxu0 0
      %1555 = vmatpush1.bf16.msra.mxu0 %v1486
      %1556 = vmatprep.subr.bf16.mxu0 0
      %1557 = vmatpush1.bf16.msra.mxu0 %v1485
      %1558 = vmatprep.subr.bf16.mxu0 0
      %1559 = vmatpush1.bf16.msra.mxu0 %v1484
      %1560 = vmatprep.subr.bf16.mxu0 0
      %1561 = vmatpush2.bf16.msra.mxu0 0
      %1562 = vmatprep.subr.bf16.mxu0 0
      %1563 = vmatpush2.bf16.msra.mxu0 0
      %1564 = vmatprep.subr.bf16.mxu0 0
      %1565 = vmatpush2.bf16.msra.mxu0 0
      %1566 = vmatprep.subr.bf16.mxu0 0
      %1567 = vmatpush2.bf16.msra.mxu0 0
      %1568 = vmatprep.subr.bf16.mxu0 0
      %1569 = vmatpush2.bf16.msra.mxu0 0
      %1570 = vmatprep.subr.bf16.mxu0 0
      %1571 = vmatpush2.bf16.msra.mxu0 0
      %1572 = vmatprep.subr.bf16.mxu0 0
      %1573 = vmatpush2.bf16.msra.mxu0 0
      %1574 = vmatprep.subr.bf16.mxu0 0
      %1575 = vmatpush2.bf16.msra.mxu0 0
      %1576 = vmatprep.mubr.bf16.mxu0 0
      %1577 = vmatmul.mubr.bf16.gmra.mxu0 %v1494
      %v1578 = vpop.f32.mrf.mxu0
      %v1579 = vadd.f32 0.0, %v1578
      %v1580 = vpop.f32.mrf.mxu0
      %v1581 = vpop.f32.mrf.mxu0
      %v1582 = vadd.f32 0.0, %v1581
      %v1583 = vpop.f32.mrf.mxu0
      %1584 = vmatprep.mubr.bf16.mxu0 0
      %1585 = vmatmul.mubr.bf16.gmra.mxu0 %v1497
      %v1586 = vpop.f32.mrf.mxu0
      %v1587 = vadd.f32 0.0, %v1586
      %v1588 = vpop.f32.mrf.mxu0
      %v1589 = vpop.f32.mrf.mxu0
      %v1590 = vadd.f32 0.0, %v1589
      %v1591 = vpop.f32.mrf.mxu0
      %1592 = vmatprep.mubr.bf16.mxu0 0
      %1593 = vmatmul.mubr.bf16.gmra.mxu0 %v1500
      %v1594 = vpop.f32.mrf.mxu0
      %v1595 = vadd.f32 0.0, %v1594
      %v1596 = vpop.f32.mrf.mxu0
      %v1597 = vpop.f32.mrf.mxu0
      %v1598 = vadd.f32 0.0, %v1597
      %v1599 = vpop.f32.mrf.mxu0
      %1600 = vmatprep.mubr.bf16.mxu0 0
      %1601 = vmatmul.mubr.bf16.gmra.mxu0 %v1503
      %v1602 = vpop.f32.mrf.mxu0
      %v1603 = vadd.f32 0.0, %v1602
      %v1604 = vpop.f32.mrf.mxu0
      %v1605 = vpop.f32.mrf.mxu0
      %v1606 = vadd.f32 0.0, %v1605
      %v1607 = vpop.f32.mrf.mxu0
      %1608 = vmatprep.mubr.bf16.mxu0 0
      %1609 = vmatmul.mubr.bf16.gmra.mxu0 %v1506
      %v1610 = vpop.f32.mrf.mxu0
      %v1611 = vadd.f32 0.0, %v1610
      %v1612 = vpop.f32.mrf.mxu0
      %v1613 = vpop.f32.mrf.mxu0
      %v1614 = vadd.f32 0.0, %v1613
      %v1615 = vpop.f32.mrf.mxu0
      %1616 = vmatprep.mubr.bf16.mxu0 0
      %1617 = vmatmul.mubr.bf16.gmra.mxu0 %v1509
      %v1618 = vpop.f32.mrf.mxu0
      %v1619 = vadd.f32 0.0, %v1618
      %v1620 = vpop.f32.mrf.mxu0
      %v1621 = vpop.f32.mrf.mxu0
      %v1622 = vadd.f32 0.0, %v1621
      %v1623 = vpop.f32.mrf.mxu0
      %1624 = vmatprep.mubr.bf16.mxu0 0
      %1625 = vmatmul.mubr.bf16.gmra.mxu0 %v1512
      %v1626 = vpop.f32.mrf.mxu0
      %v1627 = vadd.f32 0.0, %v1626
      %v1628 = vpop.f32.mrf.mxu0
      %v1629 = vpop.f32.mrf.mxu0
      %v1630 = vadd.f32 0.0, %v1629
      %v1631 = vpop.f32.mrf.mxu0
      %1632 = vmatprep.mubr.bf16.mxu0 0
      %1633 = vmatmul.mubr.bf16.gmra.mxu0 %v1515
      %v1634 = vpop.f32.mrf.mxu0
      %v1635 = vadd.f32 0.0, %v1634
      %v1636 = vpop.f32.mrf.mxu0
      %v1637 = vpop.f32.mrf.mxu0
      %v1638 = vadd.f32 0.0, %v1637
      %v1639 = vpop.f32.mrf.mxu0
      %1640 = vmatprep.mubr.bf16.mxu0 0
      %1641 = vmatmul.mubr.bf16.gmra.mxu0 %v1518
      %v1642 = vpop.f32.mrf.mxu0
      %v1643 = vadd.f32 0.0, %v1642
      %v1644 = vpop.f32.mrf.mxu0
      %v1645 = vpop.f32.mrf.mxu0
      %v1646 = vadd.f32 0.0, %v1645
      %v1647 = vpop.f32.mrf.mxu0
      %1648 = vmatprep.mubr.bf16.mxu0 0
      %1649 = vmatmul.mubr.bf16.gmra.mxu0 %v1521
      %v1650 = vpop.f32.mrf.mxu0
      %v1651 = vadd.f32 0.0, %v1650
      %v1652 = vpop.f32.mrf.mxu0
      %v1653 = vpop.f32.mrf.mxu0
      %v1654 = vadd.f32 0.0, %v1653
      %v1655 = vpop.f32.mrf.mxu0
      %1656 = vmatprep.mubr.bf16.mxu0 0
      %1657 = vmatmul.mubr.bf16.gmra.mxu0 %v1524
      %v1658 = vpop.f32.mrf.mxu0
      %v1659 = vadd.f32 0.0, %v1658
      %v1660 = vpop.f32.mrf.mxu0
      %v1661 = vpop.f32.mrf.mxu0
      %v1662 = vadd.f32 0.0, %v1661
      %v1663 = vpop.f32.mrf.mxu0
      %1664 = vmatprep.mubr.bf16.mxu0 0
      %1665 = vmatmul.mubr.bf16.gmra.mxu0 %v1527
      %v1666 = vpop.f32.mrf.mxu0
      %v1667 = vadd.f32 0.0, %v1666
      %v1668 = vpop.f32.mrf.mxu0
      %v1669 = vpop.f32.mrf.mxu0
      %v1670 = vadd.f32 0.0, %v1669
      %v1671 = vpop.f32.mrf.mxu0
      %1672 = vmatprep.mubr.bf16.mxu0 0
      %1673 = vmatmul.mubr.bf16.gmra.mxu0 %v1530
      %v1674 = vpop.f32.mrf.mxu0
      %v1675 = vadd.f32 0.0, %v1674
      %v1676 = vpop.f32.mrf.mxu0
      %v1677 = vpop.f32.mrf.mxu0
      %v1678 = vadd.f32 0.0, %v1677
      %v1679 = vpop.f32.mrf.mxu0
      %1680 = vmatprep.mubr.bf16.mxu0 0
      %1681 = vmatmul.mubr.bf16.gmra.mxu0 %v1533
      %v1682 = vpop.f32.mrf.mxu0
      %v1683 = vadd.f32 0.0, %v1682
      %v1684 = vpop.f32.mrf.mxu0
      %v1685 = vpop.f32.mrf.mxu0
      %v1686 = vadd.f32 0.0, %v1685
      %v1687 = vpop.f32.mrf.mxu0
      %1688 = vmatprep.mubr.bf16.mxu0 0
      %1689 = vmatmul.mubr.bf16.gmra.mxu0 %v1536
      %v1690 = vpop.f32.mrf.mxu0
      %v1691 = vadd.f32 0.0, %v1690
      %v1692 = vpop.f32.mrf.mxu0
      %v1693 = vpop.f32.mrf.mxu0
      %v1694 = vadd.f32 0.0, %v1693
      %v1695 = vpop.f32.mrf.mxu0
      %1696 = vmatprep.mubr.bf16.mxu0 0
      %1697 = vmatmul.mubr.bf16.gmra.mxu0 %v1539
      %v1698 = vpop.f32.mrf.mxu0
      %v1699 = vadd.f32 0.0, %v1698
      %v1700 = vpop.f32.mrf.mxu0
      %v1701 = vpop.f32.mrf.mxu0
      %v1702 = vadd.f32 0.0, %v1701
      %v1703 = vpop.f32.mrf.mxu0
      %1704 = vdwg.mxu0
      %v1705 = vadd.f32 %v1119, %v1579
      %v1706 = vadd.f32 %v1122, %v1582
      %v1707 = vadd.f32 %v1127, %v1587
      %v1708 = vadd.f32 %v1130, %v1590
      %v1709 = vadd.f32 %v1135, %v1595
      %v1710 = vadd.f32 %v1138, %v1598
      %v1711 = vadd.f32 %v1143, %v1603
      %v1712 = vadd.f32 %v1146, %v1606
      %v1713 = vadd.f32 %v1151, %v1611
      %v1714 = vadd.f32 %v1154, %v1614
      %v1715 = vadd.f32 %v1159, %v1619
      %v1716 = vadd.f32 %v1162, %v1622
      %v1717 = vadd.f32 %v1167, %v1627
      %v1718 = vadd.f32 %v1170, %v1630
      %v1719 = vadd.f32 %v1175, %v1635
      %v1720 = vadd.f32 %v1178, %v1638
      %v1721 = vadd.f32 %v1183, %v1643
      %v1722 = vadd.f32 %v1186, %v1646
      %v1723 = vadd.f32 %v1191, %v1651
      %v1724 = vadd.f32 %v1194, %v1654
      %v1725 = vadd.f32 %v1199, %v1659
      %v1726 = vadd.f32 %v1202, %v1662
      %v1727 = vadd.f32 %v1207, %v1667
      %v1728 = vadd.f32 %v1210, %v1670
      %v1729 = vadd.f32 %v1215, %v1675
      %v1730 = vadd.f32 %v1218, %v1678
      %v1731 = vadd.f32 %v1223, %v1683
      %v1732 = vadd.f32 %v1226, %v1686
      %v1733 = vadd.f32 %v1231, %v1691
      %v1734 = vadd.f32 %v1234, %v1694
      %v1735 = vadd.f32 %v1239, %v1699
      %v1736 = vadd.f32 %v1242, %v1702
      %s1737 = scalar_lea.vmem %s172, 12
      %v1738 = vld [vmem:[%s1737] sm:$0xf]
      %v1739 = vld [vmem:[%s1737 + $0x4] sm:$0xf]
      %v1740 = vld [vmem:[%s1737 + $0xc] sm:$0xf]
      %v1741 = vld [vmem:[%s1737 + $0x10] sm:$0xf]
      %v1742 = vld [vmem:[%s1737 + $0x18] sm:$0xf]
      %v1743 = vld [vmem:[%s1737 + $0x1c] sm:$0xf]
      %v1744 = vld [vmem:[%s1737 + $0x24] sm:$0xf]
      %v1745 = vld [vmem:[%s1737 + $0x28] sm:$0xf]
      %v1746 = vld [vmem:[%s1737 + $0x30] sm:$0xf]
      %v1747 = vld [vmem:[%s1737 + $0x34] sm:$0xf]
      %v1748 = vld [vmem:[%s1737 + $0x3c] sm:$0xf]
      %v1749 = vld [vmem:[%s1737 + $0x40] sm:$0xf]
      %v1750 = vld [vmem:[%s1737 + $0x48] sm:$0xf]
      %v1751 = vld [vmem:[%s1737 + $0x4c] sm:$0xf]
      %v1752 = vld [vmem:[%s1737 + $0x54] sm:$0xf]
      %v1753 = vld [vmem:[%s1737 + $0x58] sm:$0xf]
      %v1754 = vld [vmem:[%s1737 + $0x60] sm:$0xf]
      %v1755 = vld [vmem:[%s1737 + $0x64] sm:$0xf]
      %v1756 = vld [vmem:[%s1737 + $0x6c] sm:$0xf]
      %v1757 = vld [vmem:[%s1737 + $0x70] sm:$0xf]
      %v1758 = vld [vmem:[%s1737 + $0x78] sm:$0xf]
      %v1759 = vld [vmem:[%s1737 + $0x7c] sm:$0xf]
      %v1760 = vld [vmem:[%s1737 + $0x84] sm:$0xf]
      %v1761 = vld [vmem:[%s1737 + $0x88] sm:$0xf]
      %v1762 = vld [vmem:[%s1737 + $0x90] sm:$0xf]
      %v1763 = vld [vmem:[%s1737 + $0x94] sm:$0xf]
      %v1764 = vld [vmem:[%s1737 + $0x9c] sm:$0xf]
      %v1765 = vld [vmem:[%s1737 + $0xa0] sm:$0xf]
      %v1766 = vld [vmem:[%s1737 + $0xa8] sm:$0xf]
      %v1767 = vld [vmem:[%s1737 + $0xac] sm:$0xf]
      %v1768 = vld [vmem:[%s1737 + $0xb4] sm:$0xf]
      %v1769 = vld [vmem:[%s1737 + $0xb8] sm:$0xf]
      %s1770 = scalar_lea.vmem %s1, 108
      %v1771 = vld [vmem:[%s1770] sm:$0xf]
      %v1772 = vld [vmem:[%s1770 + $0x4] sm:$0xf]
      %v1773 = vld [vmem:[%s1770 + $0x8] sm:$0xf]
      %v1774 = vld [vmem:[%s1770 + $0xc] sm:$0xf]
      %v1775 = vld [vmem:[%s1770 + $0x10] sm:$0xf]
      %v1776 = vld [vmem:[%s1770 + $0x14] sm:$0xf]
      %v1777 = vld [vmem:[%s1770 + $0x18] sm:$0xf]
      %v1778 = vld [vmem:[%s1770 + $0x1c] sm:$0xf]
      %v1779 = vld [vmem:[%s1770 + $0x20] sm:$0xf]
      %v1812 = vunpack.c.l.b16 %v1738
      %v1813 = vunpack.c.l.b16 %v1739
      %v1814 = vunpack.c.l.b16 %v1740
      %v1815 = vunpack.c.l.b16 %v1741
      %v1816 = vunpack.c.l.b16 %v1742
      %v1817 = vunpack.c.l.b16 %v1743
      %v1818 = vunpack.c.l.b16 %v1744
      %v1819 = vunpack.c.l.b16 %v1745
      %v1820 = vunpack.c.l.b16 %v1746
      %v1821 = vunpack.c.l.b16 %v1747
      %v1822 = vunpack.c.l.b16 %v1748
      %v1823 = vunpack.c.l.b16 %v1749
      %v1824 = vunpack.c.l.b16 %v1750
      %v1825 = vunpack.c.l.b16 %v1751
      %v1826 = vunpack.c.l.b16 %v1752
      %v1827 = vunpack.c.l.b16 %v1753
      %v1828 = vunpack.c.l.b16 %v1754
      %v1829 = vunpack.c.l.b16 %v1755
      %v1830 = vunpack.c.l.b16 %v1756
      %v1831 = vunpack.c.l.b16 %v1757
      %v1832 = vunpack.c.l.b16 %v1758
      %v1833 = vunpack.c.l.b16 %v1759
      %v1834 = vunpack.c.l.b16 %v1760
      %v1835 = vunpack.c.l.b16 %v1761
      %v1836 = vunpack.c.l.b16 %v1762
      %v1837 = vunpack.c.l.b16 %v1763
      %v1838 = vunpack.c.l.b16 %v1764
      %v1839 = vunpack.c.l.b16 %v1765
      %v1840 = vunpack.c.l.b16 %v1766
      %v1841 = vunpack.c.l.b16 %v1767
      %v1842 = vunpack.c.l.b16 %v1768
      %v1843 = vunpack.c.l.b16 %v1769
      %v1844 = vpack.c.b16 %v1813, %v1812
      %v1845 = vpack.c.b16 %v1815, %v1814
      %v1846 = vpack.c.b16 %v1817, %v1816
      %v1847 = vpack.c.b16 %v1819, %v1818
      %v1848 = vpack.c.b16 %v1821, %v1820
      %v1849 = vpack.c.b16 %v1823, %v1822
      %v1850 = vpack.c.b16 %v1825, %v1824
      %v1851 = vpack.c.b16 %v1827, %v1826
      %v1852 = vpack.c.b16 %v1829, %v1828
      %v1853 = vpack.c.b16 %v1831, %v1830
      %v1854 = vpack.c.b16 %v1833, %v1832
      %v1855 = vpack.c.b16 %v1835, %v1834
      %v1856 = vpack.c.b16 %v1837, %v1836
      %v1857 = vpack.c.b16 %v1839, %v1838
      %v1858 = vpack.c.b16 %v1841, %v1840
      %v1859 = vpack.c.b16 %v1843, %v1842
      %v1869 = vunpack.c.l.b16 %v1771
      %v1870 = vunpack.c.l.b16 %v1772
      %v1871 = vunpack.c.l.b16 %v1773
      %v1872 = vunpack.c.l.b16 %v1774
      %v1873 = vunpack.c.l.b16 %v1775
      %v1874 = vunpack.c.l.b16 %v1776
      %v1875 = vunpack.c.l.b16 %v1777
      %v1876 = vunpack.c.l.b16 %v1778
      %v1877 = vunpack.c.l.b16 %v1779
      %v1878 = vpack.c.b16 %v1870, %v1869
      %v1879 = vpack.c.b16 %v1872, %v1871
      %v1880 = vpack.c.b16 %v1874, %v1873
      %v1881 = vpack.c.b16 %v1876, %v1875
      %v1882 = vpack.c.b16 %v1877, %v1877
      %v1888 = vsel %vm712, %v1844, 0
      %v1891 = vsel %vm712, %v1845, 0
      %v1894 = vsel %vm712, %v1846, 0
      %v1897 = vsel %vm712, %v1847, 0
      %v1900 = vsel %vm712, %v1848, 0
      %v1903 = vsel %vm712, %v1849, 0
      %v1906 = vsel %vm712, %v1850, 0
      %v1909 = vsel %vm712, %v1851, 0
      %v1912 = vsel %vm712, %v1852, 0
      %v1915 = vsel %vm712, %v1853, 0
      %v1918 = vsel %vm712, %v1854, 0
      %v1921 = vsel %vm712, %v1855, 0
      %v1924 = vsel %vm712, %v1856, 0
      %v1927 = vsel %vm712, %v1857, 0
      %v1930 = vsel %vm712, %v1858, 0
      %v1933 = vsel %vm712, %v1859, 0
      %v1936 = vsel %vm761, %v1882, 0
      %1938 = vmatprep.subr.bf16.mxu0 0
      %1939 = vmatpush1.bf16.msra.mxu0 0
      %1940 = vmatprep.subr.bf16.mxu0 0
      %1941 = vmatpush1.bf16.msra.mxu0 0
      %1942 = vmatprep.subr.bf16.mxu0 0
      %1943 = vmatpush1.bf16.msra.mxu0 0
      %1944 = vmatprep.subr.bf16.mxu0 0
      %1945 = vmatpush1.bf16.msra.mxu0 %v1936
      %1946 = vmatprep.subr.bf16.mxu0 0
      %1947 = vmatpush1.bf16.msra.mxu0 %v1881
      %1948 = vmatprep.subr.bf16.mxu0 0
      %1949 = vmatpush1.bf16.msra.mxu0 %v1880
      %1950 = vmatprep.subr.bf16.mxu0 0
      %1951 = vmatpush1.bf16.msra.mxu0 %v1879
      %1952 = vmatprep.subr.bf16.mxu0 0
      %1953 = vmatpush1.bf16.msra.mxu0 %v1878
      %1954 = vmatprep.subr.bf16.mxu0 0
      %1955 = vmatpush2.bf16.msra.mxu0 0
      %1956 = vmatprep.subr.bf16.mxu0 0
      %1957 = vmatpush2.bf16.msra.mxu0 0
      %1958 = vmatprep.subr.bf16.mxu0 0
      %1959 = vmatpush2.bf16.msra.mxu0 0
      %1960 = vmatprep.subr.bf16.mxu0 0
      %1961 = vmatpush2.bf16.msra.mxu0 0
      %1962 = vmatprep.subr.bf16.mxu0 0
      %1963 = vmatpush2.bf16.msra.mxu0 0
      %1964 = vmatprep.subr.bf16.mxu0 0
      %1965 = vmatpush2.bf16.msra.mxu0 0
      %1966 = vmatprep.subr.bf16.mxu0 0
      %1967 = vmatpush2.bf16.msra.mxu0 0
      %1968 = vmatprep.subr.bf16.mxu0 0
      %1969 = vmatpush2.bf16.msra.mxu0 0
      %1970 = vmatprep.mubr.bf16.mxu0 0
      %1971 = vmatmul.mubr.bf16.gmra.mxu0 %v1888
      %v1972 = vpop.f32.mrf.mxu0
      %v1973 = vadd.f32 0.0, %v1972
      %v1974 = vpop.f32.mrf.mxu0
      %v1975 = vpop.f32.mrf.mxu0
      %v1976 = vadd.f32 0.0, %v1975
      %v1977 = vpop.f32.mrf.mxu0
      %1978 = vmatprep.mubr.bf16.mxu0 0
      %1979 = vmatmul.mubr.bf16.gmra.mxu0 %v1891
      %v1980 = vpop.f32.mrf.mxu0
      %v1981 = vadd.f32 0.0, %v1980
      %v1982 = vpop.f32.mrf.mxu0
      %v1983 = vpop.f32.mrf.mxu0
      %v1984 = vadd.f32 0.0, %v1983
      %v1985 = vpop.f32.mrf.mxu0
      %1986 = vmatprep.mubr.bf16.mxu0 0
      %1987 = vmatmul.mubr.bf16.gmra.mxu0 %v1894
      %v1988 = vpop.f32.mrf.mxu0
      %v1989 = vadd.f32 0.0, %v1988
      %v1990 = vpop.f32.mrf.mxu0
      %v1991 = vpop.f32.mrf.mxu0
      %v1992 = vadd.f32 0.0, %v1991
      %v1993 = vpop.f32.mrf.mxu0
      %1994 = vmatprep.mubr.bf16.mxu0 0
      %1995 = vmatmul.mubr.bf16.gmra.mxu0 %v1897
      %v1996 = vpop.f32.mrf.mxu0
      %v1997 = vadd.f32 0.0, %v1996
      %v1998 = vpop.f32.mrf.mxu0
      %v1999 = vpop.f32.mrf.mxu0
      %v2000 = vadd.f32 0.0, %v1999
      %v2001 = vpop.f32.mrf.mxu0
      %2002 = vmatprep.mubr.bf16.mxu0 0
      %2003 = vmatmul.mubr.bf16.gmra.mxu0 %v1900
      %v2004 = vpop.f32.mrf.mxu0
      %v2005 = vadd.f32 0.0, %v2004
      %v2006 = vpop.f32.mrf.mxu0
      %v2007 = vpop.f32.mrf.mxu0
      %v2008 = vadd.f32 0.0, %v2007
      %v2009 = vpop.f32.mrf.mxu0
      %2010 = vmatprep.mubr.bf16.mxu0 0
      %2011 = vmatmul.mubr.bf16.gmra.mxu0 %v1903
      %v2012 = vpop.f32.mrf.mxu0
      %v2013 = vadd.f32 0.0, %v2012
      %v2014 = vpop.f32.mrf.mxu0
      %v2015 = vpop.f32.mrf.mxu0
      %v2016 = vadd.f32 0.0, %v2015
      %v2017 = vpop.f32.mrf.mxu0
      %2018 = vmatprep.mubr.bf16.mxu0 0
      %2019 = vmatmul.mubr.bf16.gmra.mxu0 %v1906
      %v2020 = vpop.f32.mrf.mxu0
      %v2021 = vadd.f32 0.0, %v2020
      %v2022 = vpop.f32.mrf.mxu0
      %v2023 = vpop.f32.mrf.mxu0
      %v2024 = vadd.f32 0.0, %v2023
      %v2025 = vpop.f32.mrf.mxu0
      %2026 = vmatprep.mubr.bf16.mxu0 0
      %2027 = vmatmul.mubr.bf16.gmra.mxu0 %v1909
      %v2028 = vpop.f32.mrf.mxu0
      %v2029 = vadd.f32 0.0, %v2028
      %v2030 = vpop.f32.mrf.mxu0
      %v2031 = vpop.f32.mrf.mxu0
      %v2032 = vadd.f32 0.0, %v2031
      %v2033 = vpop.f32.mrf.mxu0
      %2034 = vmatprep.mubr.bf16.mxu0 0
      %2035 = vmatmul.mubr.bf16.gmra.mxu0 %v1912
      %v2036 = vpop.f32.mrf.mxu0
      %v2037 = vadd.f32 0.0, %v2036
      %v2038 = vpop.f32.mrf.mxu0
      %v2039 = vpop.f32.mrf.mxu0
      %v2040 = vadd.f32 0.0, %v2039
      %v2041 = vpop.f32.mrf.mxu0
      %2042 = vmatprep.mubr.bf16.mxu0 0
      %2043 = vmatmul.mubr.bf16.gmra.mxu0 %v1915
      %v2044 = vpop.f32.mrf.mxu0
      %v2045 = vadd.f32 0.0, %v2044
      %v2046 = vpop.f32.mrf.mxu0
      %v2047 = vpop.f32.mrf.mxu0
      %v2048 = vadd.f32 0.0, %v2047
      %v2049 = vpop.f32.mrf.mxu0
      %2050 = vmatprep.mubr.bf16.mxu0 0
      %2051 = vmatmul.mubr.bf16.gmra.mxu0 %v1918
      %v2052 = vpop.f32.mrf.mxu0
      %v2053 = vadd.f32 0.0, %v2052
      %v2054 = vpop.f32.mrf.mxu0
      %v2055 = vpop.f32.mrf.mxu0
      %v2056 = vadd.f32 0.0, %v2055
      %v2057 = vpop.f32.mrf.mxu0
      %2058 = vmatprep.mubr.bf16.mxu0 0
      %2059 = vmatmul.mubr.bf16.gmra.mxu0 %v1921
      %v2060 = vpop.f32.mrf.mxu0
      %v2061 = vadd.f32 0.0, %v2060
      %v2062 = vpop.f32.mrf.mxu0
      %v2063 = vpop.f32.mrf.mxu0
      %v2064 = vadd.f32 0.0, %v2063
      %v2065 = vpop.f32.mrf.mxu0
      %2066 = vmatprep.mubr.bf16.mxu0 0
      %2067 = vmatmul.mubr.bf16.gmra.mxu0 %v1924
      %v2068 = vpop.f32.mrf.mxu0
      %v2069 = vadd.f32 0.0, %v2068
      %v2070 = vpop.f32.mrf.mxu0
      %v2071 = vpop.f32.mrf.mxu0
      %v2072 = vadd.f32 0.0, %v2071
      %v2073 = vpop.f32.mrf.mxu0
      %2074 = vmatprep.mubr.bf16.mxu0 0
      %2075 = vmatmul.mubr.bf16.gmra.mxu0 %v1927
      %v2076 = vpop.f32.mrf.mxu0
      %v2077 = vadd.f32 0.0, %v2076
      %v2078 = vpop.f32.mrf.mxu0
      %v2079 = vpop.f32.mrf.mxu0
      %v2080 = vadd.f32 0.0, %v2079
      %v2081 = vpop.f32.mrf.mxu0
      %2082 = vmatprep.mubr.bf16.mxu0 0
      %2083 = vmatmul.mubr.bf16.gmra.mxu0 %v1930
      %v2084 = vpop.f32.mrf.mxu0
      %v2085 = vadd.f32 0.0, %v2084
      %v2086 = vpop.f32.mrf.mxu0
      %v2087 = vpop.f32.mrf.mxu0
      %v2088 = vadd.f32 0.0, %v2087
      %v2089 = vpop.f32.mrf.mxu0
      %2090 = vmatprep.mubr.bf16.mxu0 0
      %2091 = vmatmul.mubr.bf16.gmra.mxu0 %v1933
      %v2092 = vpop.f32.mrf.mxu0
      %v2093 = vadd.f32 0.0, %v2092
      %v2094 = vpop.f32.mrf.mxu0
      %v2095 = vpop.f32.mrf.mxu0
      %v2096 = vadd.f32 0.0, %v2095
      %v2097 = vpop.f32.mrf.mxu0
      %2098 = vdwg.mxu0
      %v2099 = vadd.f32 %v1705, %v1973
      %v2100 = vadd.f32 %v1706, %v1976
      %v2101 = vadd.f32 %v1707, %v1981
      %v2102 = vadd.f32 %v1708, %v1984
      %v2103 = vadd.f32 %v1709, %v1989
      %v2104 = vadd.f32 %v1710, %v1992
      %v2105 = vadd.f32 %v1711, %v1997
      %v2106 = vadd.f32 %v1712, %v2000
      %v2107 = vadd.f32 %v1713, %v2005
      %v2108 = vadd.f32 %v1714, %v2008
      %v2109 = vadd.f32 %v1715, %v2013
      %v2110 = vadd.f32 %v1716, %v2016
      %v2111 = vadd.f32 %v1717, %v2021
      %v2112 = vadd.f32 %v1718, %v2024
      %v2113 = vadd.f32 %v1719, %v2029
      %v2114 = vadd.f32 %v1720, %v2032
      %v2115 = vadd.f32 %v1721, %v2037
      %v2116 = vadd.f32 %v1722, %v2040
      %v2117 = vadd.f32 %v1723, %v2045
      %v2118 = vadd.f32 %v1724, %v2048
      %v2119 = vadd.f32 %v1725, %v2053
      %v2120 = vadd.f32 %v1726, %v2056
      %v2121 = vadd.f32 %v1727, %v2061
      %v2122 = vadd.f32 %v1728, %v2064
      %v2123 = vadd.f32 %v1729, %v2069
      %v2124 = vadd.f32 %v1730, %v2072
      %v2125 = vadd.f32 %v1731, %v2077
      %v2126 = vadd.f32 %v1732, %v2080
      %v2127 = vadd.f32 %v1733, %v2085
      %v2128 = vadd.f32 %v1734, %v2088
      %v2129 = vadd.f32 %v1735, %v2093
      %v2130 = vadd.f32 %v1736, %v2096
      %v2131 = vld [vmem:[%s1737] sm:$0xf]
      %v2132 = vld [vmem:[%s1737 + $0x4] sm:$0xf]
      %v2133 = vld [vmem:[%s1737 + $0x8] sm:$0x1]
      %v2134 = vld [vmem:[%s1737 + $0xc] sm:$0xf]
      %v2135 = vld [vmem:[%s1737 + $0x10] sm:$0xf]
      %v2136 = vld [vmem:[%s1737 + $0x14] sm:$0x1]
      %v2137 = vld [vmem:[%s1737 + $0x18] sm:$0xf]
      %v2138 = vld [vmem:[%s1737 + $0x1c] sm:$0xf]
      %v2139 = vld [vmem:[%s1737 + $0x20] sm:$0x1]
      %v2140 = vld [vmem:[%s1737 + $0x24] sm:$0xf]
      %v2141 = vld [vmem:[%s1737 + $0x28] sm:$0xf]
      %v2142 = vld [vmem:[%s1737 + $0x2c] sm:$0x1]
      %v2143 = vld [vmem:[%s1737 + $0x30] sm:$0xf]
      %v2144 = vld [vmem:[%s1737 + $0x34] sm:$0xf]
      %v2145 = vld [vmem:[%s1737 + $0x38] sm:$0x1]
      %v2146 = vld [vmem:[%s1737 + $0x3c] sm:$0xf]
      %v2147 = vld [vmem:[%s1737 + $0x40] sm:$0xf]
      %v2148 = vld [vmem:[%s1737 + $0x44] sm:$0x1]
      %v2149 = vld [vmem:[%s1737 + $0x48] sm:$0xf]
      %v2150 = vld [vmem:[%s1737 + $0x4c] sm:$0xf]
      %v2151 = vld [vmem:[%s1737 + $0x50] sm:$0x1]
      %v2152 = vld [vmem:[%s1737 + $0x54] sm:$0xf]
      %v2153 = vld [vmem:[%s1737 + $0x58] sm:$0xf]
      %v2154 = vld [vmem:[%s1737 + $0x5c] sm:$0x1]
      %v2155 = vld [vmem:[%s1737 + $0x60] sm:$0xf]
      %v2156 = vld [vmem:[%s1737 + $0x64] sm:$0xf]
      %v2157 = vld [vmem:[%s1737 + $0x68] sm:$0x1]
      %v2158 = vld [vmem:[%s1737 + $0x6c] sm:$0xf]
      %v2159 = vld [vmem:[%s1737 + $0x70] sm:$0xf]
      %v2160 = vld [vmem:[%s1737 + $0x74] sm:$0x1]
      %v2161 = vld [vmem:[%s1737 + $0x78] sm:$0xf]
      %v2162 = vld [vmem:[%s1737 + $0x7c] sm:$0xf]
      %v2163 = vld [vmem:[%s1737 + $0x80] sm:$0x1]
      %v2164 = vld [vmem:[%s1737 + $0x84] sm:$0xf]
      %v2165 = vld [vmem:[%s1737 + $0x88] sm:$0xf]
      %v2166 = vld [vmem:[%s1737 + $0x8c] sm:$0x1]
      %v2167 = vld [vmem:[%s1737 + $0x90] sm:$0xf]
      %v2168 = vld [vmem:[%s1737 + $0x94] sm:$0xf]
      %v2169 = vld [vmem:[%s1737 + $0x98] sm:$0x1]
      %v2170 = vld [vmem:[%s1737 + $0x9c] sm:$0xf]
      %v2171 = vld [vmem:[%s1737 + $0xa0] sm:$0xf]
      %v2172 = vld [vmem:[%s1737 + $0xa4] sm:$0x1]
      %v2173 = vld [vmem:[%s1737 + $0xa8] sm:$0xf]
      %v2174 = vld [vmem:[%s1737 + $0xac] sm:$0xf]
      %v2175 = vld [vmem:[%s1737 + $0xb0] sm:$0x1]
      %v2176 = vld [vmem:[%s1737 + $0xb4] sm:$0xf]
      %v2177 = vld [vmem:[%s1737 + $0xb8] sm:$0xf]
      %v2178 = vld [vmem:[%s1737 + $0xbc] sm:$0x1]
      %v2180 = vshrl.u32 %v2131, 16
      %v2182 = vrot.slane %v2180, 4
      %v2183 = vshll.u32 %v2131, 16
      %v2185 = vrot.slane %v2183, 5
      %v2186 = vor.u32 %v2182, %v2185
      %v2187 = vrot.slane %v2186, 4
      %v2189 = vshll.u32 %v2132, 16
      %v2191 = vrot.slane %v2189, 5
      %v2192 = vsel %vm242, %v2187, %v2191
      %v2193 = vshrl.u32 %v2132, 16
      %v2195 = vrot.slane %v2193, 4
      %v2196 = vor.u32 %v2195, %v2191
      %v2197 = vrot.slane %v2196, 4
      %v2199 = vshll.u32 %v2133, 16
      %v2201 = vrot.slane %v2199, 5
      %v2202 = vsel %vm242, %v2197, %v2201
      %v2204 = vshrl.u32 %v2134, 16
      %v2206 = vrot.slane %v2204, 4
      %v2207 = vshll.u32 %v2134, 16
      %v2209 = vrot.slane %v2207, 5
      %v2210 = vor.u32 %v2206, %v2209
      %v2211 = vrot.slane %v2210, 4
      %v2213 = vshll.u32 %v2135, 16
      %v2215 = vrot.slane %v2213, 5
      %v2216 = vsel %vm242, %v2211, %v2215
      %v2217 = vshrl.u32 %v2135, 16
      %v2219 = vrot.slane %v2217, 4
      %v2220 = vor.u32 %v2219, %v2215
      %v2221 = vrot.slane %v2220, 4
      %v2223 = vshll.u32 %v2136, 16
      %v2225 = vrot.slane %v2223, 5
      %v2226 = vsel %vm242, %v2221, %v2225
      %v2228 = vshrl.u32 %v2137, 16
      %v2230 = vrot.slane %v2228, 4
      %v2231 = vshll.u32 %v2137, 16
      %v2233 = vrot.slane %v2231, 5
      %v2234 = vor.u32 %v2230, %v2233
      %v2235 = vrot.slane %v2234, 4
      %v2237 = vshll.u32 %v2138, 16
      %v2239 = vrot.slane %v2237, 5
      %v2240 = vsel %vm242, %v2235, %v2239
      %v2241 = vshrl.u32 %v2138, 16
      %v2243 = vrot.slane %v2241, 4
      %v2244 = vor.u32 %v2243, %v2239
      %v2245 = vrot.slane %v2244, 4
      %v2247 = vshll.u32 %v2139, 16
      %v2249 = vrot.slane %v2247, 5
      %v2250 = vsel %vm242, %v2245, %v2249
      %v2252 = vshrl.u32 %v2140, 16
      %v2254 = vrot.slane %v2252, 4
      %v2255 = vshll.u32 %v2140, 16
      %v2257 = vrot.slane %v2255, 5
      %v2258 = vor.u32 %v2254, %v2257
      %v2259 = vrot.slane %v2258, 4
      %v2261 = vshll.u32 %v2141, 16
      %v2263 = vrot.slane %v2261, 5
      %v2264 = vsel %vm242, %v2259, %v2263
      %v2265 = vshrl.u32 %v2141, 16
      %v2267 = vrot.slane %v2265, 4
      %v2268 = vor.u32 %v2267, %v2263
      %v2269 = vrot.slane %v2268, 4
      %v2271 = vshll.u32 %v2142, 16
      %v2273 = vrot.slane %v2271, 5
      %v2274 = vsel %vm242, %v2269, %v2273
      %v2276 = vshrl.u32 %v2143, 16
      %v2278 = vrot.slane %v2276, 4
      %v2279 = vshll.u32 %v2143, 16
      %v2281 = vrot.slane %v2279, 5
      %v2282 = vor.u32 %v2278, %v2281
      %v2283 = vrot.slane %v2282, 4
      %v2285 = vshll.u32 %v2144, 16
      %v2287 = vrot.slane %v2285, 5
      %v2288 = vsel %vm242, %v2283, %v2287
      %v2289 = vshrl.u32 %v2144, 16
      %v2291 = vrot.slane %v2289, 4
      %v2292 = vor.u32 %v2291, %v2287
      %v2293 = vrot.slane %v2292, 4
      %v2295 = vshll.u32 %v2145, 16
      %v2297 = vrot.slane %v2295, 5
      %v2298 = vsel %vm242, %v2293, %v2297
      %v2300 = vshrl.u32 %v2146, 16
      %v2302 = vrot.slane %v2300, 4
      %v2303 = vshll.u32 %v2146, 16
      %v2305 = vrot.slane %v2303, 5
      %v2306 = vor.u32 %v2302, %v2305
      %v2307 = vrot.slane %v2306, 4
      %v2309 = vshll.u32 %v2147, 16
      %v2311 = vrot.slane %v2309, 5
      %v2312 = vsel %vm242, %v2307, %v2311
      %v2313 = vshrl.u32 %v2147, 16
      %v2315 = vrot.slane %v2313, 4
      %v2316 = vor.u32 %v2315, %v2311
      %v2317 = vrot.slane %v2316, 4
      %v2319 = vshll.u32 %v2148, 16
      %v2321 = vrot.slane %v2319, 5
      %v2322 = vsel %vm242, %v2317, %v2321
      %v2324 = vshrl.u32 %v2149, 16
      %v2326 = vrot.slane %v2324, 4
      %v2327 = vshll.u32 %v2149, 16
      %v2329 = vrot.slane %v2327, 5
      %v2330 = vor.u32 %v2326, %v2329
      %v2331 = vrot.slane %v2330, 4
      %v2333 = vshll.u32 %v2150, 16
      %v2335 = vrot.slane %v2333, 5
      %v2336 = vsel %vm242, %v2331, %v2335
      %v2337 = vshrl.u32 %v2150, 16
      %v2339 = vrot.slane %v2337, 4
      %v2340 = vor.u32 %v2339, %v2335
      %v2341 = vrot.slane %v2340, 4
      %v2343 = vshll.u32 %v2151, 16
      %v2345 = vrot.slane %v2343, 5
      %v2346 = vsel %vm242, %v2341, %v2345
      %v2348 = vshrl.u32 %v2152, 16
      %v2350 = vrot.slane %v2348, 4
      %v2351 = vshll.u32 %v2152, 16
      %v2353 = vrot.slane %v2351, 5
      %v2354 = vor.u32 %v2350, %v2353
      %v2355 = vrot.slane %v2354, 4
      %v2357 = vshll.u32 %v2153, 16
      %v2359 = vrot.slane %v2357, 5
      %v2360 = vsel %vm242, %v2355, %v2359
      %v2361 = vshrl.u32 %v2153, 16
      %v2363 = vrot.slane %v2361, 4
      %v2364 = vor.u32 %v2363, %v2359
      %v2365 = vrot.slane %v2364, 4
      %v2367 = vshll.u32 %v2154, 16
      %v2369 = vrot.slane %v2367, 5
      %v2370 = vsel %vm242, %v2365, %v2369
      %v2372 = vshrl.u32 %v2155, 16
      %v2374 = vrot.slane %v2372, 4
      %v2375 = vshll.u32 %v2155, 16
      %v2377 = vrot.slane %v2375, 5
      %v2378 = vor.u32 %v2374, %v2377
      %v2379 = vrot.slane %v2378, 4
      %v2381 = vshll.u32 %v2156, 16
      %v2383 = vrot.slane %v2381, 5
      %v2384 = vsel %vm242, %v2379, %v2383
      %v2385 = vshrl.u32 %v2156, 16
      %v2387 = vrot.slane %v2385, 4
      %v2388 = vor.u32 %v2387, %v2383
      %v2389 = vrot.slane %v2388, 4
      %v2391 = vshll.u32 %v2157, 16
      %v2393 = vrot.slane %v2391, 5
      %v2394 = vsel %vm242, %v2389, %v2393
      %v2396 = vshrl.u32 %v2158, 16
      %v2398 = vrot.slane %v2396, 4
      %v2399 = vshll.u32 %v2158, 16
      %v2401 = vrot.slane %v2399, 5
      %v2402 = vor.u32 %v2398, %v2401
      %v2403 = vrot.slane %v2402, 4
      %v2405 = vshll.u32 %v2159, 16
      %v2407 = vrot.slane %v2405, 5
      %v2408 = vsel %vm242, %v2403, %v2407
      %v2409 = vshrl.u32 %v2159, 16
      %v2411 = vrot.slane %v2409, 4
      %v2412 = vor.u32 %v2411, %v2407
      %v2413 = vrot.slane %v2412, 4
      %v2415 = vshll.u32 %v2160, 16
      %v2417 = vrot.slane %v2415, 5
      %v2418 = vsel %vm242, %v2413, %v2417
      %v2420 = vshrl.u32 %v2161, 16
      %v2422 = vrot.slane %v2420, 4
      %v2423 = vshll.u32 %v2161, 16
      %v2425 = vrot.slane %v2423, 5
      %v2426 = vor.u32 %v2422, %v2425
      %v2427 = vrot.slane %v2426, 4
      %v2429 = vshll.u32 %v2162, 16
      %v2431 = vrot.slane %v2429, 5
      %v2432 = vsel %vm242, %v2427, %v2431
      %v2433 = vshrl.u32 %v2162, 16
      %v2435 = vrot.slane %v2433, 4
      %v2436 = vor.u32 %v2435, %v2431
      %v2437 = vrot.slane %v2436, 4
      %v2439 = vshll.u32 %v2163, 16
      %v2441 = vrot.slane %v2439, 5
      %v2442 = vsel %vm242, %v2437, %v2441
      %v2444 = vshrl.u32 %v2164, 16
      %v2446 = vrot.slane %v2444, 4
      %v2447 = vshll.u32 %v2164, 16
      %v2449 = vrot.slane %v2447, 5
      %v2450 = vor.u32 %v2446, %v2449
      %v2451 = vrot.slane %v2450, 4
      %v2453 = vshll.u32 %v2165, 16
      %v2455 = vrot.slane %v2453, 5
      %v2456 = vsel %vm242, %v2451, %v2455
      %v2457 = vshrl.u32 %v2165, 16
      %v2459 = vrot.slane %v2457, 4
      %v2460 = vor.u32 %v2459, %v2455
      %v2461 = vrot.slane %v2460, 4
      %v2463 = vshll.u32 %v2166, 16
      %v2465 = vrot.slane %v2463, 5
      %v2466 = vsel %vm242, %v2461, %v2465
      %v2468 = vshrl.u32 %v2167, 16
      %v2470 = vrot.slane %v2468, 4
      %v2471 = vshll.u32 %v2167, 16
      %v2473 = vrot.slane %v2471, 5
      %v2474 = vor.u32 %v2470, %v2473
      %v2475 = vrot.slane %v2474, 4
      %v2477 = vshll.u32 %v2168, 16
      %v2479 = vrot.slane %v2477, 5
      %v2480 = vsel %vm242, %v2475, %v2479
      %v2481 = vshrl.u32 %v2168, 16
      %v2483 = vrot.slane %v2481, 4
      %v2484 = vor.u32 %v2483, %v2479
      %v2485 = vrot.slane %v2484, 4
      %v2487 = vshll.u32 %v2169, 16
      %v2489 = vrot.slane %v2487, 5
      %v2490 = vsel %vm242, %v2485, %v2489
      %v2492 = vshrl.u32 %v2170, 16
      %v2494 = vrot.slane %v2492, 4
      %v2495 = vshll.u32 %v2170, 16
      %v2497 = vrot.slane %v2495, 5
      %v2498 = vor.u32 %v2494, %v2497
      %v2499 = vrot.slane %v2498, 4
      %v2501 = vshll.u32 %v2171, 16
      %v2503 = vrot.slane %v2501, 5
      %v2504 = vsel %vm242, %v2499, %v2503
      %v2505 = vshrl.u32 %v2171, 16
      %v2507 = vrot.slane %v2505, 4
      %v2508 = vor.u32 %v2507, %v2503
      %v2509 = vrot.slane %v2508, 4
      %v2511 = vshll.u32 %v2172, 16
      %v2513 = vrot.slane %v2511, 5
      %v2514 = vsel %vm242, %v2509, %v2513
      %v2516 = vshrl.u32 %v2173, 16
      %v2518 = vrot.slane %v2516, 4
      %v2519 = vshll.u32 %v2173, 16
      %v2521 = vrot.slane %v2519, 5
      %v2522 = vor.u32 %v2518, %v2521
      %v2523 = vrot.slane %v2522, 4
      %v2525 = vshll.u32 %v2174, 16
      %v2527 = vrot.slane %v2525, 5
      %v2528 = vsel %vm242, %v2523, %v2527
      %v2529 = vshrl.u32 %v2174, 16
      %v2531 = vrot.slane %v2529, 4
      %v2532 = vor.u32 %v2531, %v2527
      %v2533 = vrot.slane %v2532, 4
      %v2535 = vshll.u32 %v2175, 16
      %v2537 = vrot.slane %v2535, 5
      %v2538 = vsel %vm242, %v2533, %v2537
      %v2540 = vshrl.u32 %v2176, 16
      %v2542 = vrot.slane %v2540, 4
      %v2543 = vshll.u32 %v2176, 16
      %v2545 = vrot.slane %v2543, 5
      %v2546 = vor.u32 %v2542, %v2545
      %v2547 = vrot.slane %v2546, 4
      %v2549 = vshll.u32 %v2177, 16
      %v2551 = vrot.slane %v2549, 5
      %v2552 = vsel %vm242, %v2547, %v2551
      %v2553 = vshrl.u32 %v2177, 16
      %v2555 = vrot.slane %v2553, 4
      %v2556 = vor.u32 %v2555, %v2551
      %v2557 = vrot.slane %v2556, 4
      %v2559 = vshll.u32 %v2178, 16
      %v2561 = vrot.slane %v2559, 5
      %v2562 = vsel %vm242, %v2557, %v2561
      %s2563 = scalar_lea.vmem %s1, 144
      %v2564 = vld [vmem:[%s2563] sm:$0xf]
      %v2565 = vld [vmem:[%s2563 + $0x4] sm:$0xf]
      %v2566 = vld [vmem:[%s2563 + $0x8] sm:$0xf]
      %v2567 = vld [vmem:[%s2563 + $0xc] sm:$0xf]
      %v2568 = vld [vmem:[%s2563 + $0x10] sm:$0xf]
      %v2569 = vld [vmem:[%s2563 + $0x14] sm:$0xf]
      %v2570 = vld [vmem:[%s2563 + $0x18] sm:$0xf]
      %v2571 = vld [vmem:[%s2563 + $0x1c] sm:$0xf]
      %v2572 = vld [vmem:[%s2563 + $0x20] sm:$0xf]
      %v2573 = vunpack.c.l.b16 %v2192
      %v2574 = vunpack.c.l.b16 %v2202
      %v2575 = vunpack.c.l.b16 %v2216
      %v2576 = vunpack.c.l.b16 %v2226
      %v2577 = vunpack.c.l.b16 %v2240
      %v2578 = vunpack.c.l.b16 %v2250
      %v2579 = vunpack.c.l.b16 %v2264
      %v2580 = vunpack.c.l.b16 %v2274
      %v2581 = vunpack.c.l.b16 %v2288
      %v2582 = vunpack.c.l.b16 %v2298
      %v2583 = vunpack.c.l.b16 %v2312
      %v2584 = vunpack.c.l.b16 %v2322
      %v2585 = vunpack.c.l.b16 %v2336
      %v2586 = vunpack.c.l.b16 %v2346
      %v2587 = vunpack.c.l.b16 %v2360
      %v2588 = vunpack.c.l.b16 %v2370
      %v2589 = vunpack.c.l.b16 %v2384
      %v2590 = vunpack.c.l.b16 %v2394
      %v2591 = vunpack.c.l.b16 %v2408
      %v2592 = vunpack.c.l.b16 %v2418
      %v2593 = vunpack.c.l.b16 %v2432
      %v2594 = vunpack.c.l.b16 %v2442
      %v2595 = vunpack.c.l.b16 %v2456
      %v2596 = vunpack.c.l.b16 %v2466
      %v2597 = vunpack.c.l.b16 %v2480
      %v2598 = vunpack.c.l.b16 %v2490
      %v2599 = vunpack.c.l.b16 %v2504
      %v2600 = vunpack.c.l.b16 %v2514
      %v2601 = vunpack.c.l.b16 %v2528
      %v2602 = vunpack.c.l.b16 %v2538
      %v2603 = vunpack.c.l.b16 %v2552
      %v2604 = vunpack.c.l.b16 %v2562
      %v2605 = vpack.c.b16 %v2574, %v2573
      %v2606 = vpack.c.b16 %v2576, %v2575
      %v2607 = vpack.c.b16 %v2578, %v2577
      %v2608 = vpack.c.b16 %v2580, %v2579
      %v2609 = vpack.c.b16 %v2582, %v2581
      %v2610 = vpack.c.b16 %v2584, %v2583
      %v2611 = vpack.c.b16 %v2586, %v2585
      %v2612 = vpack.c.b16 %v2588, %v2587
      %v2613 = vpack.c.b16 %v2590, %v2589
      %v2614 = vpack.c.b16 %v2592, %v2591
      %v2615 = vpack.c.b16 %v2594, %v2593
      %v2616 = vpack.c.b16 %v2596, %v2595
      %v2617 = vpack.c.b16 %v2598, %v2597
      %v2618 = vpack.c.b16 %v2600, %v2599
      %v2619 = vpack.c.b16 %v2602, %v2601
      %v2620 = vpack.c.b16 %v2604, %v2603
      %v2630 = vunpack.c.l.b16 %v2564
      %v2631 = vunpack.c.l.b16 %v2565
      %v2632 = vunpack.c.l.b16 %v2566
      %v2633 = vunpack.c.l.b16 %v2567
      %v2634 = vunpack.c.l.b16 %v2568
      %v2635 = vunpack.c.l.b16 %v2569
      %v2636 = vunpack.c.l.b16 %v2570
      %v2637 = vunpack.c.l.b16 %v2571
      %v2638 = vunpack.c.l.b16 %v2572
      %v2639 = vpack.c.b16 %v2631, %v2630
      %v2640 = vpack.c.b16 %v2633, %v2632
      %v2641 = vpack.c.b16 %v2635, %v2634
      %v2642 = vpack.c.b16 %v2637, %v2636
      %v2643 = vpack.c.b16 %v2638, %v2638
      %v2649 = vsel %vm712, %v2605, 0
      %v2652 = vsel %vm712, %v2606, 0
      %v2655 = vsel %vm712, %v2607, 0
      %v2658 = vsel %vm712, %v2608, 0
      %v2661 = vsel %vm712, %v2609, 0
      %v2664 = vsel %vm712, %v2610, 0
      %v2667 = vsel %vm712, %v2611, 0
      %v2670 = vsel %vm712, %v2612, 0
      %v2673 = vsel %vm712, %v2613, 0
      %v2676 = vsel %vm712, %v2614, 0
      %v2679 = vsel %vm712, %v2615, 0
      %v2682 = vsel %vm712, %v2616, 0
      %v2685 = vsel %vm712, %v2617, 0
      %v2688 = vsel %vm712, %v2618, 0
      %v2691 = vsel %vm712, %v2619, 0
      %v2694 = vsel %vm712, %v2620, 0
      %v2697 = vsel %vm761, %v2643, 0
      %2699 = vmatprep.subr.bf16.mxu0 0
      %2700 = vmatpush1.bf16.msra.mxu0 0
      %2701 = vmatprep.subr.bf16.mxu0 0
      %2702 = vmatpush1.bf16.msra.mxu0 0
      %2703 = vmatprep.subr.bf16.mxu0 0
      %2704 = vmatpush1.bf16.msra.mxu0 0
      %2705 = vmatprep.subr.bf16.mxu0 0
      %2706 = vmatpush1.bf16.msra.mxu0 %v2697
      %2707 = vmatprep.subr.bf16.mxu0 0
      %2708 = vmatpush1.bf16.msra.mxu0 %v2642
      %2709 = vmatprep.subr.bf16.mxu0 0
      %2710 = vmatpush1.bf16.msra.mxu0 %v2641
      %2711 = vmatprep.subr.bf16.mxu0 0
      %2712 = vmatpush1.bf16.msra.mxu0 %v2640
      %2713 = vmatprep.subr.bf16.mxu0 0
      %2714 = vmatpush1.bf16.msra.mxu0 %v2639
      %2715 = vmatprep.subr.bf16.mxu0 0
      %2716 = vmatpush2.bf16.msra.mxu0 0
      %2717 = vmatprep.subr.bf16.mxu0 0
      %2718 = vmatpush2.bf16.msra.mxu0 0
      %2719 = vmatprep.subr.bf16.mxu0 0
      %2720 = vmatpush2.bf16.msra.mxu0 0
      %2721 = vmatprep.subr.bf16.mxu0 0
      %2722 = vmatpush2.bf16.msra.mxu0 0
      %2723 = vmatprep.subr.bf16.mxu0 0
      %2724 = vmatpush2.bf16.msra.mxu0 0
      %2725 = vmatprep.subr.bf16.mxu0 0
      %2726 = vmatpush2.bf16.msra.mxu0 0
      %2727 = vmatprep.subr.bf16.mxu0 0
      %2728 = vmatpush2.bf16.msra.mxu0 0
      %2729 = vmatprep.subr.bf16.mxu0 0
      %2730 = vmatpush2.bf16.msra.mxu0 0
      %2731 = vmatprep.mubr.bf16.mxu0 0
      %2732 = vmatmul.mubr.bf16.gmra.mxu0 %v2649
      %v2733 = vpop.f32.mrf.mxu0
      %v2734 = vadd.f32 0.0, %v2733
      %v2735 = vpop.f32.mrf.mxu0
      %v2736 = vpop.f32.mrf.mxu0
      %v2737 = vadd.f32 0.0, %v2736
      %v2738 = vpop.f32.mrf.mxu0
      %2739 = vmatprep.mubr.bf16.mxu0 0
      %2740 = vmatmul.mubr.bf16.gmra.mxu0 %v2652
      %v2741 = vpop.f32.mrf.mxu0
      %v2742 = vadd.f32 0.0, %v2741
      %v2743 = vpop.f32.mrf.mxu0
      %v2744 = vpop.f32.mrf.mxu0
      %v2745 = vadd.f32 0.0, %v2744
      %v2746 = vpop.f32.mrf.mxu0
      %2747 = vmatprep.mubr.bf16.mxu0 0
      %2748 = vmatmul.mubr.bf16.gmra.mxu0 %v2655
      %v2749 = vpop.f32.mrf.mxu0
      %v2750 = vadd.f32 0.0, %v2749
      %v2751 = vpop.f32.mrf.mxu0
      %v2752 = vpop.f32.mrf.mxu0
      %v2753 = vadd.f32 0.0, %v2752
      %v2754 = vpop.f32.mrf.mxu0
      %2755 = vmatprep.mubr.bf16.mxu0 0
      %2756 = vmatmul.mubr.bf16.gmra.mxu0 %v2658
      %v2757 = vpop.f32.mrf.mxu0
      %v2758 = vadd.f32 0.0, %v2757
      %v2759 = vpop.f32.mrf.mxu0
      %v2760 = vpop.f32.mrf.mxu0
      %v2761 = vadd.f32 0.0, %v2760
      %v2762 = vpop.f32.mrf.mxu0
      %2763 = vmatprep.mubr.bf16.mxu0 0
      %2764 = vmatmul.mubr.bf16.gmra.mxu0 %v2661
      %v2765 = vpop.f32.mrf.mxu0
      %v2766 = vadd.f32 0.0, %v2765
      %v2767 = vpop.f32.mrf.mxu0
      %v2768 = vpop.f32.mrf.mxu0
      %v2769 = vadd.f32 0.0, %v2768
      %v2770 = vpop.f32.mrf.mxu0
      %2771 = vmatprep.mubr.bf16.mxu0 0
      %2772 = vmatmul.mubr.bf16.gmra.mxu0 %v2664
      %v2773 = vpop.f32.mrf.mxu0
      %v2774 = vadd.f32 0.0, %v2773
      %v2775 = vpop.f32.mrf.mxu0
      %v2776 = vpop.f32.mrf.mxu0
      %v2777 = vadd.f32 0.0, %v2776
      %v2778 = vpop.f32.mrf.mxu0
      %2779 = vmatprep.mubr.bf16.mxu0 0
      %2780 = vmatmul.mubr.bf16.gmra.mxu0 %v2667
      %v2781 = vpop.f32.mrf.mxu0
      %v2782 = vadd.f32 0.0, %v2781
      %v2783 = vpop.f32.mrf.mxu0
      %v2784 = vpop.f32.mrf.mxu0
      %v2785 = vadd.f32 0.0, %v2784
      %v2786 = vpop.f32.mrf.mxu0
      %2787 = vmatprep.mubr.bf16.mxu0 0
      %2788 = vmatmul.mubr.bf16.gmra.mxu0 %v2670
      %v2789 = vpop.f32.mrf.mxu0
      %v2790 = vadd.f32 0.0, %v2789
      %v2791 = vpop.f32.mrf.mxu0
      %v2792 = vpop.f32.mrf.mxu0
      %v2793 = vadd.f32 0.0, %v2792
      %v2794 = vpop.f32.mrf.mxu0
      %2795 = vmatprep.mubr.bf16.mxu0 0
      %2796 = vmatmul.mubr.bf16.gmra.mxu0 %v2673
      %v2797 = vpop.f32.mrf.mxu0
      %v2798 = vadd.f32 0.0, %v2797
      %v2799 = vpop.f32.mrf.mxu0
      %v2800 = vpop.f32.mrf.mxu0
      %v2801 = vadd.f32 0.0, %v2800
      %v2802 = vpop.f32.mrf.mxu0
      %2803 = vmatprep.mubr.bf16.mxu0 0
      %2804 = vmatmul.mubr.bf16.gmra.mxu0 %v2676
      %v2805 = vpop.f32.mrf.mxu0
      %v2806 = vadd.f32 0.0, %v2805
      %v2807 = vpop.f32.mrf.mxu0
      %v2808 = vpop.f32.mrf.mxu0
      %v2809 = vadd.f32 0.0, %v2808
      %v2810 = vpop.f32.mrf.mxu0
      %2811 = vmatprep.mubr.bf16.mxu0 0
      %2812 = vmatmul.mubr.bf16.gmra.mxu0 %v2679
      %v2813 = vpop.f32.mrf.mxu0
      %v2814 = vadd.f32 0.0, %v2813
      %v2815 = vpop.f32.mrf.mxu0
      %v2816 = vpop.f32.mrf.mxu0
      %v2817 = vadd.f32 0.0, %v2816
      %v2818 = vpop.f32.mrf.mxu0
      %2819 = vmatprep.mubr.bf16.mxu0 0
      %2820 = vmatmul.mubr.bf16.gmra.mxu0 %v2682
      %v2821 = vpop.f32.mrf.mxu0
      %v2822 = vadd.f32 0.0, %v2821
      %v2823 = vpop.f32.mrf.mxu0
      %v2824 = vpop.f32.mrf.mxu0
      %v2825 = vadd.f32 0.0, %v2824
      %v2826 = vpop.f32.mrf.mxu0
      %2827 = vmatprep.mubr.bf16.mxu0 0
      %2828 = vmatmul.mubr.bf16.gmra.mxu0 %v2685
      %v2829 = vpop.f32.mrf.mxu0
      %v2830 = vadd.f32 0.0, %v2829
      %v2831 = vpop.f32.mrf.mxu0
      %v2832 = vpop.f32.mrf.mxu0
      %v2833 = vadd.f32 0.0, %v2832
      %v2834 = vpop.f32.mrf.mxu0
      %2835 = vmatprep.mubr.bf16.mxu0 0
      %2836 = vmatmul.mubr.bf16.gmra.mxu0 %v2688
      %v2837 = vpop.f32.mrf.mxu0
      %v2838 = vadd.f32 0.0, %v2837
      %v2839 = vpop.f32.mrf.mxu0
      %v2840 = vpop.f32.mrf.mxu0
      %v2841 = vadd.f32 0.0, %v2840
      %v2842 = vpop.f32.mrf.mxu0
      %2843 = vmatprep.mubr.bf16.mxu0 0
      %2844 = vmatmul.mubr.bf16.gmra.mxu0 %v2691
      %v2845 = vpop.f32.mrf.mxu0
      %v2846 = vadd.f32 0.0, %v2845
      %v2847 = vpop.f32.mrf.mxu0
      %v2848 = vpop.f32.mrf.mxu0
      %v2849 = vadd.f32 0.0, %v2848
      %v2850 = vpop.f32.mrf.mxu0
      %2851 = vmatprep.mubr.bf16.mxu0 0
      %2852 = vmatmul.mubr.bf16.gmra.mxu0 %v2694
      %v2853 = vpop.f32.mrf.mxu0
      %v2854 = vadd.f32 0.0, %v2853
      %v2855 = vpop.f32.mrf.mxu0
      %v2856 = vpop.f32.mrf.mxu0
      %v2857 = vadd.f32 0.0, %v2856
      %v2858 = vpop.f32.mrf.mxu0
      %2859 = vdwg.mxu0
      %v2860 = vadd.f32 %v2099, %v2734
      %v2861 = vadd.f32 %v2100, %v2737
      %v2862 = vadd.f32 %v2101, %v2742
      %v2863 = vadd.f32 %v2102, %v2745
      %v2864 = vadd.f32 %v2103, %v2750
      %v2865 = vadd.f32 %v2104, %v2753
      %v2866 = vadd.f32 %v2105, %v2758
      %v2867 = vadd.f32 %v2106, %v2761
      %v2868 = vadd.f32 %v2107, %v2766
      %v2869 = vadd.f32 %v2108, %v2769
      %v2870 = vadd.f32 %v2109, %v2774
      %v2871 = vadd.f32 %v2110, %v2777
      %v2872 = vadd.f32 %v2111, %v2782
      %v2873 = vadd.f32 %v2112, %v2785
      %v2874 = vadd.f32 %v2113, %v2790
      %v2875 = vadd.f32 %v2114, %v2793
      %v2876 = vadd.f32 %v2115, %v2798
      %v2877 = vadd.f32 %v2116, %v2801
      %v2878 = vadd.f32 %v2117, %v2806
      %v2879 = vadd.f32 %v2118, %v2809
      %v2880 = vadd.f32 %v2119, %v2814
      %v2881 = vadd.f32 %v2120, %v2817
      %v2882 = vadd.f32 %v2121, %v2822
      %v2883 = vadd.f32 %v2122, %v2825
      %v2884 = vadd.f32 %v2123, %v2830
      %v2885 = vadd.f32 %v2124, %v2833
      %v2886 = vadd.f32 %v2125, %v2838
      %v2887 = vadd.f32 %v2126, %v2841
      %v2888 = vadd.f32 %v2127, %v2846
      %v2889 = vadd.f32 %v2128, %v2849
      %v2890 = vadd.f32 %v2129, %v2854
      %v2891 = vadd.f32 %v2130, %v2857
      %v2892 = vld [vmem:[%s1737] sm:$0xe]
      %v2893 = vld [vmem:[%s1737 + $0xc] sm:$0xe]
      %v2894 = vld [vmem:[%s1737 + $0x18] sm:$0xe]
      %v2895 = vld [vmem:[%s1737 + $0x24] sm:$0xe]
      %v2896 = vld [vmem:[%s1737 + $0x30] sm:$0xe]
      %v2897 = vld [vmem:[%s1737 + $0x3c] sm:$0xe]
      %v2898 = vld [vmem:[%s1737 + $0x48] sm:$0xe]
      %v2899 = vld [vmem:[%s1737 + $0x54] sm:$0xe]
      %v2900 = vld [vmem:[%s1737 + $0x60] sm:$0xe]
      %v2901 = vld [vmem:[%s1737 + $0x6c] sm:$0xe]
      %v2902 = vld [vmem:[%s1737 + $0x78] sm:$0xe]
      %v2903 = vld [vmem:[%s1737 + $0x84] sm:$0xe]
      %v2904 = vld [vmem:[%s1737 + $0x90] sm:$0xe]
      %v2905 = vld [vmem:[%s1737 + $0x9c] sm:$0xe]
      %v2906 = vld [vmem:[%s1737 + $0xa8] sm:$0xe]
      %v2907 = vld [vmem:[%s1737 + $0xb4] sm:$0xe]
      %v2956 = vrot.slane %v2892, 5
      %v2957 = vrot.slane %v2956, 4
      %v2958 = vrot.slane %v2132, 5
      %v2959 = vsel %vm1295, %v2957, %v2958
      %v2960 = vrot.slane %v2958, 4
      %v2961 = vrot.slane %v2133, 5
      %v2962 = vsel %vm1295, %v2960, %v2961
      %v2963 = vrot.slane %v2893, 5
      %v2964 = vrot.slane %v2963, 4
      %v2965 = vrot.slane %v2135, 5
      %v2966 = vsel %vm1295, %v2964, %v2965
      %v2967 = vrot.slane %v2965, 4
      %v2968 = vrot.slane %v2136, 5
      %v2969 = vsel %vm1295, %v2967, %v2968
      %v2970 = vrot.slane %v2894, 5
      %v2971 = vrot.slane %v2970, 4
      %v2972 = vrot.slane %v2138, 5
      %v2973 = vsel %vm1295, %v2971, %v2972
      %v2974 = vrot.slane %v2972, 4
      %v2975 = vrot.slane %v2139, 5
      %v2976 = vsel %vm1295, %v2974, %v2975
      %v2977 = vrot.slane %v2895, 5
      %v2978 = vrot.slane %v2977, 4
      %v2979 = vrot.slane %v2141, 5
      %v2980 = vsel %vm1295, %v2978, %v2979
      %v2981 = vrot.slane %v2979, 4
      %v2982 = vrot.slane %v2142, 5
      %v2983 = vsel %vm1295, %v2981, %v2982
      %v2984 = vrot.slane %v2896, 5
      %v2985 = vrot.slane %v2984, 4
      %v2986 = vrot.slane %v2144, 5
      %v2987 = vsel %vm1295, %v2985, %v2986
      %v2988 = vrot.slane %v2986, 4
      %v2989 = vrot.slane %v2145, 5
      %v2990 = vsel %vm1295, %v2988, %v2989
      %v2991 = vrot.slane %v2897, 5
      %v2992 = vrot.slane %v2991, 4
      %v2993 = vrot.slane %v2147, 5
      %v2994 = vsel %vm1295, %v2992, %v2993
      %v2995 = vrot.slane %v2993, 4
      %v2996 = vrot.slane %v2148, 5
      %v2997 = vsel %vm1295, %v2995, %v2996
      %v2998 = vrot.slane %v2898, 5
      %v2999 = vrot.slane %v2998, 4
      %v3000 = vrot.slane %v2150, 5
      %v3001 = vsel %vm1295, %v2999, %v3000
      %v3002 = vrot.slane %v3000, 4
      %v3003 = vrot.slane %v2151, 5
      %v3004 = vsel %vm1295, %v3002, %v3003
      %v3005 = vrot.slane %v2899, 5
      %v3006 = vrot.slane %v3005, 4
      %v3007 = vrot.slane %v2153, 5
      %v3008 = vsel %vm1295, %v3006, %v3007
      %v3009 = vrot.slane %v3007, 4
      %v3010 = vrot.slane %v2154, 5
      %v3011 = vsel %vm1295, %v3009, %v3010
      %v3012 = vrot.slane %v2900, 5
      %v3013 = vrot.slane %v3012, 4
      %v3014 = vrot.slane %v2156, 5
      %v3015 = vsel %vm1295, %v3013, %v3014
      %v3016 = vrot.slane %v3014, 4
      %v3017 = vrot.slane %v2157, 5
      %v3018 = vsel %vm1295, %v3016, %v3017
      %v3019 = vrot.slane %v2901, 5
      %v3020 = vrot.slane %v3019, 4
      %v3021 = vrot.slane %v2159, 5
      %v3022 = vsel %vm1295, %v3020, %v3021
      %v3023 = vrot.slane %v3021, 4
      %v3024 = vrot.slane %v2160, 5
      %v3025 = vsel %vm1295, %v3023, %v3024
      %v3026 = vrot.slane %v2902, 5
      %v3027 = vrot.slane %v3026, 4
      %v3028 = vrot.slane %v2162, 5
      %v3029 = vsel %vm1295, %v3027, %v3028
      %v3030 = vrot.slane %v3028, 4
      %v3031 = vrot.slane %v2163, 5
      %v3032 = vsel %vm1295, %v3030, %v3031
      %v3033 = vrot.slane %v2903, 5
      %v3034 = vrot.slane %v3033, 4
      %v3035 = vrot.slane %v2165, 5
      %v3036 = vsel %vm1295, %v3034, %v3035
      %v3037 = vrot.slane %v3035, 4
      %v3038 = vrot.slane %v2166, 5
      %v3039 = vsel %vm1295, %v3037, %v3038
      %v3040 = vrot.slane %v2904, 5
      %v3041 = vrot.slane %v3040, 4
      %v3042 = vrot.slane %v2168, 5
      %v3043 = vsel %vm1295, %v3041, %v3042
      %v3044 = vrot.slane %v3042, 4
      %v3045 = vrot.slane %v2169, 5
      %v3046 = vsel %vm1295, %v3044, %v3045
      %v3047 = vrot.slane %v2905, 5
      %v3048 = vrot.slane %v3047, 4
      %v3049 = vrot.slane %v2171, 5
      %v3050 = vsel %vm1295, %v3048, %v3049
      %v3051 = vrot.slane %v3049, 4
      %v3052 = vrot.slane %v2172, 5
      %v3053 = vsel %vm1295, %v3051, %v3052
      %v3054 = vrot.slane %v2906, 5
      %v3055 = vrot.slane %v3054, 4
      %v3056 = vrot.slane %v2174, 5
      %v3057 = vsel %vm1295, %v3055, %v3056
      %v3058 = vrot.slane %v3056, 4
      %v3059 = vrot.slane %v2175, 5
      %v3060 = vsel %vm1295, %v3058, %v3059
      %v3061 = vrot.slane %v2907, 5
      %v3062 = vrot.slane %v3061, 4
      %v3063 = vrot.slane %v2177, 5
      %v3064 = vsel %vm1295, %v3062, %v3063
      %v3065 = vrot.slane %v3063, 4
      %v3066 = vrot.slane %v2178, 5
      %v3067 = vsel %vm1295, %v3065, %v3066
      %s3068 = scalar_lea.vmem %s1, 180
      %v3069 = vld [vmem:[%s3068] sm:$0xf]
      %v3070 = vld [vmem:[%s3068 + $0x4] sm:$0xf]
      %v3071 = vld [vmem:[%s3068 + $0x8] sm:$0xf]
      %v3072 = vld [vmem:[%s3068 + $0xc] sm:$0xf]
      %v3073 = vld [vmem:[%s3068 + $0x10] sm:$0xf]
      %v3074 = vld [vmem:[%s3068 + $0x14] sm:$0xf]
      %v3075 = vld [vmem:[%s3068 + $0x18] sm:$0xf]
      %v3076 = vld [vmem:[%s3068 + $0x1c] sm:$0xf]
      %v3077 = vld [vmem:[%s3068 + $0x20] sm:$0xf]
      %v3078 = vunpack.c.l.b16 %v2959
      %v3079 = vunpack.c.l.b16 %v2962
      %v3080 = vunpack.c.l.b16 %v2966
      %v3081 = vunpack.c.l.b16 %v2969
      %v3082 = vunpack.c.l.b16 %v2973
      %v3083 = vunpack.c.l.b16 %v2976
      %v3084 = vunpack.c.l.b16 %v2980
      %v3085 = vunpack.c.l.b16 %v2983
      %v3086 = vunpack.c.l.b16 %v2987
      %v3087 = vunpack.c.l.b16 %v2990
      %v3088 = vunpack.c.l.b16 %v2994
      %v3089 = vunpack.c.l.b16 %v2997
      %v3090 = vunpack.c.l.b16 %v3001
      %v3091 = vunpack.c.l.b16 %v3004
      %v3092 = vunpack.c.l.b16 %v3008
      %v3093 = vunpack.c.l.b16 %v3011
      %v3094 = vunpack.c.l.b16 %v3015
      %v3095 = vunpack.c.l.b16 %v3018
      %v3096 = vunpack.c.l.b16 %v3022
      %v3097 = vunpack.c.l.b16 %v3025
      %v3098 = vunpack.c.l.b16 %v3029
      %v3099 = vunpack.c.l.b16 %v3032
      %v3100 = vunpack.c.l.b16 %v3036
      %v3101 = vunpack.c.l.b16 %v3039
      %v3102 = vunpack.c.l.b16 %v3043
      %v3103 = vunpack.c.l.b16 %v3046
      %v3104 = vunpack.c.l.b16 %v3050
      %v3105 = vunpack.c.l.b16 %v3053
      %v3106 = vunpack.c.l.b16 %v3057
      %v3107 = vunpack.c.l.b16 %v3060
      %v3108 = vunpack.c.l.b16 %v3064
      %v3109 = vunpack.c.l.b16 %v3067
      %v3110 = vpack.c.b16 %v3079, %v3078
      %v3111 = vpack.c.b16 %v3081, %v3080
      %v3112 = vpack.c.b16 %v3083, %v3082
      %v3113 = vpack.c.b16 %v3085, %v3084
      %v3114 = vpack.c.b16 %v3087, %v3086
      %v3115 = vpack.c.b16 %v3089, %v3088
      %v3116 = vpack.c.b16 %v3091, %v3090
      %v3117 = vpack.c.b16 %v3093, %v3092
      %v3118 = vpack.c.b16 %v3095, %v3094
      %v3119 = vpack.c.b16 %v3097, %v3096
      %v3120 = vpack.c.b16 %v3099, %v3098
      %v3121 = vpack.c.b16 %v3101, %v3100
      %v3122 = vpack.c.b16 %v3103, %v3102
      %v3123 = vpack.c.b16 %v3105, %v3104
      %v3124 = vpack.c.b16 %v3107, %v3106
      %v3125 = vpack.c.b16 %v3109, %v3108
      %v3135 = vunpack.c.l.b16 %v3069
      %v3136 = vunpack.c.l.b16 %v3070
      %v3137 = vunpack.c.l.b16 %v3071
      %v3138 = vunpack.c.l.b16 %v3072
      %v3139 = vunpack.c.l.b16 %v3073
      %v3140 = vunpack.c.l.b16 %v3074
      %v3141 = vunpack.c.l.b16 %v3075
      %v3142 = vunpack.c.l.b16 %v3076
      %v3143 = vunpack.c.l.b16 %v3077
      %v3144 = vpack.c.b16 %v3136, %v3135
      %v3145 = vpack.c.b16 %v3138, %v3137
      %v3146 = vpack.c.b16 %v3140, %v3139
      %v3147 = vpack.c.b16 %v3142, %v3141
      %v3148 = vpack.c.b16 %v3143, %v3143
      %v3154 = vsel %vm712, %v3110, 0
      %v3157 = vsel %vm712, %v3111, 0
      %v3160 = vsel %vm712, %v3112, 0
      %v3163 = vsel %vm712, %v3113, 0
      %v3166 = vsel %vm712, %v3114, 0
      %v3169 = vsel %vm712, %v3115, 0
      %v3172 = vsel %vm712, %v3116, 0
      %v3175 = vsel %vm712, %v3117, 0
      %v3178 = vsel %vm712, %v3118, 0
      %v3181 = vsel %vm712, %v3119, 0
      %v3184 = vsel %vm712, %v3120, 0
      %v3187 = vsel %vm712, %v3121, 0
      %v3190 = vsel %vm712, %v3122, 0
      %v3193 = vsel %vm712, %v3123, 0
      %v3196 = vsel %vm712, %v3124, 0
      %v3199 = vsel %vm712, %v3125, 0
      %v3202 = vsel %vm761, %v3148, 0
      %3204 = vmatprep.subr.bf16.mxu0 0
      %3205 = vmatpush1.bf16.msra.mxu0 0
      %3206 = vmatprep.subr.bf16.mxu0 0
      %3207 = vmatpush1.bf16.msra.mxu0 0
      %3208 = vmatprep.subr.bf16.mxu0 0
      %3209 = vmatpush1.bf16.msra.mxu0 0
      %3210 = vmatprep.subr.bf16.mxu0 0
      %3211 = vmatpush1.bf16.msra.mxu0 %v3202
      %3212 = vmatprep.subr.bf16.mxu0 0
      %3213 = vmatpush1.bf16.msra.mxu0 %v3147
      %3214 = vmatprep.subr.bf16.mxu0 0
      %3215 = vmatpush1.bf16.msra.mxu0 %v3146
      %3216 = vmatprep.subr.bf16.mxu0 0
      %3217 = vmatpush1.bf16.msra.mxu0 %v3145
      %3218 = vmatprep.subr.bf16.mxu0 0
      %3219 = vmatpush1.bf16.msra.mxu0 %v3144
      %3220 = vmatprep.subr.bf16.mxu0 0
      %3221 = vmatpush2.bf16.msra.mxu0 0
      %3222 = vmatprep.subr.bf16.mxu0 0
      %3223 = vmatpush2.bf16.msra.mxu0 0
      %3224 = vmatprep.subr.bf16.mxu0 0
      %3225 = vmatpush2.bf16.msra.mxu0 0
      %3226 = vmatprep.subr.bf16.mxu0 0
      %3227 = vmatpush2.bf16.msra.mxu0 0
      %3228 = vmatprep.subr.bf16.mxu0 0
      %3229 = vmatpush2.bf16.msra.mxu0 0
      %3230 = vmatprep.subr.bf16.mxu0 0
      %3231 = vmatpush2.bf16.msra.mxu0 0
      %3232 = vmatprep.subr.bf16.mxu0 0
      %3233 = vmatpush2.bf16.msra.mxu0 0
      %3234 = vmatprep.subr.bf16.mxu0 0
      %3235 = vmatpush2.bf16.msra.mxu0 0
      %3236 = vmatprep.mubr.bf16.mxu0 0
      %3237 = vmatmul.mubr.bf16.gmra.mxu0 %v3154
      %v3238 = vpop.f32.mrf.mxu0
      %v3239 = vadd.f32 0.0, %v3238
      %v3240 = vpop.f32.mrf.mxu0
      %v3241 = vpop.f32.mrf.mxu0
      %v3242 = vadd.f32 0.0, %v3241
      %v3243 = vpop.f32.mrf.mxu0
      %3244 = vmatprep.mubr.bf16.mxu0 0
      %3245 = vmatmul.mubr.bf16.gmra.mxu0 %v3157
      %v3246 = vpop.f32.mrf.mxu0
      %v3247 = vadd.f32 0.0, %v3246
      %v3248 = vpop.f32.mrf.mxu0
      %v3249 = vpop.f32.mrf.mxu0
      %v3250 = vadd.f32 0.0, %v3249
      %v3251 = vpop.f32.mrf.mxu0
      %3252 = vmatprep.mubr.bf16.mxu0 0
      %3253 = vmatmul.mubr.bf16.gmra.mxu0 %v3160
      %v3254 = vpop.f32.mrf.mxu0
      %v3255 = vadd.f32 0.0, %v3254
      %v3256 = vpop.f32.mrf.mxu0
      %v3257 = vpop.f32.mrf.mxu0
      %v3258 = vadd.f32 0.0, %v3257
      %v3259 = vpop.f32.mrf.mxu0
      %3260 = vmatprep.mubr.bf16.mxu0 0
      %3261 = vmatmul.mubr.bf16.gmra.mxu0 %v3163
      %v3262 = vpop.f32.mrf.mxu0
      %v3263 = vadd.f32 0.0, %v3262
      %v3264 = vpop.f32.mrf.mxu0
      %v3265 = vpop.f32.mrf.mxu0
      %v3266 = vadd.f32 0.0, %v3265
      %v3267 = vpop.f32.mrf.mxu0
      %3268 = vmatprep.mubr.bf16.mxu0 0
      %3269 = vmatmul.mubr.bf16.gmra.mxu0 %v3166
      %v3270 = vpop.f32.mrf.mxu0
      %v3271 = vadd.f32 0.0, %v3270
      %v3272 = vpop.f32.mrf.mxu0
      %v3273 = vpop.f32.mrf.mxu0
      %v3274 = vadd.f32 0.0, %v3273
      %v3275 = vpop.f32.mrf.mxu0
      %3276 = vmatprep.mubr.bf16.mxu0 0
      %3277 = vmatmul.mubr.bf16.gmra.mxu0 %v3169
      %v3278 = vpop.f32.mrf.mxu0
      %v3279 = vadd.f32 0.0, %v3278
      %v3280 = vpop.f32.mrf.mxu0
      %v3281 = vpop.f32.mrf.mxu0
      %v3282 = vadd.f32 0.0, %v3281
      %v3283 = vpop.f32.mrf.mxu0
      %3284 = vmatprep.mubr.bf16.mxu0 0
      %3285 = vmatmul.mubr.bf16.gmra.mxu0 %v3172
      %v3286 = vpop.f32.mrf.mxu0
      %v3287 = vadd.f32 0.0, %v3286
      %v3288 = vpop.f32.mrf.mxu0
      %v3289 = vpop.f32.mrf.mxu0
      %v3290 = vadd.f32 0.0, %v3289
      %v3291 = vpop.f32.mrf.mxu0
      %3292 = vmatprep.mubr.bf16.mxu0 0
      %3293 = vmatmul.mubr.bf16.gmra.mxu0 %v3175
      %v3294 = vpop.f32.mrf.mxu0
      %v3295 = vadd.f32 0.0, %v3294
      %v3296 = vpop.f32.mrf.mxu0
      %v3297 = vpop.f32.mrf.mxu0
      %v3298 = vadd.f32 0.0, %v3297
      %v3299 = vpop.f32.mrf.mxu0
      %3300 = vmatprep.mubr.bf16.mxu0 0
      %3301 = vmatmul.mubr.bf16.gmra.mxu0 %v3178
      %v3302 = vpop.f32.mrf.mxu0
      %v3303 = vadd.f32 0.0, %v3302
      %v3304 = vpop.f32.mrf.mxu0
      %v3305 = vpop.f32.mrf.mxu0
      %v3306 = vadd.f32 0.0, %v3305
      %v3307 = vpop.f32.mrf.mxu0
      %3308 = vmatprep.mubr.bf16.mxu0 0
      %3309 = vmatmul.mubr.bf16.gmra.mxu0 %v3181
      %v3310 = vpop.f32.mrf.mxu0
      %v3311 = vadd.f32 0.0, %v3310
      %v3312 = vpop.f32.mrf.mxu0
      %v3313 = vpop.f32.mrf.mxu0
      %v3314 = vadd.f32 0.0, %v3313
      %v3315 = vpop.f32.mrf.mxu0
      %3316 = vmatprep.mubr.bf16.mxu0 0
      %3317 = vmatmul.mubr.bf16.gmra.mxu0 %v3184
      %v3318 = vpop.f32.mrf.mxu0
      %v3319 = vadd.f32 0.0, %v3318
      %v3320 = vpop.f32.mrf.mxu0
      %v3321 = vpop.f32.mrf.mxu0
      %v3322 = vadd.f32 0.0, %v3321
      %v3323 = vpop.f32.mrf.mxu0
      %3324 = vmatprep.mubr.bf16.mxu0 0
      %3325 = vmatmul.mubr.bf16.gmra.mxu0 %v3187
      %v3326 = vpop.f32.mrf.mxu0
      %v3327 = vadd.f32 0.0, %v3326
      %v3328 = vpop.f32.mrf.mxu0
      %v3329 = vpop.f32.mrf.mxu0
      %v3330 = vadd.f32 0.0, %v3329
      %v3331 = vpop.f32.mrf.mxu0
      %3332 = vmatprep.mubr.bf16.mxu0 0
      %3333 = vmatmul.mubr.bf16.gmra.mxu0 %v3190
      %v3334 = vpop.f32.mrf.mxu0
      %v3335 = vadd.f32 0.0, %v3334
      %v3336 = vpop.f32.mrf.mxu0
      %v3337 = vpop.f32.mrf.mxu0
      %v3338 = vadd.f32 0.0, %v3337
      %v3339 = vpop.f32.mrf.mxu0
      %3340 = vmatprep.mubr.bf16.mxu0 0
      %3341 = vmatmul.mubr.bf16.gmra.mxu0 %v3193
      %v3342 = vpop.f32.mrf.mxu0
      %v3343 = vadd.f32 0.0, %v3342
      %v3344 = vpop.f32.mrf.mxu0
      %v3345 = vpop.f32.mrf.mxu0
      %v3346 = vadd.f32 0.0, %v3345
      %v3347 = vpop.f32.mrf.mxu0
      %3348 = vmatprep.mubr.bf16.mxu0 0
      %3349 = vmatmul.mubr.bf16.gmra.mxu0 %v3196
      %v3350 = vpop.f32.mrf.mxu0
      %v3351 = vadd.f32 0.0, %v3350
      %v3352 = vpop.f32.mrf.mxu0
      %v3353 = vpop.f32.mrf.mxu0
      %v3354 = vadd.f32 0.0, %v3353
      %v3355 = vpop.f32.mrf.mxu0
      %3356 = vmatprep.mubr.bf16.mxu0 0
      %3357 = vmatmul.mubr.bf16.gmra.mxu0 %v3199
      %v3358 = vpop.f32.mrf.mxu0
      %v3359 = vadd.f32 0.0, %v3358
      %v3360 = vpop.f32.mrf.mxu0
      %v3361 = vpop.f32.mrf.mxu0
      %v3362 = vadd.f32 0.0, %v3361
      %v3363 = vpop.f32.mrf.mxu0
      %3364 = vdwg.mxu0
      %v3365 = vadd.f32 %v2860, %v3239
      %v3366 = vadd.f32 %v2861, %v3242
      %v3367 = vadd.f32 %v2862, %v3247
      %v3368 = vadd.f32 %v2863, %v3250
      %v3369 = vadd.f32 %v2864, %v3255
      %v3370 = vadd.f32 %v2865, %v3258
      %v3371 = vadd.f32 %v2866, %v3263
      %v3372 = vadd.f32 %v2867, %v3266
      %v3373 = vadd.f32 %v2868, %v3271
      %v3374 = vadd.f32 %v2869, %v3274
      %v3375 = vadd.f32 %v2870, %v3279
      %v3376 = vadd.f32 %v2871, %v3282
      %v3377 = vadd.f32 %v2872, %v3287
      %v3378 = vadd.f32 %v2873, %v3290
      %v3379 = vadd.f32 %v2874, %v3295
      %v3380 = vadd.f32 %v2875, %v3298
      %v3381 = vadd.f32 %v2876, %v3303
      %v3382 = vadd.f32 %v2877, %v3306
      %v3383 = vadd.f32 %v2878, %v3311
      %v3384 = vadd.f32 %v2879, %v3314
      %v3385 = vadd.f32 %v2880, %v3319
      %v3386 = vadd.f32 %v2881, %v3322
      %v3387 = vadd.f32 %v2882, %v3327
      %v3388 = vadd.f32 %v2883, %v3330
      %v3389 = vadd.f32 %v2884, %v3335
      %v3390 = vadd.f32 %v2885, %v3338
      %v3391 = vadd.f32 %v2886, %v3343
      %v3392 = vadd.f32 %v2887, %v3346
      %v3393 = vadd.f32 %v2888, %v3351
      %v3394 = vadd.f32 %v2889, %v3354
      %v3395 = vadd.f32 %v2890, %v3359
      %v3396 = vadd.f32 %v2891, %v3362
      %s3397 = scalar_lea.vmem %s172, 24
      %v3398 = vld [vmem:[%s3397] sm:$0xf]
      %v3399 = vld [vmem:[%s3397 + $0x4] sm:$0xf]
      %v3400 = vld [vmem:[%s3397 + $0xc] sm:$0xf]
      %v3401 = vld [vmem:[%s3397 + $0x10] sm:$0xf]
      %v3402 = vld [vmem:[%s3397 + $0x18] sm:$0xf]
      %v3403 = vld [vmem:[%s3397 + $0x1c] sm:$0xf]
      %v3404 = vld [vmem:[%s3397 + $0x24] sm:$0xf]
      %v3405 = vld [vmem:[%s3397 + $0x28] sm:$0xf]
      %v3406 = vld [vmem:[%s3397 + $0x30] sm:$0xf]
      %v3407 = vld [vmem:[%s3397 + $0x34] sm:$0xf]
      %v3408 = vld [vmem:[%s3397 + $0x3c] sm:$0xf]
      %v3409 = vld [vmem:[%s3397 + $0x40] sm:$0xf]
      %v3410 = vld [vmem:[%s3397 + $0x48] sm:$0xf]
      %v3411 = vld [vmem:[%s3397 + $0x4c] sm:$0xf]
      %v3412 = vld [vmem:[%s3397 + $0x54] sm:$0xf]
      %v3413 = vld [vmem:[%s3397 + $0x58] sm:$0xf]
      %v3414 = vld [vmem:[%s3397 + $0x60] sm:$0xf]
      %v3415 = vld [vmem:[%s3397 + $0x64] sm:$0xf]
      %v3416 = vld [vmem:[%s3397 + $0x6c] sm:$0xf]
      %v3417 = vld [vmem:[%s3397 + $0x70] sm:$0xf]
      %v3418 = vld [vmem:[%s3397 + $0x78] sm:$0xf]
      %v3419 = vld [vmem:[%s3397 + $0x7c] sm:$0xf]
      %v3420 = vld [vmem:[%s3397 + $0x84] sm:$0xf]
      %v3421 = vld [vmem:[%s3397 + $0x88] sm:$0xf]
      %v3422 = vld [vmem:[%s3397 + $0x90] sm:$0xf]
      %v3423 = vld [vmem:[%s3397 + $0x94] sm:$0xf]
      %v3424 = vld [vmem:[%s3397 + $0x9c] sm:$0xf]
      %v3425 = vld [vmem:[%s3397 + $0xa0] sm:$0xf]
      %v3426 = vld [vmem:[%s3397 + $0xa8] sm:$0xf]
      %v3427 = vld [vmem:[%s3397 + $0xac] sm:$0xf]
      %v3428 = vld [vmem:[%s3397 + $0xb4] sm:$0xf]
      %v3429 = vld [vmem:[%s3397 + $0xb8] sm:$0xf]
      %s3430 = scalar_lea.vmem %s1, 216
      %v3431 = vld [vmem:[%s3430] sm:$0xf]
      %v3432 = vld [vmem:[%s3430 + $0x4] sm:$0xf]
      %v3433 = vld [vmem:[%s3430 + $0x8] sm:$0xf]
      %v3434 = vld [vmem:[%s3430 + $0xc] sm:$0xf]
      %v3435 = vld [vmem:[%s3430 + $0x10] sm:$0xf]
      %v3436 = vld [vmem:[%s3430 + $0x14] sm:$0xf]
      %v3437 = vld [vmem:[%s3430 + $0x18] sm:$0xf]
      %v3438 = vld [vmem:[%s3430 + $0x1c] sm:$0xf]
      %v3439 = vld [vmem:[%s3430 + $0x20] sm:$0xf]
      %v3472 = vunpack.c.l.b16 %v3398
      %v3473 = vunpack.c.l.b16 %v3399
      %v3474 = vunpack.c.l.b16 %v3400
      %v3475 = vunpack.c.l.b16 %v3401
      %v3476 = vunpack.c.l.b16 %v3402
      %v3477 = vunpack.c.l.b16 %v3403
      %v3478 = vunpack.c.l.b16 %v3404
      %v3479 = vunpack.c.l.b16 %v3405
      %v3480 = vunpack.c.l.b16 %v3406
      %v3481 = vunpack.c.l.b16 %v3407
      %v3482 = vunpack.c.l.b16 %v3408
      %v3483 = vunpack.c.l.b16 %v3409
      %v3484 = vunpack.c.l.b16 %v3410
      %v3485 = vunpack.c.l.b16 %v3411
      %v3486 = vunpack.c.l.b16 %v3412
      %v3487 = vunpack.c.l.b16 %v3413
      %v3488 = vunpack.c.l.b16 %v3414
      %v3489 = vunpack.c.l.b16 %v3415
      %v3490 = vunpack.c.l.b16 %v3416
      %v3491 = vunpack.c.l.b16 %v3417
      %v3492 = vunpack.c.l.b16 %v3418
      %v3493 = vunpack.c.l.b16 %v3419
      %v3494 = vunpack.c.l.b16 %v3420
      %v3495 = vunpack.c.l.b16 %v3421
      %v3496 = vunpack.c.l.b16 %v3422
      %v3497 = vunpack.c.l.b16 %v3423
      %v3498 = vunpack.c.l.b16 %v3424
      %v3499 = vunpack.c.l.b16 %v3425
      %v3500 = vunpack.c.l.b16 %v3426
      %v3501 = vunpack.c.l.b16 %v3427
      %v3502 = vunpack.c.l.b16 %v3428
      %v3503 = vunpack.c.l.b16 %v3429
      %v3504 = vpack.c.b16 %v3473, %v3472
      %v3505 = vpack.c.b16 %v3475, %v3474
      %v3506 = vpack.c.b16 %v3477, %v3476
      %v3507 = vpack.c.b16 %v3479, %v3478
      %v3508 = vpack.c.b16 %v3481, %v3480
      %v3509 = vpack.c.b16 %v3483, %v3482
      %v3510 = vpack.c.b16 %v3485, %v3484
      %v3511 = vpack.c.b16 %v3487, %v3486
      %v3512 = vpack.c.b16 %v3489, %v3488
      %v3513 = vpack.c.b16 %v3491, %v3490
      %v3514 = vpack.c.b16 %v3493, %v3492
      %v3515 = vpack.c.b16 %v3495, %v3494
      %v3516 = vpack.c.b16 %v3497, %v3496
      %v3517 = vpack.c.b16 %v3499, %v3498
      %v3518 = vpack.c.b16 %v3501, %v3500
      %v3519 = vpack.c.b16 %v3503, %v3502
      %v3529 = vunpack.c.l.b16 %v3431
      %v3530 = vunpack.c.l.b16 %v3432
      %v3531 = vunpack.c.l.b16 %v3433
      %v3532 = vunpack.c.l.b16 %v3434
      %v3533 = vunpack.c.l.b16 %v3435
      %v3534 = vunpack.c.l.b16 %v3436
      %v3535 = vunpack.c.l.b16 %v3437
      %v3536 = vunpack.c.l.b16 %v3438
      %v3537 = vunpack.c.l.b16 %v3439
      %v3538 = vpack.c.b16 %v3530, %v3529
      %v3539 = vpack.c.b16 %v3532, %v3531
      %v3540 = vpack.c.b16 %v3534, %v3533
      %v3541 = vpack.c.b16 %v3536, %v3535
      %v3542 = vpack.c.b16 %v3537, %v3537
      %v3548 = vsel %vm712, %v3504, 0
      %v3551 = vsel %vm712, %v3505, 0
      %v3554 = vsel %vm712, %v3506, 0
      %v3557 = vsel %vm712, %v3507, 0
      %v3560 = vsel %vm712, %v3508, 0
      %v3563 = vsel %vm712, %v3509, 0
      %v3566 = vsel %vm712, %v3510, 0
      %v3569 = vsel %vm712, %v3511, 0
      %v3572 = vsel %vm712, %v3512, 0
      %v3575 = vsel %vm712, %v3513, 0
      %v3578 = vsel %vm712, %v3514, 0
      %v3581 = vsel %vm712, %v3515, 0
      %v3584 = vsel %vm712, %v3516, 0
      %v3587 = vsel %vm712, %v3517, 0
      %v3590 = vsel %vm712, %v3518, 0
      %v3593 = vsel %vm712, %v3519, 0
      %v3596 = vsel %vm761, %v3542, 0
      %3598 = vmatprep.subr.bf16.mxu0 0
      %3599 = vmatpush1.bf16.msra.mxu0 0
      %3600 = vmatprep.subr.bf16.mxu0 0
      %3601 = vmatpush1.bf16.msra.mxu0 0
      %3602 = vmatprep.subr.bf16.mxu0 0
      %3603 = vmatpush1.bf16.msra.mxu0 0
      %3604 = vmatprep.subr.bf16.mxu0 0
      %3605 = vmatpush1.bf16.msra.mxu0 %v3596
      %3606 = vmatprep.subr.bf16.mxu0 0
      %3607 = vmatpush1.bf16.msra.mxu0 %v3541
      %3608 = vmatprep.subr.bf16.mxu0 0
      %3609 = vmatpush1.bf16.msra.mxu0 %v3540
      %3610 = vmatprep.subr.bf16.mxu0 0
      %3611 = vmatpush1.bf16.msra.mxu0 %v3539
      %3612 = vmatprep.subr.bf16.mxu0 0
      %3613 = vmatpush1.bf16.msra.mxu0 %v3538
      %3614 = vmatprep.subr.bf16.mxu0 0
      %3615 = vmatpush2.bf16.msra.mxu0 0
      %3616 = vmatprep.subr.bf16.mxu0 0
      %3617 = vmatpush2.bf16.msra.mxu0 0
      %3618 = vmatprep.subr.bf16.mxu0 0
      %3619 = vmatpush2.bf16.msra.mxu0 0
      %3620 = vmatprep.subr.bf16.mxu0 0
      %3621 = vmatpush2.bf16.msra.mxu0 0
      %3622 = vmatprep.subr.bf16.mxu0 0
      %3623 = vmatpush2.bf16.msra.mxu0 0
      %3624 = vmatprep.subr.bf16.mxu0 0
      %3625 = vmatpush2.bf16.msra.mxu0 0
      %3626 = vmatprep.subr.bf16.mxu0 0
      %3627 = vmatpush2.bf16.msra.mxu0 0
      %3628 = vmatprep.subr.bf16.mxu0 0
      %3629 = vmatpush2.bf16.msra.mxu0 0
      %3630 = vmatprep.mubr.bf16.mxu0 0
      %3631 = vmatmul.mubr.bf16.gmra.mxu0 %v3548
      %v3632 = vpop.f32.mrf.mxu0
      %v3633 = vadd.f32 0.0, %v3632
      %v3634 = vpop.f32.mrf.mxu0
      %v3635 = vpop.f32.mrf.mxu0
      %v3636 = vadd.f32 0.0, %v3635
      %v3637 = vpop.f32.mrf.mxu0
      %3638 = vmatprep.mubr.bf16.mxu0 0
      %3639 = vmatmul.mubr.bf16.gmra.mxu0 %v3551
      %v3640 = vpop.f32.mrf.mxu0
      %v3641 = vadd.f32 0.0, %v3640
      %v3642 = vpop.f32.mrf.mxu0
      %v3643 = vpop.f32.mrf.mxu0
      %v3644 = vadd.f32 0.0, %v3643
      %v3645 = vpop.f32.mrf.mxu0
      %3646 = vmatprep.mubr.bf16.mxu0 0
      %3647 = vmatmul.mubr.bf16.gmra.mxu0 %v3554
      %v3648 = vpop.f32.mrf.mxu0
      %v3649 = vadd.f32 0.0, %v3648
      %v3650 = vpop.f32.mrf.mxu0
      %v3651 = vpop.f32.mrf.mxu0
      %v3652 = vadd.f32 0.0, %v3651
      %v3653 = vpop.f32.mrf.mxu0
      %3654 = vmatprep.mubr.bf16.mxu0 0
      %3655 = vmatmul.mubr.bf16.gmra.mxu0 %v3557
      %v3656 = vpop.f32.mrf.mxu0
      %v3657 = vadd.f32 0.0, %v3656
      %v3658 = vpop.f32.mrf.mxu0
      %v3659 = vpop.f32.mrf.mxu0
      %v3660 = vadd.f32 0.0, %v3659
      %v3661 = vpop.f32.mrf.mxu0
      %3662 = vmatprep.mubr.bf16.mxu0 0
      %3663 = vmatmul.mubr.bf16.gmra.mxu0 %v3560
      %v3664 = vpop.f32.mrf.mxu0
      %v3665 = vadd.f32 0.0, %v3664
      %v3666 = vpop.f32.mrf.mxu0
      %v3667 = vpop.f32.mrf.mxu0
      %v3668 = vadd.f32 0.0, %v3667
      %v3669 = vpop.f32.mrf.mxu0
      %3670 = vmatprep.mubr.bf16.mxu0 0
      %3671 = vmatmul.mubr.bf16.gmra.mxu0 %v3563
      %v3672 = vpop.f32.mrf.mxu0
      %v3673 = vadd.f32 0.0, %v3672
      %v3674 = vpop.f32.mrf.mxu0
      %v3675 = vpop.f32.mrf.mxu0
      %v3676 = vadd.f32 0.0, %v3675
      %v3677 = vpop.f32.mrf.mxu0
      %3678 = vmatprep.mubr.bf16.mxu0 0
      %3679 = vmatmul.mubr.bf16.gmra.mxu0 %v3566
      %v3680 = vpop.f32.mrf.mxu0
      %v3681 = vadd.f32 0.0, %v3680
      %v3682 = vpop.f32.mrf.mxu0
      %v3683 = vpop.f32.mrf.mxu0
      %v3684 = vadd.f32 0.0, %v3683
      %v3685 = vpop.f32.mrf.mxu0
      %3686 = vmatprep.mubr.bf16.mxu0 0
      %3687 = vmatmul.mubr.bf16.gmra.mxu0 %v3569
      %v3688 = vpop.f32.mrf.mxu0
      %v3689 = vadd.f32 0.0, %v3688
      %v3690 = vpop.f32.mrf.mxu0
      %v3691 = vpop.f32.mrf.mxu0
      %v3692 = vadd.f32 0.0, %v3691
      %v3693 = vpop.f32.mrf.mxu0
      %3694 = vmatprep.mubr.bf16.mxu0 0
      %3695 = vmatmul.mubr.bf16.gmra.mxu0 %v3572
      %v3696 = vpop.f32.mrf.mxu0
      %v3697 = vadd.f32 0.0, %v3696
      %v3698 = vpop.f32.mrf.mxu0
      %v3699 = vpop.f32.mrf.mxu0
      %v3700 = vadd.f32 0.0, %v3699
      %v3701 = vpop.f32.mrf.mxu0
      %3702 = vmatprep.mubr.bf16.mxu0 0
      %3703 = vmatmul.mubr.bf16.gmra.mxu0 %v3575
      %v3704 = vpop.f32.mrf.mxu0
      %v3705 = vadd.f32 0.0, %v3704
      %v3706 = vpop.f32.mrf.mxu0
      %v3707 = vpop.f32.mrf.mxu0
      %v3708 = vadd.f32 0.0, %v3707
      %v3709 = vpop.f32.mrf.mxu0
      %3710 = vmatprep.mubr.bf16.mxu0 0
      %3711 = vmatmul.mubr.bf16.gmra.mxu0 %v3578
      %v3712 = vpop.f32.mrf.mxu0
      %v3713 = vadd.f32 0.0, %v3712
      %v3714 = vpop.f32.mrf.mxu0
      %v3715 = vpop.f32.mrf.mxu0
      %v3716 = vadd.f32 0.0, %v3715
      %v3717 = vpop.f32.mrf.mxu0
      %3718 = vmatprep.mubr.bf16.mxu0 0
      %3719 = vmatmul.mubr.bf16.gmra.mxu0 %v3581
      %v3720 = vpop.f32.mrf.mxu0
      %v3721 = vadd.f32 0.0, %v3720
      %v3722 = vpop.f32.mrf.mxu0
      %v3723 = vpop.f32.mrf.mxu0
      %v3724 = vadd.f32 0.0, %v3723
      %v3725 = vpop.f32.mrf.mxu0
      %3726 = vmatprep.mubr.bf16.mxu0 0
      %3727 = vmatmul.mubr.bf16.gmra.mxu0 %v3584
      %v3728 = vpop.f32.mrf.mxu0
      %v3729 = vadd.f32 0.0, %v3728
      %v3730 = vpop.f32.mrf.mxu0
      %v3731 = vpop.f32.mrf.mxu0
      %v3732 = vadd.f32 0.0, %v3731
      %v3733 = vpop.f32.mrf.mxu0
      %3734 = vmatprep.mubr.bf16.mxu0 0
      %3735 = vmatmul.mubr.bf16.gmra.mxu0 %v3587
      %v3736 = vpop.f32.mrf.mxu0
      %v3737 = vadd.f32 0.0, %v3736
      %v3738 = vpop.f32.mrf.mxu0
      %v3739 = vpop.f32.mrf.mxu0
      %v3740 = vadd.f32 0.0, %v3739
      %v3741 = vpop.f32.mrf.mxu0
      %3742 = vmatprep.mubr.bf16.mxu0 0
      %3743 = vmatmul.mubr.bf16.gmra.mxu0 %v3590
      %v3744 = vpop.f32.mrf.mxu0
      %v3745 = vadd.f32 0.0, %v3744
      %v3746 = vpop.f32.mrf.mxu0
      %v3747 = vpop.f32.mrf.mxu0
      %v3748 = vadd.f32 0.0, %v3747
      %v3749 = vpop.f32.mrf.mxu0
      %3750 = vmatprep.mubr.bf16.mxu0 0
      %3751 = vmatmul.mubr.bf16.gmra.mxu0 %v3593
      %v3752 = vpop.f32.mrf.mxu0
      %v3753 = vadd.f32 0.0, %v3752
      %v3754 = vpop.f32.mrf.mxu0
      %v3755 = vpop.f32.mrf.mxu0
      %v3756 = vadd.f32 0.0, %v3755
      %v3757 = vpop.f32.mrf.mxu0
      %3758 = vdwg.mxu0
      %v3759 = vadd.f32 %v3365, %v3633
      %v3760 = vadd.f32 %v3366, %v3636
      %v3761 = vadd.f32 %v3367, %v3641
      %v3762 = vadd.f32 %v3368, %v3644
      %v3763 = vadd.f32 %v3369, %v3649
      %v3764 = vadd.f32 %v3370, %v3652
      %v3765 = vadd.f32 %v3371, %v3657
      %v3766 = vadd.f32 %v3372, %v3660
      %v3767 = vadd.f32 %v3373, %v3665
      %v3768 = vadd.f32 %v3374, %v3668
      %v3769 = vadd.f32 %v3375, %v3673
      %v3770 = vadd.f32 %v3376, %v3676
      %v3771 = vadd.f32 %v3377, %v3681
      %v3772 = vadd.f32 %v3378, %v3684
      %v3773 = vadd.f32 %v3379, %v3689
      %v3774 = vadd.f32 %v3380, %v3692
      %v3775 = vadd.f32 %v3381, %v3697
      %v3776 = vadd.f32 %v3382, %v3700
      %v3777 = vadd.f32 %v3383, %v3705
      %v3778 = vadd.f32 %v3384, %v3708
      %v3779 = vadd.f32 %v3385, %v3713
      %v3780 = vadd.f32 %v3386, %v3716
      %v3781 = vadd.f32 %v3387, %v3721
      %v3782 = vadd.f32 %v3388, %v3724
      %v3783 = vadd.f32 %v3389, %v3729
      %v3784 = vadd.f32 %v3390, %v3732
      %v3785 = vadd.f32 %v3391, %v3737
      %v3786 = vadd.f32 %v3392, %v3740
      %v3787 = vadd.f32 %v3393, %v3745
      %v3788 = vadd.f32 %v3394, %v3748
      %v3789 = vadd.f32 %v3395, %v3753
      %v3790 = vadd.f32 %v3396, %v3756
      %v3791 = vld [vmem:[%s3397] sm:$0xf]
      %v3792 = vld [vmem:[%s3397 + $0x4] sm:$0xf]
      %v3793 = vld [vmem:[%s3397 + $0x8] sm:$0x1]
      %v3794 = vld [vmem:[%s3397 + $0xc] sm:$0xf]
      %v3795 = vld [vmem:[%s3397 + $0x10] sm:$0xf]
      %v3796 = vld [vmem:[%s3397 + $0x14] sm:$0x1]
      %v3797 = vld [vmem:[%s3397 + $0x18] sm:$0xf]
      %v3798 = vld [vmem:[%s3397 + $0x1c] sm:$0xf]
      %v3799 = vld [vmem:[%s3397 + $0x20] sm:$0x1]
      %v3800 = vld [vmem:[%s3397 + $0x24] sm:$0xf]
      %v3801 = vld [vmem:[%s3397 + $0x28] sm:$0xf]
      %v3802 = vld [vmem:[%s3397 + $0x2c] sm:$0x1]
      %v3803 = vld [vmem:[%s3397 + $0x30] sm:$0xf]
      %v3804 = vld [vmem:[%s3397 + $0x34] sm:$0xf]
      %v3805 = vld [vmem:[%s3397 + $0x38] sm:$0x1]
      %v3806 = vld [vmem:[%s3397 + $0x3c] sm:$0xf]
      %v3807 = vld [vmem:[%s3397 + $0x40] sm:$0xf]
      %v3808 = vld [vmem:[%s3397 + $0x44] sm:$0x1]
      %v3809 = vld [vmem:[%s3397 + $0x48] sm:$0xf]
      %v3810 = vld [vmem:[%s3397 + $0x4c] sm:$0xf]
      %v3811 = vld [vmem:[%s3397 + $0x50] sm:$0x1]
      %v3812 = vld [vmem:[%s3397 + $0x54] sm:$0xf]
      %v3813 = vld [vmem:[%s3397 + $0x58] sm:$0xf]
      %v3814 = vld [vmem:[%s3397 + $0x5c] sm:$0x1]
      %v3815 = vld [vmem:[%s3397 + $0x60] sm:$0xf]
      %v3816 = vld [vmem:[%s3397 + $0x64] sm:$0xf]
      %v3817 = vld [vmem:[%s3397 + $0x68] sm:$0x1]
      %v3818 = vld [vmem:[%s3397 + $0x6c] sm:$0xf]
      %v3819 = vld [vmem:[%s3397 + $0x70] sm:$0xf]
      %v3820 = vld [vmem:[%s3397 + $0x74] sm:$0x1]
      %v3821 = vld [vmem:[%s3397 + $0x78] sm:$0xf]
      %v3822 = vld [vmem:[%s3397 + $0x7c] sm:$0xf]
      %v3823 = vld [vmem:[%s3397 + $0x80] sm:$0x1]
      %v3824 = vld [vmem:[%s3397 + $0x84] sm:$0xf]
      %v3825 = vld [vmem:[%s3397 + $0x88] sm:$0xf]
      %v3826 = vld [vmem:[%s3397 + $0x8c] sm:$0x1]
      %v3827 = vld [vmem:[%s3397 + $0x90] sm:$0xf]
      %v3828 = vld [vmem:[%s3397 + $0x94] sm:$0xf]
      %v3829 = vld [vmem:[%s3397 + $0x98] sm:$0x1]
      %v3830 = vld [vmem:[%s3397 + $0x9c] sm:$0xf]
      %v3831 = vld [vmem:[%s3397 + $0xa0] sm:$0xf]
      %v3832 = vld [vmem:[%s3397 + $0xa4] sm:$0x1]
      %v3833 = vld [vmem:[%s3397 + $0xa8] sm:$0xf]
      %v3834 = vld [vmem:[%s3397 + $0xac] sm:$0xf]
      %v3835 = vld [vmem:[%s3397 + $0xb0] sm:$0x1]
      %v3836 = vld [vmem:[%s3397 + $0xb4] sm:$0xf]
      %v3837 = vld [vmem:[%s3397 + $0xb8] sm:$0xf]
      %v3838 = vld [vmem:[%s3397 + $0xbc] sm:$0x1]
      %v3840 = vshrl.u32 %v3791, 16
      %v3842 = vrot.slane %v3840, 4
      %v3843 = vshll.u32 %v3791, 16
      %v3845 = vrot.slane %v3843, 5
      %v3846 = vor.u32 %v3842, %v3845
      %v3847 = vrot.slane %v3846, 4
      %v3849 = vshll.u32 %v3792, 16
      %v3851 = vrot.slane %v3849, 5
      %v3852 = vsel %vm242, %v3847, %v3851
      %v3853 = vshrl.u32 %v3792, 16
      %v3855 = vrot.slane %v3853, 4
      %v3856 = vor.u32 %v3855, %v3851
      %v3857 = vrot.slane %v3856, 4
      %v3859 = vshll.u32 %v3793, 16
      %v3861 = vrot.slane %v3859, 5
      %v3862 = vsel %vm242, %v3857, %v3861
      %v3864 = vshrl.u32 %v3794, 16
      %v3866 = vrot.slane %v3864, 4
      %v3867 = vshll.u32 %v3794, 16
      %v3869 = vrot.slane %v3867, 5
      %v3870 = vor.u32 %v3866, %v3869
      %v3871 = vrot.slane %v3870, 4
      %v3873 = vshll.u32 %v3795, 16
      %v3875 = vrot.slane %v3873, 5
      %v3876 = vsel %vm242, %v3871, %v3875
      %v3877 = vshrl.u32 %v3795, 16
      %v3879 = vrot.slane %v3877, 4
      %v3880 = vor.u32 %v3879, %v3875
      %v3881 = vrot.slane %v3880, 4
      %v3883 = vshll.u32 %v3796, 16
      %v3885 = vrot.slane %v3883, 5
      %v3886 = vsel %vm242, %v3881, %v3885
      %v3888 = vshrl.u32 %v3797, 16
      %v3890 = vrot.slane %v3888, 4
      %v3891 = vshll.u32 %v3797, 16
      %v3893 = vrot.slane %v3891, 5
      %v3894 = vor.u32 %v3890, %v3893
      %v3895 = vrot.slane %v3894, 4
      %v3897 = vshll.u32 %v3798, 16
      %v3899 = vrot.slane %v3897, 5
      %v3900 = vsel %vm242, %v3895, %v3899
      %v3901 = vshrl.u32 %v3798, 16
      %v3903 = vrot.slane %v3901, 4
      %v3904 = vor.u32 %v3903, %v3899
      %v3905 = vrot.slane %v3904, 4
      %v3907 = vshll.u32 %v3799, 16
      %v3909 = vrot.slane %v3907, 5
      %v3910 = vsel %vm242, %v3905, %v3909
      %v3912 = vshrl.u32 %v3800, 16
      %v3914 = vrot.slane %v3912, 4
      %v3915 = vshll.u32 %v3800, 16
      %v3917 = vrot.slane %v3915, 5
      %v3918 = vor.u32 %v3914, %v3917
      %v3919 = vrot.slane %v3918, 4
      %v3921 = vshll.u32 %v3801, 16
      %v3923 = vrot.slane %v3921, 5
      %v3924 = vsel %vm242, %v3919, %v3923
      %v3925 = vshrl.u32 %v3801, 16
      %v3927 = vrot.slane %v3925, 4
      %v3928 = vor.u32 %v3927, %v3923
      %v3929 = vrot.slane %v3928, 4
      %v3931 = vshll.u32 %v3802, 16
      %v3933 = vrot.slane %v3931, 5
      %v3934 = vsel %vm242, %v3929, %v3933
      %v3936 = vshrl.u32 %v3803, 16
      %v3938 = vrot.slane %v3936, 4
      %v3939 = vshll.u32 %v3803, 16
      %v3941 = vrot.slane %v3939, 5
      %v3942 = vor.u32 %v3938, %v3941
      %v3943 = vrot.slane %v3942, 4
      %v3945 = vshll.u32 %v3804, 16
      %v3947 = vrot.slane %v3945, 5
      %v3948 = vsel %vm242, %v3943, %v3947
      %v3949 = vshrl.u32 %v3804, 16
      %v3951 = vrot.slane %v3949, 4
      %v3952 = vor.u32 %v3951, %v3947
      %v3953 = vrot.slane %v3952, 4
      %v3955 = vshll.u32 %v3805, 16
      %v3957 = vrot.slane %v3955, 5
      %v3958 = vsel %vm242, %v3953, %v3957
      %v3960 = vshrl.u32 %v3806, 16
      %v3962 = vrot.slane %v3960, 4
      %v3963 = vshll.u32 %v3806, 16
      %v3965 = vrot.slane %v3963, 5
      %v3966 = vor.u32 %v3962, %v3965
      %v3967 = vrot.slane %v3966, 4
      %v3969 = vshll.u32 %v3807, 16
      %v3971 = vrot.slane %v3969, 5
      %v3972 = vsel %vm242, %v3967, %v3971
      %v3973 = vshrl.u32 %v3807, 16
      %v3975 = vrot.slane %v3973, 4
      %v3976 = vor.u32 %v3975, %v3971
      %v3977 = vrot.slane %v3976, 4
      %v3979 = vshll.u32 %v3808, 16
      %v3981 = vrot.slane %v3979, 5
      %v3982 = vsel %vm242, %v3977, %v3981
      %v3984 = vshrl.u32 %v3809, 16
      %v3986 = vrot.slane %v3984, 4
      %v3987 = vshll.u32 %v3809, 16
      %v3989 = vrot.slane %v3987, 5
      %v3990 = vor.u32 %v3986, %v3989
      %v3991 = vrot.slane %v3990, 4
      %v3993 = vshll.u32 %v3810, 16
      %v3995 = vrot.slane %v3993, 5
      %v3996 = vsel %vm242, %v3991, %v3995
      %v3997 = vshrl.u32 %v3810, 16
      %v3999 = vrot.slane %v3997, 4
      %v4000 = vor.u32 %v3999, %v3995
      %v4001 = vrot.slane %v4000, 4
      %v4003 = vshll.u32 %v3811, 16
      %v4005 = vrot.slane %v4003, 5
      %v4006 = vsel %vm242, %v4001, %v4005
      %v4008 = vshrl.u32 %v3812, 16
      %v4010 = vrot.slane %v4008, 4
      %v4011 = vshll.u32 %v3812, 16
      %v4013 = vrot.slane %v4011, 5
      %v4014 = vor.u32 %v4010, %v4013
      %v4015 = vrot.slane %v4014, 4
      %v4017 = vshll.u32 %v3813, 16
      %v4019 = vrot.slane %v4017, 5
      %v4020 = vsel %vm242, %v4015, %v4019
      %v4021 = vshrl.u32 %v3813, 16
      %v4023 = vrot.slane %v4021, 4
      %v4024 = vor.u32 %v4023, %v4019
      %v4025 = vrot.slane %v4024, 4
      %v4027 = vshll.u32 %v3814, 16
      %v4029 = vrot.slane %v4027, 5
      %v4030 = vsel %vm242, %v4025, %v4029
      %v4032 = vshrl.u32 %v3815, 16
      %v4034 = vrot.slane %v4032, 4
      %v4035 = vshll.u32 %v3815, 16
      %v4037 = vrot.slane %v4035, 5
      %v4038 = vor.u32 %v4034, %v4037
      %v4039 = vrot.slane %v4038, 4
      %v4041 = vshll.u32 %v3816, 16
      %v4043 = vrot.slane %v4041, 5
      %v4044 = vsel %vm242, %v4039, %v4043
      %v4045 = vshrl.u32 %v3816, 16
      %v4047 = vrot.slane %v4045, 4
      %v4048 = vor.u32 %v4047, %v4043
      %v4049 = vrot.slane %v4048, 4
      %v4051 = vshll.u32 %v3817, 16
      %v4053 = vrot.slane %v4051, 5
      %v4054 = vsel %vm242, %v4049, %v4053
      %v4056 = vshrl.u32 %v3818, 16
      %v4058 = vrot.slane %v4056, 4
      %v4059 = vshll.u32 %v3818, 16
      %v4061 = vrot.slane %v4059, 5
      %v4062 = vor.u32 %v4058, %v4061
      %v4063 = vrot.slane %v4062, 4
      %v4065 = vshll.u32 %v3819, 16
      %v4067 = vrot.slane %v4065, 5
      %v4068 = vsel %vm242, %v4063, %v4067
      %v4069 = vshrl.u32 %v3819, 16
      %v4071 = vrot.slane %v4069, 4
      %v4072 = vor.u32 %v4071, %v4067
      %v4073 = vrot.slane %v4072, 4
      %v4075 = vshll.u32 %v3820, 16
      %v4077 = vrot.slane %v4075, 5
      %v4078 = vsel %vm242, %v4073, %v4077
      %v4080 = vshrl.u32 %v3821, 16
      %v4082 = vrot.slane %v4080, 4
      %v4083 = vshll.u32 %v3821, 16
      %v4085 = vrot.slane %v4083, 5
      %v4086 = vor.u32 %v4082, %v4085
      %v4087 = vrot.slane %v4086, 4
      %v4089 = vshll.u32 %v3822, 16
      %v4091 = vrot.slane %v4089, 5
      %v4092 = vsel %vm242, %v4087, %v4091
      %v4093 = vshrl.u32 %v3822, 16
      %v4095 = vrot.slane %v4093, 4
      %v4096 = vor.u32 %v4095, %v4091
      %v4097 = vrot.slane %v4096, 4
      %v4099 = vshll.u32 %v3823, 16
      %v4101 = vrot.slane %v4099, 5
      %v4102 = vsel %vm242, %v4097, %v4101
      %v4104 = vshrl.u32 %v3824, 16
      %v4106 = vrot.slane %v4104, 4
      %v4107 = vshll.u32 %v3824, 16
      %v4109 = vrot.slane %v4107, 5
      %v4110 = vor.u32 %v4106, %v4109
      %v4111 = vrot.slane %v4110, 4
      %v4113 = vshll.u32 %v3825, 16
      %v4115 = vrot.slane %v4113, 5
      %v4116 = vsel %vm242, %v4111, %v4115
      %v4117 = vshrl.u32 %v3825, 16
      %v4119 = vrot.slane %v4117, 4
      %v4120 = vor.u32 %v4119, %v4115
      %v4121 = vrot.slane %v4120, 4
      %v4123 = vshll.u32 %v3826, 16
      %v4125 = vrot.slane %v4123, 5
      %v4126 = vsel %vm242, %v4121, %v4125
      %v4128 = vshrl.u32 %v3827, 16
      %v4130 = vrot.slane %v4128, 4
      %v4131 = vshll.u32 %v3827, 16
      %v4133 = vrot.slane %v4131, 5
      %v4134 = vor.u32 %v4130, %v4133
      %v4135 = vrot.slane %v4134, 4
      %v4137 = vshll.u32 %v3828, 16
      %v4139 = vrot.slane %v4137, 5
      %v4140 = vsel %vm242, %v4135, %v4139
      %v4141 = vshrl.u32 %v3828, 16
      %v4143 = vrot.slane %v4141, 4
      %v4144 = vor.u32 %v4143, %v4139
      %v4145 = vrot.slane %v4144, 4
      %v4147 = vshll.u32 %v3829, 16
      %v4149 = vrot.slane %v4147, 5
      %v4150 = vsel %vm242, %v4145, %v4149
      %v4152 = vshrl.u32 %v3830, 16
      %v4154 = vrot.slane %v4152, 4
      %v4155 = vshll.u32 %v3830, 16
      %v4157 = vrot.slane %v4155, 5
      %v4158 = vor.u32 %v4154, %v4157
      %v4159 = vrot.slane %v4158, 4
      %v4161 = vshll.u32 %v3831, 16
      %v4163 = vrot.slane %v4161, 5
      %v4164 = vsel %vm242, %v4159, %v4163
      %v4165 = vshrl.u32 %v3831, 16
      %v4167 = vrot.slane %v4165, 4
      %v4168 = vor.u32 %v4167, %v4163
      %v4169 = vrot.slane %v4168, 4
      %v4171 = vshll.u32 %v3832, 16
      %v4173 = vrot.slane %v4171, 5
      %v4174 = vsel %vm242, %v4169, %v4173
      %v4176 = vshrl.u32 %v3833, 16
      %v4178 = vrot.slane %v4176, 4
      %v4179 = vshll.u32 %v3833, 16
      %v4181 = vrot.slane %v4179, 5
      %v4182 = vor.u32 %v4178, %v4181
      %v4183 = vrot.slane %v4182, 4
      %v4185 = vshll.u32 %v3834, 16
      %v4187 = vrot.slane %v4185, 5
      %v4188 = vsel %vm242, %v4183, %v4187
      %v4189 = vshrl.u32 %v3834, 16
      %v4191 = vrot.slane %v4189, 4
      %v4192 = vor.u32 %v4191, %v4187
      %v4193 = vrot.slane %v4192, 4
      %v4195 = vshll.u32 %v3835, 16
      %v4197 = vrot.slane %v4195, 5
      %v4198 = vsel %vm242, %v4193, %v4197
      %v4200 = vshrl.u32 %v3836, 16
      %v4202 = vrot.slane %v4200, 4
      %v4203 = vshll.u32 %v3836, 16
      %v4205 = vrot.slane %v4203, 5
      %v4206 = vor.u32 %v4202, %v4205
      %v4207 = vrot.slane %v4206, 4
      %v4209 = vshll.u32 %v3837, 16
      %v4211 = vrot.slane %v4209, 5
      %v4212 = vsel %vm242, %v4207, %v4211
      %v4213 = vshrl.u32 %v3837, 16
      %v4215 = vrot.slane %v4213, 4
      %v4216 = vor.u32 %v4215, %v4211
      %v4217 = vrot.slane %v4216, 4
      %v4219 = vshll.u32 %v3838, 16
      %v4221 = vrot.slane %v4219, 5
      %v4222 = vsel %vm242, %v4217, %v4221
      %s4223 = scalar_lea.vmem %s1, 252
      %v4224 = vld [vmem:[%s4223] sm:$0xf]
      %v4225 = vld [vmem:[%s4223 + $0x4] sm:$0xf]
      %v4226 = vld [vmem:[%s4223 + $0x8] sm:$0xf]
      %v4227 = vld [vmem:[%s4223 + $0xc] sm:$0xf]
      %v4228 = vld [vmem:[%s4223 + $0x10] sm:$0xf]
      %v4229 = vld [vmem:[%s4223 + $0x14] sm:$0xf]
      %v4230 = vld [vmem:[%s4223 + $0x18] sm:$0xf]
      %v4231 = vld [vmem:[%s4223 + $0x1c] sm:$0xf]
      %v4232 = vld [vmem:[%s4223 + $0x20] sm:$0xf]
      %v4233 = vunpack.c.l.b16 %v3852
      %v4234 = vunpack.c.l.b16 %v3862
      %v4235 = vunpack.c.l.b16 %v3876
      %v4236 = vunpack.c.l.b16 %v3886
      %v4237 = vunpack.c.l.b16 %v3900
      %v4238 = vunpack.c.l.b16 %v3910
      %v4239 = vunpack.c.l.b16 %v3924
      %v4240 = vunpack.c.l.b16 %v3934
      %v4241 = vunpack.c.l.b16 %v3948
      %v4242 = vunpack.c.l.b16 %v3958
      %v4243 = vunpack.c.l.b16 %v3972
      %v4244 = vunpack.c.l.b16 %v3982
      %v4245 = vunpack.c.l.b16 %v3996
      %v4246 = vunpack.c.l.b16 %v4006
      %v4247 = vunpack.c.l.b16 %v4020
      %v4248 = vunpack.c.l.b16 %v4030
      %v4249 = vunpack.c.l.b16 %v4044
      %v4250 = vunpack.c.l.b16 %v4054
      %v4251 = vunpack.c.l.b16 %v4068
      %v4252 = vunpack.c.l.b16 %v4078
      %v4253 = vunpack.c.l.b16 %v4092
      %v4254 = vunpack.c.l.b16 %v4102
      %v4255 = vunpack.c.l.b16 %v4116
      %v4256 = vunpack.c.l.b16 %v4126
      %v4257 = vunpack.c.l.b16 %v4140
      %v4258 = vunpack.c.l.b16 %v4150
      %v4259 = vunpack.c.l.b16 %v4164
      %v4260 = vunpack.c.l.b16 %v4174
      %v4261 = vunpack.c.l.b16 %v4188
      %v4262 = vunpack.c.l.b16 %v4198
      %v4263 = vunpack.c.l.b16 %v4212
      %v4264 = vunpack.c.l.b16 %v4222
      %v4265 = vpack.c.b16 %v4234, %v4233
      %v4266 = vpack.c.b16 %v4236, %v4235
      %v4267 = vpack.c.b16 %v4238, %v4237
      %v4268 = vpack.c.b16 %v4240, %v4239
      %v4269 = vpack.c.b16 %v4242, %v4241
      %v4270 = vpack.c.b16 %v4244, %v4243
      %v4271 = vpack.c.b16 %v4246, %v4245
      %v4272 = vpack.c.b16 %v4248, %v4247
      %v4273 = vpack.c.b16 %v4250, %v4249
      %v4274 = vpack.c.b16 %v4252, %v4251
      %v4275 = vpack.c.b16 %v4254, %v4253
      %v4276 = vpack.c.b16 %v4256, %v4255
      %v4277 = vpack.c.b16 %v4258, %v4257
      %v4278 = vpack.c.b16 %v4260, %v4259
      %v4279 = vpack.c.b16 %v4262, %v4261
      %v4280 = vpack.c.b16 %v4264, %v4263
      %v4290 = vunpack.c.l.b16 %v4224
      %v4291 = vunpack.c.l.b16 %v4225
      %v4292 = vunpack.c.l.b16 %v4226
      %v4293 = vunpack.c.l.b16 %v4227
      %v4294 = vunpack.c.l.b16 %v4228
      %v4295 = vunpack.c.l.b16 %v4229
      %v4296 = vunpack.c.l.b16 %v4230
      %v4297 = vunpack.c.l.b16 %v4231
      %v4298 = vunpack.c.l.b16 %v4232
      %v4299 = vpack.c.b16 %v4291, %v4290
      %v4300 = vpack.c.b16 %v4293, %v4292
      %v4301 = vpack.c.b16 %v4295, %v4294
      %v4302 = vpack.c.b16 %v4297, %v4296
      %v4303 = vpack.c.b16 %v4298, %v4298
      %v4309 = vsel %vm712, %v4265, 0
      %v4312 = vsel %vm712, %v4266, 0
      %v4315 = vsel %vm712, %v4267, 0
      %v4318 = vsel %vm712, %v4268, 0
      %v4321 = vsel %vm712, %v4269, 0
      %v4324 = vsel %vm712, %v4270, 0
      %v4327 = vsel %vm712, %v4271, 0
      %v4330 = vsel %vm712, %v4272, 0
      %v4333 = vsel %vm712, %v4273, 0
      %v4336 = vsel %vm712, %v4274, 0
      %v4339 = vsel %vm712, %v4275, 0
      %v4342 = vsel %vm712, %v4276, 0
      %v4345 = vsel %vm712, %v4277, 0
      %v4348 = vsel %vm712, %v4278, 0
      %v4351 = vsel %vm712, %v4279, 0
      %v4354 = vsel %vm712, %v4280, 0
      %v4357 = vsel %vm761, %v4303, 0
      %4359 = vmatprep.subr.bf16.mxu0 0
      %4360 = vmatpush1.bf16.msra.mxu0 0
      %4361 = vmatprep.subr.bf16.mxu0 0
      %4362 = vmatpush1.bf16.msra.mxu0 0
      %4363 = vmatprep.subr.bf16.mxu0 0
      %4364 = vmatpush1.bf16.msra.mxu0 0
      %4365 = vmatprep.subr.bf16.mxu0 0
      %4366 = vmatpush1.bf16.msra.mxu0 %v4357
      %4367 = vmatprep.subr.bf16.mxu0 0
      %4368 = vmatpush1.bf16.msra.mxu0 %v4302
      %4369 = vmatprep.subr.bf16.mxu0 0
      %4370 = vmatpush1.bf16.msra.mxu0 %v4301
      %4371 = vmatprep.subr.bf16.mxu0 0
      %4372 = vmatpush1.bf16.msra.mxu0 %v4300
      %4373 = vmatprep.subr.bf16.mxu0 0
      %4374 = vmatpush1.bf16.msra.mxu0 %v4299
      %4375 = vmatprep.subr.bf16.mxu0 0
      %4376 = vmatpush2.bf16.msra.mxu0 0
      %4377 = vmatprep.subr.bf16.mxu0 0
      %4378 = vmatpush2.bf16.msra.mxu0 0
      %4379 = vmatprep.subr.bf16.mxu0 0
      %4380 = vmatpush2.bf16.msra.mxu0 0
      %4381 = vmatprep.subr.bf16.mxu0 0
      %4382 = vmatpush2.bf16.msra.mxu0 0
      %4383 = vmatprep.subr.bf16.mxu0 0
      %4384 = vmatpush2.bf16.msra.mxu0 0
      %4385 = vmatprep.subr.bf16.mxu0 0
      %4386 = vmatpush2.bf16.msra.mxu0 0
      %4387 = vmatprep.subr.bf16.mxu0 0
      %4388 = vmatpush2.bf16.msra.mxu0 0
      %4389 = vmatprep.subr.bf16.mxu0 0
      %4390 = vmatpush2.bf16.msra.mxu0 0
      %4391 = vmatprep.mubr.bf16.mxu0 0
      %4392 = vmatmul.mubr.bf16.gmra.mxu0 %v4309
      %v4393 = vpop.f32.mrf.mxu0
      %v4394 = vadd.f32 0.0, %v4393
      %v4395 = vpop.f32.mrf.mxu0
      %v4396 = vpop.f32.mrf.mxu0
      %v4397 = vadd.f32 0.0, %v4396
      %v4398 = vpop.f32.mrf.mxu0
      %4399 = vmatprep.mubr.bf16.mxu0 0
      %4400 = vmatmul.mubr.bf16.gmra.mxu0 %v4312
      %v4401 = vpop.f32.mrf.mxu0
      %v4402 = vadd.f32 0.0, %v4401
      %v4403 = vpop.f32.mrf.mxu0
      %v4404 = vpop.f32.mrf.mxu0
      %v4405 = vadd.f32 0.0, %v4404
      %v4406 = vpop.f32.mrf.mxu0
      %4407 = vmatprep.mubr.bf16.mxu0 0
      %4408 = vmatmul.mubr.bf16.gmra.mxu0 %v4315
      %v4409 = vpop.f32.mrf.mxu0
      %v4410 = vadd.f32 0.0, %v4409
      %v4411 = vpop.f32.mrf.mxu0
      %v4412 = vpop.f32.mrf.mxu0
      %v4413 = vadd.f32 0.0, %v4412
      %v4414 = vpop.f32.mrf.mxu0
      %4415 = vmatprep.mubr.bf16.mxu0 0
      %4416 = vmatmul.mubr.bf16.gmra.mxu0 %v4318
      %v4417 = vpop.f32.mrf.mxu0
      %v4418 = vadd.f32 0.0, %v4417
      %v4419 = vpop.f32.mrf.mxu0
      %v4420 = vpop.f32.mrf.mxu0
      %v4421 = vadd.f32 0.0, %v4420
      %v4422 = vpop.f32.mrf.mxu0
      %4423 = vmatprep.mubr.bf16.mxu0 0
      %4424 = vmatmul.mubr.bf16.gmra.mxu0 %v4321
      %v4425 = vpop.f32.mrf.mxu0
      %v4426 = vadd.f32 0.0, %v4425
      %v4427 = vpop.f32.mrf.mxu0
      %v4428 = vpop.f32.mrf.mxu0
      %v4429 = vadd.f32 0.0, %v4428
      %v4430 = vpop.f32.mrf.mxu0
      %4431 = vmatprep.mubr.bf16.mxu0 0
      %4432 = vmatmul.mubr.bf16.gmra.mxu0 %v4324
      %v4433 = vpop.f32.mrf.mxu0
      %v4434 = vadd.f32 0.0, %v4433
      %v4435 = vpop.f32.mrf.mxu0
      %v4436 = vpop.f32.mrf.mxu0
      %v4437 = vadd.f32 0.0, %v4436
      %v4438 = vpop.f32.mrf.mxu0
      %4439 = vmatprep.mubr.bf16.mxu0 0
      %4440 = vmatmul.mubr.bf16.gmra.mxu0 %v4327
      %v4441 = vpop.f32.mrf.mxu0
      %v4442 = vadd.f32 0.0, %v4441
      %v4443 = vpop.f32.mrf.mxu0
      %v4444 = vpop.f32.mrf.mxu0
      %v4445 = vadd.f32 0.0, %v4444
      %v4446 = vpop.f32.mrf.mxu0
      %4447 = vmatprep.mubr.bf16.mxu0 0
      %4448 = vmatmul.mubr.bf16.gmra.mxu0 %v4330
      %v4449 = vpop.f32.mrf.mxu0
      %v4450 = vadd.f32 0.0, %v4449
      %v4451 = vpop.f32.mrf.mxu0
      %v4452 = vpop.f32.mrf.mxu0
      %v4453 = vadd.f32 0.0, %v4452
      %v4454 = vpop.f32.mrf.mxu0
      %4455 = vmatprep.mubr.bf16.mxu0 0
      %4456 = vmatmul.mubr.bf16.gmra.mxu0 %v4333
      %v4457 = vpop.f32.mrf.mxu0
      %v4458 = vadd.f32 0.0, %v4457
      %v4459 = vpop.f32.mrf.mxu0
      %v4460 = vpop.f32.mrf.mxu0
      %v4461 = vadd.f32 0.0, %v4460
      %v4462 = vpop.f32.mrf.mxu0
      %4463 = vmatprep.mubr.bf16.mxu0 0
      %4464 = vmatmul.mubr.bf16.gmra.mxu0 %v4336
      %v4465 = vpop.f32.mrf.mxu0
      %v4466 = vadd.f32 0.0, %v4465
      %v4467 = vpop.f32.mrf.mxu0
      %v4468 = vpop.f32.mrf.mxu0
      %v4469 = vadd.f32 0.0, %v4468
      %v4470 = vpop.f32.mrf.mxu0
      %4471 = vmatprep.mubr.bf16.mxu0 0
      %4472 = vmatmul.mubr.bf16.gmra.mxu0 %v4339
      %v4473 = vpop.f32.mrf.mxu0
      %v4474 = vadd.f32 0.0, %v4473
      %v4475 = vpop.f32.mrf.mxu0
      %v4476 = vpop.f32.mrf.mxu0
      %v4477 = vadd.f32 0.0, %v4476
      %v4478 = vpop.f32.mrf.mxu0
      %4479 = vmatprep.mubr.bf16.mxu0 0
      %4480 = vmatmul.mubr.bf16.gmra.mxu0 %v4342
      %v4481 = vpop.f32.mrf.mxu0
      %v4482 = vadd.f32 0.0, %v4481
      %v4483 = vpop.f32.mrf.mxu0
      %v4484 = vpop.f32.mrf.mxu0
      %v4485 = vadd.f32 0.0, %v4484
      %v4486 = vpop.f32.mrf.mxu0
      %4487 = vmatprep.mubr.bf16.mxu0 0
      %4488 = vmatmul.mubr.bf16.gmra.mxu0 %v4345
      %v4489 = vpop.f32.mrf.mxu0
      %v4490 = vadd.f32 0.0, %v4489
      %v4491 = vpop.f32.mrf.mxu0
      %v4492 = vpop.f32.mrf.mxu0
      %v4493 = vadd.f32 0.0, %v4492
      %v4494 = vpop.f32.mrf.mxu0
      %4495 = vmatprep.mubr.bf16.mxu0 0
      %4496 = vmatmul.mubr.bf16.gmra.mxu0 %v4348
      %v4497 = vpop.f32.mrf.mxu0
      %v4498 = vadd.f32 0.0, %v4497
      %v4499 = vpop.f32.mrf.mxu0
      %v4500 = vpop.f32.mrf.mxu0
      %v4501 = vadd.f32 0.0, %v4500
      %v4502 = vpop.f32.mrf.mxu0
      %4503 = vmatprep.mubr.bf16.mxu0 0
      %4504 = vmatmul.mubr.bf16.gmra.mxu0 %v4351
      %v4505 = vpop.f32.mrf.mxu0
      %v4506 = vadd.f32 0.0, %v4505
      %v4507 = vpop.f32.mrf.mxu0
      %v4508 = vpop.f32.mrf.mxu0
      %v4509 = vadd.f32 0.0, %v4508
      %v4510 = vpop.f32.mrf.mxu0
      %4511 = vmatprep.mubr.bf16.mxu0 0
      %4512 = vmatmul.mubr.bf16.gmra.mxu0 %v4354
      %v4513 = vpop.f32.mrf.mxu0
      %v4514 = vadd.f32 0.0, %v4513
      %v4515 = vpop.f32.mrf.mxu0
      %v4516 = vpop.f32.mrf.mxu0
      %v4517 = vadd.f32 0.0, %v4516
      %v4518 = vpop.f32.mrf.mxu0
      %4519 = vdwg.mxu0
      %v4520 = vadd.f32 %v3759, %v4394
      %v4521 = vadd.f32 %v3760, %v4397
      %v4522 = vadd.f32 %v3761, %v4402
      %v4523 = vadd.f32 %v3762, %v4405
      %v4524 = vadd.f32 %v3763, %v4410
      %v4525 = vadd.f32 %v3764, %v4413
      %v4526 = vadd.f32 %v3765, %v4418
      %v4527 = vadd.f32 %v3766, %v4421
      %v4528 = vadd.f32 %v3767, %v4426
      %v4529 = vadd.f32 %v3768, %v4429
      %v4530 = vadd.f32 %v3769, %v4434
      %v4531 = vadd.f32 %v3770, %v4437
      %v4532 = vadd.f32 %v3771, %v4442
      %v4533 = vadd.f32 %v3772, %v4445
      %v4534 = vadd.f32 %v3773, %v4450
      %v4535 = vadd.f32 %v3774, %v4453
      %v4536 = vadd.f32 %v3775, %v4458
      %v4537 = vadd.f32 %v3776, %v4461
      %v4538 = vadd.f32 %v3777, %v4466
      %v4539 = vadd.f32 %v3778, %v4469
      %v4540 = vadd.f32 %v3779, %v4474
      %v4541 = vadd.f32 %v3780, %v4477
      %v4542 = vadd.f32 %v3781, %v4482
      %v4543 = vadd.f32 %v3782, %v4485
      %v4544 = vadd.f32 %v3783, %v4490
      %v4545 = vadd.f32 %v3784, %v4493
      %v4546 = vadd.f32 %v3785, %v4498
      %v4547 = vadd.f32 %v3786, %v4501
      %v4548 = vadd.f32 %v3787, %v4506
      %v4549 = vadd.f32 %v3788, %v4509
      %v4550 = vadd.f32 %v3789, %v4514
      %v4551 = vadd.f32 %v3790, %v4517
      %v4552 = vld [vmem:[%s3397] sm:$0xe]
      %v4553 = vld [vmem:[%s3397 + $0xc] sm:$0xe]
      %v4554 = vld [vmem:[%s3397 + $0x18] sm:$0xe]
      %v4555 = vld [vmem:[%s3397 + $0x24] sm:$0xe]
      %v4556 = vld [vmem:[%s3397 + $0x30] sm:$0xe]
      %v4557 = vld [vmem:[%s3397 + $0x3c] sm:$0xe]
      %v4558 = vld [vmem:[%s3397 + $0x48] sm:$0xe]
      %v4559 = vld [vmem:[%s3397 + $0x54] sm:$0xe]
      %v4560 = vld [vmem:[%s3397 + $0x60] sm:$0xe]
      %v4561 = vld [vmem:[%s3397 + $0x6c] sm:$0xe]
      %v4562 = vld [vmem:[%s3397 + $0x78] sm:$0xe]
      %v4563 = vld [vmem:[%s3397 + $0x84] sm:$0xe]
      %v4564 = vld [vmem:[%s3397 + $0x90] sm:$0xe]
      %v4565 = vld [vmem:[%s3397 + $0x9c] sm:$0xe]
      %v4566 = vld [vmem:[%s3397 + $0xa8] sm:$0xe]
      %v4567 = vld [vmem:[%s3397 + $0xb4] sm:$0xe]
      %v4616 = vrot.slane %v4552, 5
      %v4617 = vrot.slane %v4616, 4
      %v4618 = vrot.slane %v3792, 5
      %v4619 = vsel %vm1295, %v4617, %v4618
      %v4620 = vrot.slane %v4618, 4
      %v4621 = vrot.slane %v3793, 5
      %v4622 = vsel %vm1295, %v4620, %v4621
      %v4623 = vrot.slane %v4553, 5
      %v4624 = vrot.slane %v4623, 4
      %v4625 = vrot.slane %v3795, 5
      %v4626 = vsel %vm1295, %v4624, %v4625
      %v4627 = vrot.slane %v4625, 4
      %v4628 = vrot.slane %v3796, 5
      %v4629 = vsel %vm1295, %v4627, %v4628
      %v4630 = vrot.slane %v4554, 5
      %v4631 = vrot.slane %v4630, 4
      %v4632 = vrot.slane %v3798, 5
      %v4633 = vsel %vm1295, %v4631, %v4632
      %v4634 = vrot.slane %v4632, 4
      %v4635 = vrot.slane %v3799, 5
      %v4636 = vsel %vm1295, %v4634, %v4635
      %v4637 = vrot.slane %v4555, 5
      %v4638 = vrot.slane %v4637, 4
      %v4639 = vrot.slane %v3801, 5
      %v4640 = vsel %vm1295, %v4638, %v4639
      %v4641 = vrot.slane %v4639, 4
      %v4642 = vrot.slane %v3802, 5
      %v4643 = vsel %vm1295, %v4641, %v4642
      %v4644 = vrot.slane %v4556, 5
      %v4645 = vrot.slane %v4644, 4
      %v4646 = vrot.slane %v3804, 5
      %v4647 = vsel %vm1295, %v4645, %v4646
      %v4648 = vrot.slane %v4646, 4
      %v4649 = vrot.slane %v3805, 5
      %v4650 = vsel %vm1295, %v4648, %v4649
      %v4651 = vrot.slane %v4557, 5
      %v4652 = vrot.slane %v4651, 4
      %v4653 = vrot.slane %v3807, 5
      %v4654 = vsel %vm1295, %v4652, %v4653
      %v4655 = vrot.slane %v4653, 4
      %v4656 = vrot.slane %v3808, 5
      %v4657 = vsel %vm1295, %v4655, %v4656
      %v4658 = vrot.slane %v4558, 5
      %v4659 = vrot.slane %v4658, 4
      %v4660 = vrot.slane %v3810, 5
      %v4661 = vsel %vm1295, %v4659, %v4660
      %v4662 = vrot.slane %v4660, 4
      %v4663 = vrot.slane %v3811, 5
      %v4664 = vsel %vm1295, %v4662, %v4663
      %v4665 = vrot.slane %v4559, 5
      %v4666 = vrot.slane %v4665, 4
      %v4667 = vrot.slane %v3813, 5
      %v4668 = vsel %vm1295, %v4666, %v4667
      %v4669 = vrot.slane %v4667, 4
      %v4670 = vrot.slane %v3814, 5
      %v4671 = vsel %vm1295, %v4669, %v4670
      %v4672 = vrot.slane %v4560, 5
      %v4673 = vrot.slane %v4672, 4
      %v4674 = vrot.slane %v3816, 5
      %v4675 = vsel %vm1295, %v4673, %v4674
      %v4676 = vrot.slane %v4674, 4
      %v4677 = vrot.slane %v3817, 5
      %v4678 = vsel %vm1295, %v4676, %v4677
      %v4679 = vrot.slane %v4561, 5
      %v4680 = vrot.slane %v4679, 4
      %v4681 = vrot.slane %v3819, 5
      %v4682 = vsel %vm1295, %v4680, %v4681
      %v4683 = vrot.slane %v4681, 4
      %v4684 = vrot.slane %v3820, 5
      %v4685 = vsel %vm1295, %v4683, %v4684
      %v4686 = vrot.slane %v4562, 5
      %v4687 = vrot.slane %v4686, 4
      %v4688 = vrot.slane %v3822, 5
      %v4689 = vsel %vm1295, %v4687, %v4688
      %v4690 = vrot.slane %v4688, 4
      %v4691 = vrot.slane %v3823, 5
      %v4692 = vsel %vm1295, %v4690, %v4691
      %v4693 = vrot.slane %v4563, 5
      %v4694 = vrot.slane %v4693, 4
      %v4695 = vrot.slane %v3825, 5
      %v4696 = vsel %vm1295, %v4694, %v4695
      %v4697 = vrot.slane %v4695, 4
      %v4698 = vrot.slane %v3826, 5
      %v4699 = vsel %vm1295, %v4697, %v4698
      %v4700 = vrot.slane %v4564, 5
      %v4701 = vrot.slane %v4700, 4
      %v4702 = vrot.slane %v3828, 5
      %v4703 = vsel %vm1295, %v4701, %v4702
      %v4704 = vrot.slane %v4702, 4
      %v4705 = vrot.slane %v3829, 5
      %v4706 = vsel %vm1295, %v4704, %v4705
      %v4707 = vrot.slane %v4565, 5
      %v4708 = vrot.slane %v4707, 4
      %v4709 = vrot.slane %v3831, 5
      %v4710 = vsel %vm1295, %v4708, %v4709
      %v4711 = vrot.slane %v4709, 4
      %v4712 = vrot.slane %v3832, 5
      %v4713 = vsel %vm1295, %v4711, %v4712
      %v4714 = vrot.slane %v4566, 5
      %v4715 = vrot.slane %v4714, 4
      %v4716 = vrot.slane %v3834, 5
      %v4717 = vsel %vm1295, %v4715, %v4716
      %v4718 = vrot.slane %v4716, 4
      %v4719 = vrot.slane %v3835, 5
      %v4720 = vsel %vm1295, %v4718, %v4719
      %v4721 = vrot.slane %v4567, 5
      %v4722 = vrot.slane %v4721, 4
      %v4723 = vrot.slane %v3837, 5
      %v4724 = vsel %vm1295, %v4722, %v4723
      %v4725 = vrot.slane %v4723, 4
      %v4726 = vrot.slane %v3838, 5
      %v4727 = vsel %vm1295, %v4725, %v4726
      %s4728 = scalar_lea.vmem %s1, 288
      %v4729 = vld [vmem:[%s4728] sm:$0xf]
      %v4730 = vld [vmem:[%s4728 + $0x4] sm:$0xf]
      %v4731 = vld [vmem:[%s4728 + $0x8] sm:$0xf]
      %v4732 = vld [vmem:[%s4728 + $0xc] sm:$0xf]
      %v4733 = vld [vmem:[%s4728 + $0x10] sm:$0xf]
      %v4734 = vld [vmem:[%s4728 + $0x14] sm:$0xf]
      %v4735 = vld [vmem:[%s4728 + $0x18] sm:$0xf]
      %v4736 = vld [vmem:[%s4728 + $0x1c] sm:$0xf]
      %v4737 = vld [vmem:[%s4728 + $0x20] sm:$0xf]
      %v4738 = vunpack.c.l.b16 %v4619
      %v4739 = vunpack.c.l.b16 %v4622
      %v4740 = vunpack.c.l.b16 %v4626
      %v4741 = vunpack.c.l.b16 %v4629
      %v4742 = vunpack.c.l.b16 %v4633
      %v4743 = vunpack.c.l.b16 %v4636
      %v4744 = vunpack.c.l.b16 %v4640
      %v4745 = vunpack.c.l.b16 %v4643
      %v4746 = vunpack.c.l.b16 %v4647
      %v4747 = vunpack.c.l.b16 %v4650
      %v4748 = vunpack.c.l.b16 %v4654
      %v4749 = vunpack.c.l.b16 %v4657
      %v4750 = vunpack.c.l.b16 %v4661
      %v4751 = vunpack.c.l.b16 %v4664
      %v4752 = vunpack.c.l.b16 %v4668
      %v4753 = vunpack.c.l.b16 %v4671
      %v4754 = vunpack.c.l.b16 %v4675
      %v4755 = vunpack.c.l.b16 %v4678
      %v4756 = vunpack.c.l.b16 %v4682
      %v4757 = vunpack.c.l.b16 %v4685
      %v4758 = vunpack.c.l.b16 %v4689
      %v4759 = vunpack.c.l.b16 %v4692
      %v4760 = vunpack.c.l.b16 %v4696
      %v4761 = vunpack.c.l.b16 %v4699
      %v4762 = vunpack.c.l.b16 %v4703
      %v4763 = vunpack.c.l.b16 %v4706
      %v4764 = vunpack.c.l.b16 %v4710
      %v4765 = vunpack.c.l.b16 %v4713
      %v4766 = vunpack.c.l.b16 %v4717
      %v4767 = vunpack.c.l.b16 %v4720
      %v4768 = vunpack.c.l.b16 %v4724
      %v4769 = vunpack.c.l.b16 %v4727
      %v4770 = vpack.c.b16 %v4739, %v4738
      %v4771 = vpack.c.b16 %v4741, %v4740
      %v4772 = vpack.c.b16 %v4743, %v4742
      %v4773 = vpack.c.b16 %v4745, %v4744
      %v4774 = vpack.c.b16 %v4747, %v4746
      %v4775 = vpack.c.b16 %v4749, %v4748
      %v4776 = vpack.c.b16 %v4751, %v4750
      %v4777 = vpack.c.b16 %v4753, %v4752
      %v4778 = vpack.c.b16 %v4755, %v4754
      %v4779 = vpack.c.b16 %v4757, %v4756
      %v4780 = vpack.c.b16 %v4759, %v4758
      %v4781 = vpack.c.b16 %v4761, %v4760
      %v4782 = vpack.c.b16 %v4763, %v4762
      %v4783 = vpack.c.b16 %v4765, %v4764
      %v4784 = vpack.c.b16 %v4767, %v4766
      %v4785 = vpack.c.b16 %v4769, %v4768
      %v4795 = vunpack.c.l.b16 %v4729
      %v4796 = vunpack.c.l.b16 %v4730
      %v4797 = vunpack.c.l.b16 %v4731
      %v4798 = vunpack.c.l.b16 %v4732
      %v4799 = vunpack.c.l.b16 %v4733
      %v4800 = vunpack.c.l.b16 %v4734
      %v4801 = vunpack.c.l.b16 %v4735
      %v4802 = vunpack.c.l.b16 %v4736
      %v4803 = vunpack.c.l.b16 %v4737
      %v4804 = vpack.c.b16 %v4796, %v4795
      %v4805 = vpack.c.b16 %v4798, %v4797
      %v4806 = vpack.c.b16 %v4800, %v4799
      %v4807 = vpack.c.b16 %v4802, %v4801
      %v4808 = vpack.c.b16 %v4803, %v4803
      %v4814 = vsel %vm712, %v4770, 0
      %v4817 = vsel %vm712, %v4771, 0
      %v4820 = vsel %vm712, %v4772, 0
      %v4823 = vsel %vm712, %v4773, 0
      %v4826 = vsel %vm712, %v4774, 0
      %v4829 = vsel %vm712, %v4775, 0
      %v4832 = vsel %vm712, %v4776, 0
      %v4835 = vsel %vm712, %v4777, 0
      %v4838 = vsel %vm712, %v4778, 0
      %v4841 = vsel %vm712, %v4779, 0
      %v4844 = vsel %vm712, %v4780, 0
      %v4847 = vsel %vm712, %v4781, 0
      %v4850 = vsel %vm712, %v4782, 0
      %v4853 = vsel %vm712, %v4783, 0
      %v4856 = vsel %vm712, %v4784, 0
      %v4859 = vsel %vm712, %v4785, 0
      %v4862 = vsel %vm761, %v4808, 0
      %4864 = vmatprep.subr.bf16.mxu0 0
      %4865 = vmatpush1.bf16.msra.mxu0 0
      %4866 = vmatprep.subr.bf16.mxu0 0
      %4867 = vmatpush1.bf16.msra.mxu0 0
      %4868 = vmatprep.subr.bf16.mxu0 0
      %4869 = vmatpush1.bf16.msra.mxu0 0
      %4870 = vmatprep.subr.bf16.mxu0 0
      %4871 = vmatpush1.bf16.msra.mxu0 %v4862
      %4872 = vmatprep.subr.bf16.mxu0 0
      %4873 = vmatpush1.bf16.msra.mxu0 %v4807
      %4874 = vmatprep.subr.bf16.mxu0 0
      %4875 = vmatpush1.bf16.msra.mxu0 %v4806
      %4876 = vmatprep.subr.bf16.mxu0 0
      %4877 = vmatpush1.bf16.msra.mxu0 %v4805
      %4878 = vmatprep.subr.bf16.mxu0 0
      %4879 = vmatpush1.bf16.msra.mxu0 %v4804
      %4880 = vmatprep.subr.bf16.mxu0 0
      %4881 = vmatpush2.bf16.msra.mxu0 0
      %4882 = vmatprep.subr.bf16.mxu0 0
      %4883 = vmatpush2.bf16.msra.mxu0 0
      %4884 = vmatprep.subr.bf16.mxu0 0
      %4885 = vmatpush2.bf16.msra.mxu0 0
      %4886 = vmatprep.subr.bf16.mxu0 0
      %4887 = vmatpush2.bf16.msra.mxu0 0
      %4888 = vmatprep.subr.bf16.mxu0 0
      %4889 = vmatpush2.bf16.msra.mxu0 0
      %4890 = vmatprep.subr.bf16.mxu0 0
      %4891 = vmatpush2.bf16.msra.mxu0 0
      %4892 = vmatprep.subr.bf16.mxu0 0
      %4893 = vmatpush2.bf16.msra.mxu0 0
      %4894 = vmatprep.subr.bf16.mxu0 0
      %4895 = vmatpush2.bf16.msra.mxu0 0
      %4896 = vmatprep.mubr.bf16.mxu0 0
      %4897 = vmatmul.mubr.bf16.gmra.mxu0 %v4814
      %v4898 = vpop.f32.mrf.mxu0
      %v4899 = vadd.f32 0.0, %v4898
      %v4900 = vpop.f32.mrf.mxu0
      %v4901 = vpop.f32.mrf.mxu0
      %v4902 = vadd.f32 0.0, %v4901
      %v4903 = vpop.f32.mrf.mxu0
      %4904 = vmatprep.mubr.bf16.mxu0 0
      %4905 = vmatmul.mubr.bf16.gmra.mxu0 %v4817
      %v4906 = vpop.f32.mrf.mxu0
      %v4907 = vadd.f32 0.0, %v4906
      %v4908 = vpop.f32.mrf.mxu0
      %v4909 = vpop.f32.mrf.mxu0
      %v4910 = vadd.f32 0.0, %v4909
      %v4911 = vpop.f32.mrf.mxu0
      %4912 = vmatprep.mubr.bf16.mxu0 0
      %4913 = vmatmul.mubr.bf16.gmra.mxu0 %v4820
      %v4914 = vpop.f32.mrf.mxu0
      %v4915 = vadd.f32 0.0, %v4914
      %v4916 = vpop.f32.mrf.mxu0
      %v4917 = vpop.f32.mrf.mxu0
      %v4918 = vadd.f32 0.0, %v4917
      %v4919 = vpop.f32.mrf.mxu0
      %4920 = vmatprep.mubr.bf16.mxu0 0
      %4921 = vmatmul.mubr.bf16.gmra.mxu0 %v4823
      %v4922 = vpop.f32.mrf.mxu0
      %v4923 = vadd.f32 0.0, %v4922
      %v4924 = vpop.f32.mrf.mxu0
      %v4925 = vpop.f32.mrf.mxu0
      %v4926 = vadd.f32 0.0, %v4925
      %v4927 = vpop.f32.mrf.mxu0
      %4928 = vmatprep.mubr.bf16.mxu0 0
      %4929 = vmatmul.mubr.bf16.gmra.mxu0 %v4826
      %v4930 = vpop.f32.mrf.mxu0
      %v4931 = vadd.f32 0.0, %v4930
      %v4932 = vpop.f32.mrf.mxu0
      %v4933 = vpop.f32.mrf.mxu0
      %v4934 = vadd.f32 0.0, %v4933
      %v4935 = vpop.f32.mrf.mxu0
      %4936 = vmatprep.mubr.bf16.mxu0 0
      %4937 = vmatmul.mubr.bf16.gmra.mxu0 %v4829
      %v4938 = vpop.f32.mrf.mxu0
      %v4939 = vadd.f32 0.0, %v4938
      %v4940 = vpop.f32.mrf.mxu0
      %v4941 = vpop.f32.mrf.mxu0
      %v4942 = vadd.f32 0.0, %v4941
      %v4943 = vpop.f32.mrf.mxu0
      %4944 = vmatprep.mubr.bf16.mxu0 0
      %4945 = vmatmul.mubr.bf16.gmra.mxu0 %v4832
      %v4946 = vpop.f32.mrf.mxu0
      %v4947 = vadd.f32 0.0, %v4946
      %v4948 = vpop.f32.mrf.mxu0
      %v4949 = vpop.f32.mrf.mxu0
      %v4950 = vadd.f32 0.0, %v4949
      %v4951 = vpop.f32.mrf.mxu0
      %4952 = vmatprep.mubr.bf16.mxu0 0
      %4953 = vmatmul.mubr.bf16.gmra.mxu0 %v4835
      %v4954 = vpop.f32.mrf.mxu0
      %v4955 = vadd.f32 0.0, %v4954
      %v4956 = vpop.f32.mrf.mxu0
      %v4957 = vpop.f32.mrf.mxu0
      %v4958 = vadd.f32 0.0, %v4957
      %v4959 = vpop.f32.mrf.mxu0
      %4960 = vmatprep.mubr.bf16.mxu0 0
      %4961 = vmatmul.mubr.bf16.gmra.mxu0 %v4838
      %v4962 = vpop.f32.mrf.mxu0
      %v4963 = vadd.f32 0.0, %v4962
      %v4964 = vpop.f32.mrf.mxu0
      %v4965 = vpop.f32.mrf.mxu0
      %v4966 = vadd.f32 0.0, %v4965
      %v4967 = vpop.f32.mrf.mxu0
      %4968 = vmatprep.mubr.bf16.mxu0 0
      %4969 = vmatmul.mubr.bf16.gmra.mxu0 %v4841
      %v4970 = vpop.f32.mrf.mxu0
      %v4971 = vadd.f32 0.0, %v4970
      %v4972 = vpop.f32.mrf.mxu0
      %v4973 = vpop.f32.mrf.mxu0
      %v4974 = vadd.f32 0.0, %v4973
      %v4975 = vpop.f32.mrf.mxu0
      %4976 = vmatprep.mubr.bf16.mxu0 0
      %4977 = vmatmul.mubr.bf16.gmra.mxu0 %v4844
      %v4978 = vpop.f32.mrf.mxu0
      %v4979 = vadd.f32 0.0, %v4978
      %v4980 = vpop.f32.mrf.mxu0
      %v4981 = vpop.f32.mrf.mxu0
      %v4982 = vadd.f32 0.0, %v4981
      %v4983 = vpop.f32.mrf.mxu0
      %4984 = vmatprep.mubr.bf16.mxu0 0
      %4985 = vmatmul.mubr.bf16.gmra.mxu0 %v4847
      %v4986 = vpop.f32.mrf.mxu0
      %v4987 = vadd.f32 0.0, %v4986
      %v4988 = vpop.f32.mrf.mxu0
      %v4989 = vpop.f32.mrf.mxu0
      %v4990 = vadd.f32 0.0, %v4989
      %v4991 = vpop.f32.mrf.mxu0
      %4992 = vmatprep.mubr.bf16.mxu0 0
      %4993 = vmatmul.mubr.bf16.gmra.mxu0 %v4850
      %v4994 = vpop.f32.mrf.mxu0
      %v4995 = vadd.f32 0.0, %v4994
      %v4996 = vpop.f32.mrf.mxu0
      %v4997 = vpop.f32.mrf.mxu0
      %v4998 = vadd.f32 0.0, %v4997
      %v4999 = vpop.f32.mrf.mxu0
      %5000 = vmatprep.mubr.bf16.mxu0 0
      %5001 = vmatmul.mubr.bf16.gmra.mxu0 %v4853
      %v5002 = vpop.f32.mrf.mxu0
      %v5003 = vadd.f32 0.0, %v5002
      %v5004 = vpop.f32.mrf.mxu0
      %v5005 = vpop.f32.mrf.mxu0
      %v5006 = vadd.f32 0.0, %v5005
      %v5007 = vpop.f32.mrf.mxu0
      %5008 = vmatprep.mubr.bf16.mxu0 0
      %5009 = vmatmul.mubr.bf16.gmra.mxu0 %v4856
      %v5010 = vpop.f32.mrf.mxu0
      %v5011 = vadd.f32 0.0, %v5010
      %v5012 = vpop.f32.mrf.mxu0
      %v5013 = vpop.f32.mrf.mxu0
      %v5014 = vadd.f32 0.0, %v5013
      %v5015 = vpop.f32.mrf.mxu0
      %5016 = vmatprep.mubr.bf16.mxu0 0
      %5017 = vmatmul.mubr.bf16.gmra.mxu0 %v4859
      %v5018 = vpop.f32.mrf.mxu0
      %v5019 = vadd.f32 0.0, %v5018
      %v5020 = vpop.f32.mrf.mxu0
      %v5021 = vpop.f32.mrf.mxu0
      %v5022 = vadd.f32 0.0, %v5021
      %v5023 = vpop.f32.mrf.mxu0
      %5024 = vdwg.mxu0
      %v5025 = vadd.f32 %v4520, %v4899
      %v5026 = vadd.f32 %v4521, %v4902
      %v5027 = vadd.f32 %v4522, %v4907
      %v5028 = vadd.f32 %v4523, %v4910
      %v5029 = vadd.f32 %v4524, %v4915
      %v5030 = vadd.f32 %v4525, %v4918
      %v5031 = vadd.f32 %v4526, %v4923
      %v5032 = vadd.f32 %v4527, %v4926
      %v5033 = vadd.f32 %v4528, %v4931
      %v5034 = vadd.f32 %v4529, %v4934
      %v5035 = vadd.f32 %v4530, %v4939
      %v5036 = vadd.f32 %v4531, %v4942
      %v5037 = vadd.f32 %v4532, %v4947
      %v5038 = vadd.f32 %v4533, %v4950
      %v5039 = vadd.f32 %v4534, %v4955
      %v5040 = vadd.f32 %v4535, %v4958
      %v5041 = vadd.f32 %v4536, %v4963
      %v5042 = vadd.f32 %v4537, %v4966
      %v5043 = vadd.f32 %v4538, %v4971
      %v5044 = vadd.f32 %v4539, %v4974
      %v5045 = vadd.f32 %v4540, %v4979
      %v5046 = vadd.f32 %v4541, %v4982
      %v5047 = vadd.f32 %v4542, %v4987
      %v5048 = vadd.f32 %v4543, %v4990
      %v5049 = vadd.f32 %v4544, %v4995
      %v5050 = vadd.f32 %v4545, %v4998
      %v5051 = vadd.f32 %v4546, %v5003
      %v5052 = vadd.f32 %v4547, %v5006
      %v5053 = vadd.f32 %v4548, %v5011
      %v5054 = vadd.f32 %v4549, %v5014
      %v5055 = vadd.f32 %v4550, %v5019
      %v5056 = vadd.f32 %v4551, %v5022
      %vm5057 = vcmask 523264
      %v5058 = vsel %vm5057, %v5025, 0.0
      %v5059 = vsel %vm5057, %v5026, 0.0
      %v5060 = vadd.f32 %v5058, %v5059
      %v5061 = vsel %vm5057, %v5027, 0.0
      %v5062 = vadd.f32 %v5060, %v5061
      %v5063 = vsel %vm5057, %v5028, 0.0
      %v5064 = vadd.f32 %v5062, %v5063
      %v5065 = vsel %vm5057, %v5029, 0.0
      %v5066 = vadd.f32 %v5064, %v5065
      %v5067 = vsel %vm5057, %v5030, 0.0
      %v5068 = vadd.f32 %v5066, %v5067
      %v5069 = vsel %vm5057, %v5031, 0.0
      %v5070 = vadd.f32 %v5068, %v5069
      %v5071 = vsel %vm5057, %v5032, 0.0
      %v5072 = vadd.f32 %v5070, %v5071
      %v5073 = vsel %vm5057, %v5033, 0.0
      %v5074 = vadd.f32 %v5072, %v5073
      %v5075 = vsel %vm5057, %v5034, 0.0
      %v5076 = vadd.f32 %v5074, %v5075
      %v5077 = vsel %vm5057, %v5035, 0.0
      %v5078 = vadd.f32 %v5076, %v5077
      %v5079 = vsel %vm5057, %v5036, 0.0
      %v5080 = vadd.f32 %v5078, %v5079
      %v5081 = vsel %vm5057, %v5037, 0.0
      %v5082 = vadd.f32 %v5080, %v5081
      %v5083 = vsel %vm5057, %v5038, 0.0
      %v5084 = vadd.f32 %v5082, %v5083
      %v5085 = vsel %vm5057, %v5039, 0.0
      %v5086 = vadd.f32 %v5084, %v5085
      %v5087 = vsel %vm5057, %v5040, 0.0
      %v5088 = vadd.f32 %v5086, %v5087
      %v5089 = vsel %vm5057, %v5041, 0.0
      %v5090 = vadd.f32 %v5088, %v5089
      %v5091 = vsel %vm5057, %v5042, 0.0
      %v5092 = vadd.f32 %v5090, %v5091
      %v5093 = vsel %vm5057, %v5043, 0.0
      %v5094 = vadd.f32 %v5092, %v5093
      %v5095 = vsel %vm5057, %v5044, 0.0
      %v5096 = vadd.f32 %v5094, %v5095
      %v5097 = vsel %vm5057, %v5045, 0.0
      %v5098 = vadd.f32 %v5096, %v5097
      %v5099 = vsel %vm5057, %v5046, 0.0
      %v5100 = vadd.f32 %v5098, %v5099
      %v5101 = vsel %vm5057, %v5047, 0.0
      %v5102 = vadd.f32 %v5100, %v5101
      %v5103 = vsel %vm5057, %v5048, 0.0
      %v5104 = vadd.f32 %v5102, %v5103
      %v5105 = vsel %vm5057, %v5049, 0.0
      %v5106 = vadd.f32 %v5104, %v5105
      %v5107 = vsel %vm5057, %v5050, 0.0
      %v5108 = vadd.f32 %v5106, %v5107
      %v5109 = vsel %vm5057, %v5051, 0.0
      %v5110 = vadd.f32 %v5108, %v5109
      %v5111 = vsel %vm5057, %v5052, 0.0
      %v5112 = vadd.f32 %v5110, %v5111
      %v5113 = vsel %vm5057, %v5053, 0.0
      %v5114 = vadd.f32 %v5112, %v5113
      %v5115 = vsel %vm5057, %v5054, 0.0
      %v5116 = vadd.f32 %v5114, %v5115
      %v5117 = vsel %vm5057, %v5055, 0.0
      %v5118 = vadd.f32 %v5116, %v5117
      %v5119 = vsel %vm5057, %v5056, 0.0
      %v5120 = vadd.f32 %v5118, %v5119
      %v5121 = vrot.slane %v5120, 4
      %v5122 = vadd.f32 %v5120, %v5121
      %v5123 = vrot.slane %v5122, 2
      %v5124 = vadd.f32 %v5122, %v5123
      %v5125 = vrot.slane %v5124, 1
      %v5126 = vadd.f32 %v5124, %v5125
      %vm5127 = vcmask 516096
      %5128 = vst.msk [vmem:[%s181] sm:$0x1] %vm5127, %v5126
      %v5129 = vmul.f32 %v5025, %v5025
      %v5130 = vmul.f32 %v5026, %v5026
      %v5131 = vmul.f32 %v5027, %v5027
      %v5132 = vmul.f32 %v5028, %v5028
      %v5133 = vmul.f32 %v5029, %v5029
      %v5134 = vmul.f32 %v5030, %v5030
      %v5135 = vmul.f32 %v5031, %v5031
      %v5136 = vmul.f32 %v5032, %v5032
      %v5137 = vmul.f32 %v5033, %v5033
      %v5138 = vmul.f32 %v5034, %v5034
      %v5139 = vmul.f32 %v5035, %v5035
      %v5140 = vmul.f32 %v5036, %v5036
      %v5141 = vmul.f32 %v5037, %v5037
      %v5142 = vmul.f32 %v5038, %v5038
      %v5143 = vmul.f32 %v5039, %v5039
      %v5144 = vmul.f32 %v5040, %v5040
      %v5145 = vmul.f32 %v5041, %v5041
      %v5146 = vmul.f32 %v5042, %v5042
      %v5147 = vmul.f32 %v5043, %v5043
      %v5148 = vmul.f32 %v5044, %v5044
      %v5149 = vmul.f32 %v5045, %v5045
      %v5150 = vmul.f32 %v5046, %v5046
      %v5151 = vmul.f32 %v5047, %v5047
      %v5152 = vmul.f32 %v5048, %v5048
      %v5153 = vmul.f32 %v5049, %v5049
      %v5154 = vmul.f32 %v5050, %v5050
      %v5155 = vmul.f32 %v5051, %v5051
      %v5156 = vmul.f32 %v5052, %v5052
      %v5157 = vmul.f32 %v5053, %v5053
      %v5158 = vmul.f32 %v5054, %v5054
      %v5159 = vmul.f32 %v5055, %v5055
      %v5160 = vmul.f32 %v5056, %v5056
      %v5161 = vsel %vm5057, %v5129, 0.0
      %v5162 = vsel %vm5057, %v5130, 0.0
      %v5163 = vadd.f32 %v5161, %v5162
      %v5164 = vsel %vm5057, %v5131, 0.0
      %v5165 = vadd.f32 %v5163, %v5164
      %v5166 = vsel %vm5057, %v5132, 0.0
      %v5167 = vadd.f32 %v5165, %v5166
      %v5168 = vsel %vm5057, %v5133, 0.0
      %v5169 = vadd.f32 %v5167, %v5168
      %v5170 = vsel %vm5057, %v5134, 0.0
      %v5171 = vadd.f32 %v5169, %v5170
      %v5172 = vsel %vm5057, %v5135, 0.0
      %v5173 = vadd.f32 %v5171, %v5172
      %v5174 = vsel %vm5057, %v5136, 0.0
      %v5175 = vadd.f32 %v5173, %v5174
      %v5176 = vsel %vm5057, %v5137, 0.0
      %v5177 = vadd.f32 %v5175, %v5176
      %v5178 = vsel %vm5057, %v5138, 0.0
      %v5179 = vadd.f32 %v5177, %v5178
      %v5180 = vsel %vm5057, %v5139, 0.0
      %v5181 = vadd.f32 %v5179, %v5180
      %v5182 = vsel %vm5057, %v5140, 0.0
      %v5183 = vadd.f32 %v5181, %v5182
      %v5184 = vsel %vm5057, %v5141, 0.0
      %v5185 = vadd.f32 %v5183, %v5184
      %v5186 = vsel %vm5057, %v5142, 0.0
      %v5187 = vadd.f32 %v5185, %v5186
      %v5188 = vsel %vm5057, %v5143, 0.0
      %v5189 = vadd.f32 %v5187, %v5188
      %v5190 = vsel %vm5057, %v5144, 0.0
      %v5191 = vadd.f32 %v5189, %v5190
      %v5192 = vsel %vm5057, %v5145, 0.0
      %v5193 = vadd.f32 %v5191, %v5192
      %v5194 = vsel %vm5057, %v5146, 0.0
      %v5195 = vadd.f32 %v5193, %v5194
      %v5196 = vsel %vm5057, %v5147, 0.0
      %v5197 = vadd.f32 %v5195, %v5196
      %v5198 = vsel %vm5057, %v5148, 0.0
      %v5199 = vadd.f32 %v5197, %v5198
      %v5200 = vsel %vm5057, %v5149, 0.0
      %v5201 = vadd.f32 %v5199, %v5200
      %v5202 = vsel %vm5057, %v5150, 0.0
      %v5203 = vadd.f32 %v5201, %v5202
      %v5204 = vsel %vm5057, %v5151, 0.0
      %v5205 = vadd.f32 %v5203, %v5204
      %v5206 = vsel %vm5057, %v5152, 0.0
      %v5207 = vadd.f32 %v5205, %v5206
      %v5208 = vsel %vm5057, %v5153, 0.0
      %v5209 = vadd.f32 %v5207, %v5208
      %v5210 = vsel %vm5057, %v5154, 0.0
      %v5211 = vadd.f32 %v5209, %v5210
      %v5212 = vsel %vm5057, %v5155, 0.0
      %v5213 = vadd.f32 %v5211, %v5212
      %v5214 = vsel %vm5057, %v5156, 0.0
      %v5215 = vadd.f32 %v5213, %v5214
      %v5216 = vsel %vm5057, %v5157, 0.0
      %v5217 = vadd.f32 %v5215, %v5216
      %v5218 = vsel %vm5057, %v5158, 0.0
      %v5219 = vadd.f32 %v5217, %v5218
      %v5220 = vsel %vm5057, %v5159, 0.0
      %v5221 = vadd.f32 %v5219, %v5220
      %v5222 = vsel %vm5057, %v5160, 0.0
      %v5223 = vadd.f32 %v5221, %v5222
      %v5224 = vrot.slane %v5223, 4
      %v5225 = vadd.f32 %v5223, %v5224
      %v5226 = vrot.slane %v5225, 2
      %v5227 = vadd.f32 %v5225, %v5226
      %v5228 = vrot.slane %v5227, 1
      %v5229 = vadd.f32 %v5227, %v5228
      %5230 = vst.msk [vmem:[%s181 + $0x1] sm:$0x1] %vm5127, %v5229
      %v5231 = vpack.c.bf16 %v5026, %v5025
      %v5232 = vpack.c.bf16 %v5028, %v5027
      %v5233 = vpack.c.bf16 %v5030, %v5029
      %v5234 = vpack.c.bf16 %v5032, %v5031
      %v5235 = vpack.c.bf16 %v5034, %v5033
      %v5236 = vpack.c.bf16 %v5036, %v5035
      %v5237 = vpack.c.bf16 %v5038, %v5037
      %v5238 = vpack.c.bf16 %v5040, %v5039
      %v5239 = vpack.c.bf16 %v5042, %v5041
      %v5240 = vpack.c.bf16 %v5044, %v5043
      %v5241 = vpack.c.bf16 %v5046, %v5045
      %v5242 = vpack.c.bf16 %v5048, %v5047
      %v5243 = vpack.c.bf16 %v5050, %v5049
      %v5244 = vpack.c.bf16 %v5052, %v5051
      %v5245 = vpack.c.bf16 %v5054, %v5053
      %v5246 = vpack.c.bf16 %v5056, %v5055
      %v5263 = vunpack.c.l.b16 %v5231
      %v5264 = vunpack.c.h.b16 %v5231
      %v5265 = vunpack.c.l.b16 %v5232
      %v5266 = vunpack.c.h.b16 %v5232
      %v5267 = vunpack.c.l.b16 %v5233
      %v5268 = vunpack.c.h.b16 %v5233
      %v5269 = vunpack.c.l.b16 %v5234
      %v5270 = vunpack.c.h.b16 %v5234
      %v5271 = vunpack.c.l.b16 %v5235
      %v5272 = vunpack.c.h.b16 %v5235
      %v5273 = vunpack.c.l.b16 %v5236
      %v5274 = vunpack.c.h.b16 %v5236
      %v5275 = vunpack.c.l.b16 %v5237
      %v5276 = vunpack.c.h.b16 %v5237
      %v5277 = vunpack.c.l.b16 %v5238
      %v5278 = vunpack.c.h.b16 %v5238
      %v5279 = vunpack.c.l.b16 %v5239
      %v5280 = vunpack.c.h.b16 %v5239
      %v5281 = vunpack.c.l.b16 %v5240
      %v5282 = vunpack.c.h.b16 %v5240
      %v5283 = vunpack.c.l.b16 %v5241
      %v5284 = vunpack.c.h.b16 %v5241
      %v5285 = vunpack.c.l.b16 %v5242
      %v5286 = vunpack.c.h.b16 %v5242
      %v5287 = vunpack.c.l.b16 %v5243
      %v5288 = vunpack.c.h.b16 %v5243
      %v5289 = vunpack.c.l.b16 %v5244
      %v5290 = vunpack.c.h.b16 %v5244
      %v5291 = vunpack.c.l.b16 %v5245
      %v5292 = vunpack.c.h.b16 %v5245
      %v5293 = vunpack.c.l.b16 %v5246
      %v5294 = vunpack.c.h.b16 %v5246
      %v5295 = vpack.c.b16 %v5263, %v5263
      %v5296 = vpack.c.b16 %v5264, %v5264
      %v5297 = vpack.c.b16 %v5265, %v5265
      %v5298 = vpack.c.b16 %v5266, %v5266
      %v5299 = vpack.c.b16 %v5267, %v5267
      %v5300 = vpack.c.b16 %v5268, %v5268
      %v5301 = vpack.c.b16 %v5269, %v5269
      %v5302 = vpack.c.b16 %v5270, %v5270
      %v5303 = vpack.c.b16 %v5271, %v5271
      %v5304 = vpack.c.b16 %v5272, %v5272
      %v5305 = vpack.c.b16 %v5273, %v5273
      %v5306 = vpack.c.b16 %v5274, %v5274
      %v5307 = vpack.c.b16 %v5275, %v5275
      %v5308 = vpack.c.b16 %v5276, %v5276
      %v5309 = vpack.c.b16 %v5277, %v5277
      %v5310 = vpack.c.b16 %v5278, %v5278
      %v5311 = vpack.c.b16 %v5279, %v5279
      %v5312 = vpack.c.b16 %v5280, %v5280
      %v5313 = vpack.c.b16 %v5281, %v5281
      %v5314 = vpack.c.b16 %v5282, %v5282
      %v5315 = vpack.c.b16 %v5283, %v5283
      %v5316 = vpack.c.b16 %v5284, %v5284
      %v5317 = vpack.c.b16 %v5285, %v5285
      %v5318 = vpack.c.b16 %v5286, %v5286
      %v5319 = vpack.c.b16 %v5287, %v5287
      %v5320 = vpack.c.b16 %v5288, %v5288
      %v5321 = vpack.c.b16 %v5289, %v5289
      %v5322 = vpack.c.b16 %v5290, %v5290
      %v5323 = vpack.c.b16 %v5291, %v5291
      %v5324 = vpack.c.b16 %v5292, %v5292
      %v5325 = vpack.c.b16 %v5293, %v5293
      %v5326 = vpack.c.b16 %v5294, %v5294
      %vm5359 = vcmask 519168
      %5360 = vst.msk [vmem:[%s177] sm:$0xf] %vm5359, %v5295
      %5361 = vst.msk [vmem:[%s177 + $0x4] sm:$0xf] %vm5359, %v5296
      %5362 = vst.msk [vmem:[%s177 + $0x8] sm:$0xf] %vm5359, %v5297
      %5363 = vst.msk [vmem:[%s177 + $0xc] sm:$0xf] %vm5359, %v5298
      %5364 = vst.msk [vmem:[%s177 + $0x10] sm:$0xf] %vm5359, %v5299
      %5365 = vst.msk [vmem:[%s177 + $0x14] sm:$0xf] %vm5359, %v5300
      %5366 = vst.msk [vmem:[%s177 + $0x18] sm:$0xf] %vm5359, %v5301
      %5367 = vst.msk [vmem:[%s177 + $0x1c] sm:$0xf] %vm5359, %v5302
      %5368 = vst.msk [vmem:[%s177 + $0x20] sm:$0xf] %vm5359, %v5303
      %5369 = vst.msk [vmem:[%s177 + $0x24] sm:$0xf] %vm5359, %v5304
      %5370 = vst.msk [vmem:[%s177 + $0x28] sm:$0xf] %vm5359, %v5305
      %5371 = vst.msk [vmem:[%s177 + $0x2c] sm:$0xf] %vm5359, %v5306
      %5372 = vst.msk [vmem:[%s177 + $0x30] sm:$0xf] %vm5359, %v5307
      %5373 = vst.msk [vmem:[%s177 + $0x34] sm:$0xf] %vm5359, %v5308
      %5374 = vst.msk [vmem:[%s177 + $0x38] sm:$0xf] %vm5359, %v5309
      %5375 = vst.msk [vmem:[%s177 + $0x3c] sm:$0xf] %vm5359, %v5310
      %5376 = vst.msk [vmem:[%s177 + $0x40] sm:$0xf] %vm5359, %v5311
      %5377 = vst.msk [vmem:[%s177 + $0x44] sm:$0xf] %vm5359, %v5312
      %5378 = vst.msk [vmem:[%s177 + $0x48] sm:$0xf] %vm5359, %v5313
      %5379 = vst.msk [vmem:[%s177 + $0x4c] sm:$0xf] %vm5359, %v5314
      %5380 = vst.msk [vmem:[%s177 + $0x50] sm:$0xf] %vm5359, %v5315
      %5381 = vst.msk [vmem:[%s177 + $0x54] sm:$0xf] %vm5359, %v5316
      %5382 = vst.msk [vmem:[%s177 + $0x58] sm:$0xf] %vm5359, %v5317
      %5383 = vst.msk [vmem:[%s177 + $0x5c] sm:$0xf] %vm5359, %v5318
      %5384 = vst.msk [vmem:[%s177 + $0x60] sm:$0xf] %vm5359, %v5319
      %5385 = vst.msk [vmem:[%s177 + $0x64] sm:$0xf] %vm5359, %v5320
      %5386 = vst.msk [vmem:[%s177 + $0x68] sm:$0xf] %vm5359, %v5321
      %5387 = vst.msk [vmem:[%s177 + $0x6c] sm:$0xf] %vm5359, %v5322
      %5388 = vst.msk [vmem:[%s177 + $0x70] sm:$0xf] %vm5359, %v5323
      %5389 = vst.msk [vmem:[%s177 + $0x74] sm:$0xf] %vm5359, %v5324
      %5390 = vst.msk [vmem:[%s177 + $0x78] sm:$0xf] %vm5359, %v5325
      %5391 = vst.msk [vmem:[%s177 + $0x7c] sm:$0xf] %vm5359, %v5326
      %p5392 = scmp.lt.s32.totalorder %s15, 1
      %s5393 = scalar_select %p5392, %s15, 1
      %s5394 = smul.addr %s5393, 32
      %s5395 = smul.addr %s5394, 4
      %s5396 = scalar_lea.vmem %s2, %s5395
      %p5397 = scmp.lt.s32.totalorder %s15, 1
      %s5398 = scalar_select %p5397, %s15, 1
      %s5399 = smul.addr %s5398, 2
      %s5400 = scalar_lea.vmem %s3, %s5399
      // Predicated region
      $region29: #{single_layer_forward.2} parent=27 // pred_check
        %p5401 = pneg %p80
      $region30: #{single_layer_forward.2} parent=27 // pred_check_branch
        %5403 = sbr.rel (%p5401) target = $region32
      $region31: #{single_layer_forward.2} parent=27 // pred_region
        _
      $region32: #{single_layer_forward.2} parent=27 // pred_fallthru
        _
      // Predicated region
      $region33: #{single_layer_forward.2} parent=27 // pred_check
        %p5404 = pneg %p106
      $region34: #{single_layer_forward.2} parent=27 // pred_check_branch
        %5406 = sbr.rel (%p5404) target = $region36
      $region35: #{single_layer_forward.2} parent=27 // pred_region
        _
      $region36: #{single_layer_forward.2} parent=27 // pred_fallthru
        _
    $region28: #{single_layer_forward.2} parent=5 // pred_fallthru
      _
    %p5407 = scmp.le.s32.totalorder 2, %s10
    // Predicated region
    $region37: #{single_layer_forward.2} parent=5 // pred_check
      %p5408 = pneg %p5407
    $region38: #{single_layer_forward.2} parent=5 // pred_check_branch
      %5410 = sbr.rel (%p5408) target = $region40
    $region39: #{single_layer_forward.2} parent=5 // pred_region
      %s5411 = ssub.s32 %s10, 2
      // Predicated region
      $region41: #{single_layer_forward.2} parent=39 // pred_check
        %p5412 = pneg %p86
      $region42: #{single_layer_forward.2} parent=39 // pred_check_branch
        %5414 = sbr.rel (%p5412) target = $region44
      $region43: #{single_layer_forward.2} parent=39 // pred_region
        %p5415 = scmp.lt.s32.totalorder %s16, 1
        %s5416 = scalar_select %p5415, %s16, 1
        %s5417 = smul.addr %s5416, 32
        %s5418 = smul.addr %s5417, 4
        %s5419 = scalar_lea.vmem %s2, %s5418
      $region44: #{single_layer_forward.2} parent=39 // pred_fallthru
        _
      // Predicated region
      $region45: #{single_layer_forward.2} parent=39 // pred_check
        %p5420 = pneg %p112
      $region46: #{single_layer_forward.2} parent=39 // pred_check_branch
        %5422 = sbr.rel (%p5420) target = $region48
      $region47: #{single_layer_forward.2} parent=39 // pred_region
        %p5423 = scmp.lt.s32.totalorder %s16, 1
        %s5424 = scalar_select %p5423, %s16, 1
        %s5425 = smul.addr %s5424, 2
        %s5426 = scalar_lea.vmem %s3, %s5425
      $region48: #{single_layer_forward.2} parent=39 // pred_fallthru
        _
    $region40: #{single_layer_forward.2} parent=5 // pred_fallthru
      _
  $region6: #{single_layer_forward.2} parent=0 // loop_footer
    %s14 = sadd.s32 1, %s10
  $region7: #{single_layer_forward.2} parent=0 // loop_footer_branch
    %9 = sbr.rel target = $region3
  $region8: #{single_layer_forward.2} parent=0 // loop_exit
    _

</llo_original>
